<compile_context>
chip_gen: v5e
topology: v5e:2x2
jax: 0.10.0
libtpu: 0.0.40
codegen_flags: <defaults>
</compile_context>

<pallas_src>
import math
import functools

import jax
import jax.numpy as jnp
from jax.experimental import pallas as pl
from jax.experimental.pallas import tpu as pltpu

NUM_HEADS = 4

# Order of parameter refs fed to the fused kernel (all 2-D, whole-array blocks).
WEIGHT_NAMES = (
    "w_patch", "b_patch", "pos_emb",
    "vit_ln1", "vit_wqkv", "vit_bqkv", "vit_wo", "vit_bo", "vit_ln2",
    "vit_w1", "vit_b1", "vit_w2", "vit_b2",
    "img_proj_w", "img_proj_b", "txt_proj_w", "txt_proj_b",
    "dec_lnq", "dec_lnk", "dec_wq", "dec_bq", "dec_wkv", "dec_bkv",
    "dec_wo", "dec_bo", "dec_ln2", "dec_w1", "dec_b1", "dec_w2", "dec_b2",
)


# ----------------------------------------------------------------------------
# In-kernel helpers (operate on loaded f32 arrays)
# ----------------------------------------------------------------------------

def _ln(x, ln_ref, eps=1e-5):
    """LayerNorm over the last dim; ln_ref holds [gamma; beta] stacked as (2, D)."""
    ln = ln_ref[...]
    g, b = ln[0:1, :], ln[1:2, :]
    mu = jnp.mean(x, axis=-1, keepdims=True)
    xc = x - mu
    var = jnp.mean(xc * xc, axis=-1, keepdims=True)
    return xc * jax.lax.rsqrt(var + eps) * g + b


def _gelu(x):
    # TODO(synk): PyTorch nn.GELU defaults to the exact erf form; tanh approx is
    # used to stay on the EUP path (small ~1e-3 drift vs the reference).
    return 0.5 * x * (1.0 + jnp.tanh(0.7978845608028654 * (x + 0.044715 * x * x * x)))


def _mha(q, k, v, n_heads):
    """Multi-head attention on (N, D) tensors; heads split by lane slicing."""
    n, d = q.shape
    dh = d // n_heads
    scale = 1.0 / math.sqrt(dh)
    outs = []
    for h in range(n_heads):
        lo, hi = h * dh, (h + 1) * dh
        qh, kh, vh = q[:, lo:hi], k[:, lo:hi], v[:, lo:hi]
        # scores: (N, Nk) — contraction over dh, no explicit transpose needed.
        s = jax.lax.dot_general(qh, kh, (((1,), (1,)), ((), ())),
                                preferred_element_type=jnp.float32) * scale
        m = jnp.max(s, axis=-1, keepdims=True)
        p = jnp.exp(s - m)
        p = p * pl.reciprocal(jnp.sum(p, axis=-1, keepdims=True), approx=True)
        outs.append(jnp.dot(p, vh, preferred_element_type=jnp.float32))
    return jnp.concatenate(outs, axis=-1)  # (N, D)


# ----------------------------------------------------------------------------
# Fused forward kernel (one batch element per grid step)
# ----------------------------------------------------------------------------

def _fused_forward_kernel(
    patches_ref, txt_ref,
    w_patch, b_patch, pos_emb,
    vit_ln1, vit_wqkv, vit_bqkv, vit_wo, vit_bo, vit_ln2,
    vit_w1, vit_b1, vit_w2, vit_b2,
    img_proj_w, img_proj_b, txt_proj_w, txt_proj_b,
    dec_lnq, dec_lnk, dec_wq, dec_bq, dec_wkv, dec_bkv,
    dec_wo, dec_bo, dec_ln2, dec_w1, dec_b1, dec_w2, dec_b2,
    o_ref, *, n_heads,
):
    d = w_patch.shape[1]
    do = img_proj_w.shape[1]

    # ---- image encoder: patch-embedding matmul + learnable positional embedding
    x = patches_ref[0]                                                     # (N, C*P*P)
    img = jnp.dot(x, w_patch[...], preferred_element_type=jnp.float32) + b_patch[...]
    img = img + pos_emb[...]                                               # (N, D)

    # ---- ViT encoder block (pre-LN self-attention + MLP)
    h = _ln(img, vit_ln1)
    qkv = jnp.dot(h, vit_wqkv[...], preferred_element_type=jnp.float32) + vit_bqkv[...]
    q, k, v = qkv[:, :d], qkv[:, d:2 * d], qkv[:, 2 * d:]
    a = _mha(q, k, v, n_heads)
    x1 = img + jnp.dot(a, vit_wo[...], preferred_element_type=jnp.float32) + vit_bo[...]
    h = _ln(x1, vit_ln2)
    m = _gelu(jnp.dot(h, vit_w1[...], preferred_element_type=jnp.float32) + vit_b1[...])
    m = jnp.dot(m, vit_w2[...], preferred_element_type=jnp.float32) + vit_b2[...]
    vit = x1 + m                                                           # (N, D)

    # ---- projectors
    txt = txt_ref[0]                                                       # (N, Dt) zero-padded
    vit_p = jnp.dot(vit, img_proj_w[...], preferred_element_type=jnp.float32) + img_proj_b[...]
    txt_p = jnp.dot(txt, txt_proj_w[...], preferred_element_type=jnp.float32) + txt_proj_b[...]

    # ---- decoder: cross-attention (queries = image stream, memory = text) + MLP
    # TODO(synk): no key-padding mask on the zero-padded text positions (the
    # reference Decoder internals are unspecified; matches previous behavior).
    hq = _ln(vit_p, dec_lnq)
    hk = _ln(txt_p, dec_lnk)
    q = jnp.dot(hq, dec_wq[...], preferred_element_type=jnp.float32) + dec_bq[...]
    kv = jnp.dot(hk, dec_wkv[...], preferred_element_type=jnp.float32) + dec_bkv[...]
    k, v = kv[:, :do], kv[:, do:]
    a = _mha(q, k, v, n_heads)
    x2 = vit_p + jnp.dot(a, dec_wo[...], preferred_element_type=jnp.float32) + dec_bo[...]
    h = _ln(x2, dec_ln2)
    m = _gelu(jnp.dot(h, dec_w1[...], preferred_element_type=jnp.float32) + dec_b1[...])
    m = jnp.dot(m, dec_w2[...], preferred_element_type=jnp.float32) + dec_b2[...]
    out = x2 + m                                                           # (N, Do)

    o_ref[0] = out.astype(o_ref.dtype)


# ----------------------------------------------------------------------------
# Wrapper: patchify / text lookup (plain JAX glue) + one fused pallas_call
# ----------------------------------------------------------------------------

def _w_spec(arr):
    """Whole (small) parameter array, same block for every grid step."""
    nd = arr.ndim
    return pl.BlockSpec(arr.shape, lambda b: (0,) * nd)


def model_v1_forward(params, x_img, x_txt_ids, *, patch=8, n_heads=NUM_HEADS):
    B, C, H, W = x_img.shape
    D = params["w_patch"].shape[1]
    Do = params["img_proj_w"].shape[1]
    gh, gw = H // patch, W // patch
    N = gh * gw
    assert N == params["pos_emb"].shape[0], "positional embedding length mismatch"

    # patchify (layout only): conv(kernel=stride=P) == matmul on flattened patches
    patches = x_img.reshape(B, C, gh, patch, gw, patch)
    patches = patches.transpose(0, 2, 4, 1, 3, 5).reshape(B, N, C * patch * patch)

    # TODO(synk): CXR-BERT tokenizer + pretrained text encoder have no Pallas
    # equivalent; replaced by a deterministic embedding-table lookup + zero-pad.
    txt_emb = jnp.take(params["txt_embed_table"], x_txt_ids, axis=0)       # (B, Lt, Dt)
    Lt = txt_emb.shape[1]
    txt_emb = jnp.pad(txt_emb, ((0, 0), (0, N - Lt), (0, 0)))              # (B, N, Dt)
    Dt = txt_emb.shape[-1]

    weights = [params[n] for n in WEIGHT_NAMES]

    out = pl.pallas_call(
        functools.partial(_fused_forward_kernel, n_heads=n_heads),
        out_shape=jax.ShapeDtypeStruct((B, N, Do), jnp.float32),
        grid=(B,),
        in_specs=[
            pl.BlockSpec((1, N, C * patch * patch), lambda b: (b, 0, 0)),
            pl.BlockSpec((1, N, Dt), lambda b: (b, 0, 0)),
        ] + [_w_spec(w) for w in weights],
        out_specs=pl.BlockSpec((1, N, Do), lambda b: (b, 0, 0)),
        compiler_params=pltpu.CompilerParams(
            dimension_semantics=("parallel",)),
    )(patches, txt_emb, *weights)
    return out


# ----------------------------------------------------------------------------
# Deterministic parameter construction (synthetic stand-ins for pretrained parts)
# ----------------------------------------------------------------------------

def make_params(key, *, C=3, patch=8, n_patches=16, embed_dim=128,
                txt_dim=128, out_dim=128, mlp_mult=2, vocab=100):
    keys = iter(jax.random.split(key, 64))
    s = 0.02

    def nrm(shape):
        return (s * jax.random.normal(next(keys), shape)).astype(jnp.float32)

    def zeros(shape):
        return jnp.zeros(shape, jnp.float32)

    def ln(dim):  # [gamma; beta] stacked
        return jnp.stack([jnp.ones((dim,)), jnp.zeros((dim,))]).astype(jnp.float32)

    D, Dt, Do = embed_dim, txt_dim, out_dim
    p = {
        # image encoder (patch-embedding conv as matmul)
        "w_patch": nrm((C * patch * patch, D)), "b_patch": zeros((1, D)),
        "pos_emb": nrm((n_patches, D)),
        # ViT encoder block (QKV fused)
        "vit_ln1": ln(D),
        "vit_wqkv": nrm((D, 3 * D)), "vit_bqkv": zeros((1, 3 * D)),
        "vit_wo": nrm((D, D)), "vit_bo": zeros((1, D)),
        "vit_ln2": ln(D),
        "vit_w1": nrm((D, mlp_mult * D)), "vit_b1": zeros((1, mlp_mult * D)),
        "vit_w2": nrm((mlp_mult * D, D)), "vit_b2": zeros((1, D)),
        # text embedding table (stand-in for CXR-BERT)
        "txt_embed_table": nrm((vocab, Dt)),
        # projectors
        "img_proj_w": nrm((D, Do)), "img_proj_b": zeros((1, Do)),
        "txt_proj_w": nrm((Dt, Do)), "txt_proj_b": zeros((1, Do)),
        # decoder (cross-attention block; K|V fused)
        "dec_lnq": ln(Do), "dec_lnk": ln(Do),
        "dec_wq": nrm((Do, Do)), "dec_bq": zeros((1, Do)),
        "dec_wkv": nrm((Do, 2 * Do)), "dec_bkv": zeros((1, 2 * Do)),
        "dec_wo": nrm((Do, Do)), "dec_bo": zeros((1, Do)),
        "dec_ln2": ln(Do),
        "dec_w1": nrm((Do, mlp_mult * Do)), "dec_b1": zeros((1, mlp_mult * Do)),
        "dec_w2": nrm((mlp_mult * Do, Do)), "dec_b2": zeros((1, Do)),
    }
    return p


# ----------------------------------------------------------------------------

if __name__ == "__main__":
    key = jax.random.PRNGKey(0)
    k_param, k_img, k_txt = jax.random.split(key, 3)

    B, C, H, W = 2, 3, 32, 32                 # small image (NCHW, PyTorch convention)
    PATCH = 8
    N_PATCHES = (H // PATCH) * (W // PATCH)   # 16
    L_TXT = 12                                # text token length (< N_PATCHES, padded up)
    D = Dt = Do = 128                         # lane-dense feature widths

    params = make_params(k_param, C=C, patch=PATCH, n_patches=N_PATCHES,
                         embed_dim=D, txt_dim=Dt, out_dim=Do)

    x_img = jax.random.normal(k_img, (B, C, H, W), dtype=jnp.float32)
    x_txt = jax.random.randint(k_txt, (B, L_TXT), 0, 100)

    fwd = jax.jit(functools.partial(model_v1_forward, patch=PATCH))
    out = fwd(params, x_img, x_txt)
    out = jax.block_until_ready(out)

    assert out.shape == (B, N_PATCHES, Do), out.shape
    assert jnp.all(jnp.isfinite(out))
    print("KERNEL_OK")
</pallas_src>

<mosaic_0001>
module attributes {stable_mosaic.version = 11 : i64} {
  func.func @_fused_forward_kernel(%arg0: i32, %arg1: memref<1x16x192xf32, #tpu.memory_space<vmem>>, %arg2: memref<1x16x128xf32, #tpu.memory_space<vmem>>, %arg3: memref<192x128xf32, #tpu.memory_space<vmem>>, %arg4: memref<1x128xf32, #tpu.memory_space<vmem>>, %arg5: memref<16x128xf32, #tpu.memory_space<vmem>>, %arg6: memref<2x128xf32, #tpu.memory_space<vmem>>, %arg7: memref<128x384xf32, #tpu.memory_space<vmem>>, %arg8: memref<1x384xf32, #tpu.memory_space<vmem>>, %arg9: memref<128x128xf32, #tpu.memory_space<vmem>>, %arg10: memref<1x128xf32, #tpu.memory_space<vmem>>, %arg11: memref<2x128xf32, #tpu.memory_space<vmem>>, %arg12: memref<128x256xf32, #tpu.memory_space<vmem>>, %arg13: memref<1x256xf32, #tpu.memory_space<vmem>>, %arg14: memref<256x128xf32, #tpu.memory_space<vmem>>, %arg15: memref<1x128xf32, #tpu.memory_space<vmem>>, %arg16: memref<128x128xf32, #tpu.memory_space<vmem>>, %arg17: memref<1x128xf32, #tpu.memory_space<vmem>>, %arg18: memref<128x128xf32, #tpu.memory_space<vmem>>, %arg19: memref<1x128xf32, #tpu.memory_space<vmem>>, %arg20: memref<2x128xf32, #tpu.memory_space<vmem>>, %arg21: memref<2x128xf32, #tpu.memory_space<vmem>>, %arg22: memref<128x128xf32, #tpu.memory_space<vmem>>, %arg23: memref<1x128xf32, #tpu.memory_space<vmem>>, %arg24: memref<128x256xf32, #tpu.memory_space<vmem>>, %arg25: memref<1x256xf32, #tpu.memory_space<vmem>>, %arg26: memref<128x128xf32, #tpu.memory_space<vmem>>, %arg27: memref<1x128xf32, #tpu.memory_space<vmem>>, %arg28: memref<2x128xf32, #tpu.memory_space<vmem>>, %arg29: memref<128x256xf32, #tpu.memory_space<vmem>>, %arg30: memref<1x256xf32, #tpu.memory_space<vmem>>, %arg31: memref<256x128xf32, #tpu.memory_space<vmem>>, %arg32: memref<1x128xf32, #tpu.memory_space<vmem>>, %arg33: memref<1x16x128xf32, #tpu.memory_space<vmem>>) attributes {dimension_semantics = [#tpu.dimension_semantics<parallel>], iteration_bounds = array<i64: 2>, scalar_prefetch = 0 : i64, scratch_operands = 0 : i64, tpu.core_type = #tpu.core_type<tc>, window_params = [{transform_indices = @transform_0, window_bounds = array<i64: 1, 16, 192>}, {transform_indices = @transform_1, window_bounds = array<i64: 1, 16, 128>}, {pipeline_mode = #tpu.pipeline_mode<synchronous>, transform_indices = @transform_2, window_bounds = array<i64: 192, 128>}, {pipeline_mode = #tpu.pipeline_mode<synchronous>, transform_indices = @transform_3, window_bounds = array<i64: 1, 128>}, {pipeline_mode = #tpu.pipeline_mode<synchronous>, transform_indices = @transform_4, window_bounds = array<i64: 16, 128>}, {pipeline_mode = #tpu.pipeline_mode<synchronous>, transform_indices = @transform_5, window_bounds = array<i64: 2, 128>}, {pipeline_mode = #tpu.pipeline_mode<synchronous>, transform_indices = @transform_6, window_bounds = array<i64: 128, 384>}, {pipeline_mode = #tpu.pipeline_mode<synchronous>, transform_indices = @transform_7, window_bounds = array<i64: 1, 384>}, {pipeline_mode = #tpu.pipeline_mode<synchronous>, transform_indices = @transform_8, window_bounds = array<i64: 128, 128>}, {pipeline_mode = #tpu.pipeline_mode<synchronous>, transform_indices = @transform_9, window_bounds = array<i64: 1, 128>}, {pipeline_mode = #tpu.pipeline_mode<synchronous>, transform_indices = @transform_10, window_bounds = array<i64: 2, 128>}, {pipeline_mode = #tpu.pipeline_mode<synchronous>, transform_indices = @transform_11, window_bounds = array<i64: 128, 256>}, {pipeline_mode = #tpu.pipeline_mode<synchronous>, transform_indices = @transform_12, window_bounds = array<i64: 1, 256>}, {pipeline_mode = #tpu.pipeline_mode<synchronous>, transform_indices = @transform_13, window_bounds = array<i64: 256, 128>}, {pipeline_mode = #tpu.pipeline_mode<synchronous>, transform_indices = @transform_14, window_bounds = array<i64: 1, 128>}, {pipeline_mode = #tpu.pipeline_mode<synchronous>, transform_indices = @transform_15, window_bounds = array<i64: 128, 128>}, {pipeline_mode = #tpu.pipeline_mode<synchronous>, transform_indices = @transform_16, window_bounds = array<i64: 1, 128>}, {pipeline_mode = #tpu.pipeline_mode<synchronous>, transform_indices = @transform_17, window_bounds = array<i64: 128, 128>}, {pipeline_mode = #tpu.pipeline_mode<synchronous>, transform_indices = @transform_18, window_bounds = array<i64: 1, 128>}, {pipeline_mode = #tpu.pipeline_mode<synchronous>, transform_indices = @transform_19, window_bounds = array<i64: 2, 128>}, {pipeline_mode = #tpu.pipeline_mode<synchronous>, transform_indices = @transform_20, window_bounds = array<i64: 2, 128>}, {pipeline_mode = #tpu.pipeline_mode<synchronous>, transform_indices = @transform_21, window_bounds = array<i64: 128, 128>}, {pipeline_mode = #tpu.pipeline_mode<synchronous>, transform_indices = @transform_22, window_bounds = array<i64: 1, 128>}, {pipeline_mode = #tpu.pipeline_mode<synchronous>, transform_indices = @transform_23, window_bounds = array<i64: 128, 256>}, {pipeline_mode = #tpu.pipeline_mode<synchronous>, transform_indices = @transform_24, window_bounds = array<i64: 1, 256>}, {pipeline_mode = #tpu.pipeline_mode<synchronous>, transform_indices = @transform_25, window_bounds = array<i64: 128, 128>}, {pipeline_mode = #tpu.pipeline_mode<synchronous>, transform_indices = @transform_26, window_bounds = array<i64: 1, 128>}, {pipeline_mode = #tpu.pipeline_mode<synchronous>, transform_indices = @transform_27, window_bounds = array<i64: 2, 128>}, {pipeline_mode = #tpu.pipeline_mode<synchronous>, transform_indices = @transform_28, window_bounds = array<i64: 128, 256>}, {pipeline_mode = #tpu.pipeline_mode<synchronous>, transform_indices = @transform_29, window_bounds = array<i64: 1, 256>}, {pipeline_mode = #tpu.pipeline_mode<synchronous>, transform_indices = @transform_30, window_bounds = array<i64: 256, 128>}, {pipeline_mode = #tpu.pipeline_mode<synchronous>, transform_indices = @transform_31, window_bounds = array<i64: 1, 128>}, {transform_indices = @transform_32, window_bounds = array<i64: 1, 16, 128>}]} {
    %c0 = arith.constant 0 : index
    %c0_0 = arith.constant 0 : index
    %c0_1 = arith.constant 0 : index
    %0 = vector.load %arg1[%c0, %c0_0, %c0_1] : memref<1x16x192xf32, #tpu.memory_space<vmem>>, vector<1x16x192xf32>
    %1 = vector.shape_cast %0 : vector<1x16x192xf32> to vector<16x192xf32>
    %c0_2 = arith.constant 0 : index
    %c0_3 = arith.constant 0 : index
    %2 = vector.load %arg3[%c0_2, %c0_3] : memref<192x128xf32, #tpu.memory_space<vmem>>, vector<192x128xf32>
    %cst = arith.constant dense<0.000000e+00> : vector<16x128xf32>
    %3 = tpu.matmul %1, %2, %cst {dimension_numbers = #tpu.dot_dimension_numbers<[1], [0], [0], [1], [0, 0, 1, 1], [], []>} : vector<16x192xf32>, vector<192x128xf32>, vector<16x128xf32> -> vector<16x128xf32>
    %c0_4 = arith.constant 0 : index
    %c0_5 = arith.constant 0 : index
    %4 = vector.load %arg4[%c0_4, %c0_5] : memref<1x128xf32, #tpu.memory_space<vmem>>, vector<1x128xf32>
    %5 = vector.broadcast %4 : vector<1x128xf32> to vector<16x128xf32>
    %6 = arith.addf %3, %5 : vector<16x128xf32>
    %c0_6 = arith.constant 0 : index
    %c0_7 = arith.constant 0 : index
    %7 = vector.load %arg5[%c0_6, %c0_7] : memref<16x128xf32, #tpu.memory_space<vmem>>, vector<16x128xf32>
    %8 = arith.addf %6, %7 : vector<16x128xf32>
    %c0_8 = arith.constant 0 : index
    %c0_9 = arith.constant 0 : index
    %9 = vector.load %arg6[%c0_8, %c0_9] : memref<2x128xf32, #tpu.memory_space<vmem>>, vector<2x128xf32>
    %10 = vector.extract_strided_slice %9 {offsets = [0, 0], sizes = [1, 128], strides = [1, 1]} : vector<2x128xf32> to vector<1x128xf32>
    %11 = vector.extract_strided_slice %9 {offsets = [1, 0], sizes = [1, 128], strides = [1, 1]} : vector<2x128xf32> to vector<1x128xf32>
    %cst_10 = arith.constant dense<0.000000e+00> : vector<16xf32>
    %12 = vector.multi_reduction <add>, %8, %cst_10 [1] : vector<16x128xf32> to vector<16xf32>
    %13 = vector.shape_cast %12 : vector<16xf32> to vector<16x1xf32>
    %cst_11 = arith.constant 1.280000e+02 : f32
    %14 = vector.broadcast %cst_11 : f32 to vector<16x1xf32>
    %15 = arith.divf %13, %14 : vector<16x1xf32>
    %16 = vector.broadcast %15 : vector<16x1xf32> to vector<16x128xf32>
    %17 = arith.subf %8, %16 : vector<16x128xf32>
    %18 = arith.mulf %17, %17 : vector<16x128xf32>
    %cst_12 = arith.constant dense<0.000000e+00> : vector<16xf32>
    %19 = vector.multi_reduction <add>, %18, %cst_12 [1] : vector<16x128xf32> to vector<16xf32>
    %20 = vector.shape_cast %19 : vector<16xf32> to vector<16x1xf32>
    %cst_13 = arith.constant 1.280000e+02 : f32
    %21 = vector.broadcast %cst_13 : f32 to vector<16x1xf32>
    %22 = arith.divf %20, %21 : vector<16x1xf32>
    %cst_14 = arith.constant 9.99999974E-6 : f32
    %23 = vector.broadcast %cst_14 : f32 to vector<16x1xf32>
    %24 = arith.addf %22, %23 : vector<16x1xf32>
    %25 = math.rsqrt %24 : vector<16x1xf32>
    %26 = vector.broadcast %25 : vector<16x1xf32> to vector<16x128xf32>
    %27 = arith.mulf %17, %26 : vector<16x128xf32>
    %28 = vector.broadcast %10 : vector<1x128xf32> to vector<16x128xf32>
    %29 = arith.mulf %27, %28 : vector<16x128xf32>
    %30 = vector.broadcast %11 : vector<1x128xf32> to vector<16x128xf32>
    %31 = arith.addf %29, %30 : vector<16x128xf32>
    %c0_15 = arith.constant 0 : index
    %c0_16 = arith.constant 0 : index
    %32 = vector.load %arg7[%c0_15, %c0_16] : memref<128x384xf32, #tpu.memory_space<vmem>>, vector<128x384xf32>
    %cst_17 = arith.constant dense<0.000000e+00> : vector<16x384xf32>
    %33 = tpu.matmul %31, %32, %cst_17 {dimension_numbers = #tpu.dot_dimension_numbers<[1], [0], [0], [1], [0, 0, 1, 1], [], []>} : vector<16x128xf32>, vector<128x384xf32>, vector<16x384xf32> -> vector<16x384xf32>
    %c0_18 = arith.constant 0 : index
    %c0_19 = arith.constant 0 : index
    %34 = vector.load %arg8[%c0_18, %c0_19] : memref<1x384xf32, #tpu.memory_space<vmem>>, vector<1x384xf32>
    %35 = vector.broadcast %34 : vector<1x384xf32> to vector<16x384xf32>
    %36 = arith.addf %33, %35 : vector<16x384xf32>
    %37 = vector.extract_strided_slice %36 {offsets = [0, 0], sizes = [16, 128], strides = [1, 1]} : vector<16x384xf32> to vector<16x128xf32>
    %38 = vector.extract_strided_slice %36 {offsets = [0, 128], sizes = [16, 128], strides = [1, 1]} : vector<16x384xf32> to vector<16x128xf32>
    %39 = vector.extract_strided_slice %36 {offsets = [0, 256], sizes = [16, 128], strides = [1, 1]} : vector<16x384xf32> to vector<16x128xf32>
    %40 = vector.extract_strided_slice %37 {offsets = [0, 0], sizes = [16, 32], strides = [1, 1]} : vector<16x128xf32> to vector<16x32xf32>
    %41 = vector.extract_strided_slice %38 {offsets = [0, 0], sizes = [16, 32], strides = [1, 1]} : vector<16x128xf32> to vector<16x32xf32>
    %42 = vector.extract_strided_slice %39 {offsets = [0, 0], sizes = [16, 32], strides = [1, 1]} : vector<16x128xf32> to vector<16x32xf32>
    %cst_20 = arith.constant dense<0.000000e+00> : vector<16x16xf32>
    %43 = tpu.matmul %40, %41, %cst_20 {dimension_numbers = #tpu.dot_dimension_numbers<[1], [1], [0], [0], [0, 0, 1, 0], [], []>} : vector<16x32xf32>, vector<16x32xf32>, vector<16x16xf32> -> vector<16x16xf32>
    %cst_21 = arith.constant 0.176776692 : f32
    %44 = vector.broadcast %cst_21 : f32 to vector<16x16xf32>
    %45 = arith.mulf %43, %44 : vector<16x16xf32>
    %cst_22 = arith.constant dense<0xFF800000> : vector<16xf32>
    %46 = vector.multi_reduction <maximumf>, %45, %cst_22 [1] : vector<16x16xf32> to vector<16xf32>
    %47 = vector.shape_cast %46 : vector<16xf32> to vector<16x1xf32>
    %48 = vector.broadcast %47 : vector<16x1xf32> to vector<16x16xf32>
    %49 = arith.subf %45, %48 : vector<16x16xf32>
    %50 = math.exp %49 : vector<16x16xf32>
    %cst_23 = arith.constant dense<0.000000e+00> : vector<16xf32>
    %51 = vector.multi_reduction <add>, %50, %cst_23 [1] : vector<16x16xf32> to vector<16xf32>
    %52 = vector.shape_cast %51 : vector<16xf32> to vector<16x1xf32>
    %53 = tpu.reciprocal %52 {approx = true} : vector<16x1xf32> -> vector<16x1xf32>
    %54 = vector.broadcast %53 : vector<16x1xf32> to vector<16x16xf32>
    %55 = arith.mulf %50, %54 : vector<16x16xf32>
    %cst_24 = arith.constant dense<0.000000e+00> : vector<16x32xf32>
    %56 = tpu.matmul %55, %42, %cst_24 {dimension_numbers = #tpu.dot_dimension_numbers<[1], [0], [0], [1], [0, 0, 1, 1], [], []>} : vector<16x16xf32>, vector<16x32xf32>, vector<16x32xf32> -> vector<16x32xf32>
    %57 = vector.extract_strided_slice %37 {offsets = [0, 32], sizes = [16, 32], strides = [1, 1]} : vector<16x128xf32> to vector<16x32xf32>
    %58 = vector.extract_strided_slice %38 {offsets = [0, 32], sizes = [16, 32], strides = [1, 1]} : vector<16x128xf32> to vector<16x32xf32>
    %59 = vector.extract_strided_slice %39 {offsets = [0, 32], sizes = [16, 32], strides = [1, 1]} : vector<16x128xf32> to vector<16x32xf32>
    %cst_25 = arith.constant dense<0.000000e+00> : vector<16x16xf32>
    %60 = tpu.matmul %57, %58, %cst_25 {dimension_numbers = #tpu.dot_dimension_numbers<[1], [1], [0], [0], [0, 0, 1, 0], [], []>} : vector<16x32xf32>, vector<16x32xf32>, vector<16x16xf32> -> vector<16x16xf32>
    %cst_26 = arith.constant 0.176776692 : f32
    %61 = vector.broadcast %cst_26 : f32 to vector<16x16xf32>
    %62 = arith.mulf %60, %61 : vector<16x16xf32>
    %cst_27 = arith.constant dense<0xFF800000> : vector<16xf32>
    %63 = vector.multi_reduction <maximumf>, %62, %cst_27 [1] : vector<16x16xf32> to vector<16xf32>
    %64 = vector.shape_cast %63 : vector<16xf32> to vector<16x1xf32>
    %65 = vector.broadcast %64 : vector<16x1xf32> to vector<16x16xf32>
    %66 = arith.subf %62, %65 : vector<16x16xf32>
    %67 = math.exp %66 : vector<16x16xf32>
    %cst_28 = arith.constant dense<0.000000e+00> : vector<16xf32>
    %68 = vector.multi_reduction <add>, %67, %cst_28 [1] : vector<16x16xf32> to vector<16xf32>
    %69 = vector.shape_cast %68 : vector<16xf32> to vector<16x1xf32>
    %70 = tpu.reciprocal %69 {approx = true} : vector<16x1xf32> -> vector<16x1xf32>
    %71 = vector.broadcast %70 : vector<16x1xf32> to vector<16x16xf32>
    %72 = arith.mulf %67, %71 : vector<16x16xf32>
    %cst_29 = arith.constant dense<0.000000e+00> : vector<16x32xf32>
    %73 = tpu.matmul %72, %59, %cst_29 {dimension_numbers = #tpu.dot_dimension_numbers<[1], [0], [0], [1], [0, 0, 1, 1], [], []>} : vector<16x16xf32>, vector<16x32xf32>, vector<16x32xf32> -> vector<16x32xf32>
    %74 = vector.extract_strided_slice %37 {offsets = [0, 64], sizes = [16, 32], strides = [1, 1]} : vector<16x128xf32> to vector<16x32xf32>
    %75 = vector.extract_strided_slice %38 {offsets = [0, 64], sizes = [16, 32], strides = [1, 1]} : vector<16x128xf32> to vector<16x32xf32>
    %76 = vector.extract_strided_slice %39 {offsets = [0, 64], sizes = [16, 32], strides = [1, 1]} : vector<16x128xf32> to vector<16x32xf32>
    %cst_30 = arith.constant dense<0.000000e+00> : vector<16x16xf32>
    %77 = tpu.matmul %74, %75, %cst_30 {dimension_numbers = #tpu.dot_dimension_numbers<[1], [1], [0], [0], [0, 0, 1, 0], [], []>} : vector<16x32xf32>, vector<16x32xf32>, vector<16x16xf32> -> vector<16x16xf32>
    %cst_31 = arith.constant 0.176776692 : f32
    %78 = vector.broadcast %cst_31 : f32 to vector<16x16xf32>
    %79 = arith.mulf %77, %78 : vector<16x16xf32>
    %cst_32 = arith.constant dense<0xFF800000> : vector<16xf32>
    %80 = vector.multi_reduction <maximumf>, %79, %cst_32 [1] : vector<16x16xf32> to vector<16xf32>
    %81 = vector.shape_cast %80 : vector<16xf32> to vector<16x1xf32>
    %82 = vector.broadcast %81 : vector<16x1xf32> to vector<16x16xf32>
    %83 = arith.subf %79, %82 : vector<16x16xf32>
    %84 = math.exp %83 : vector<16x16xf32>
    %cst_33 = arith.constant dense<0.000000e+00> : vector<16xf32>
    %85 = vector.multi_reduction <add>, %84, %cst_33 [1] : vector<16x16xf32> to vector<16xf32>
    %86 = vector.shape_cast %85 : vector<16xf32> to vector<16x1xf32>
    %87 = tpu.reciprocal %86 {approx = true} : vector<16x1xf32> -> vector<16x1xf32>
    %88 = vector.broadcast %87 : vector<16x1xf32> to vector<16x16xf32>
    %89 = arith.mulf %84, %88 : vector<16x16xf32>
    %cst_34 = arith.constant dense<0.000000e+00> : vector<16x32xf32>
    %90 = tpu.matmul %89, %76, %cst_34 {dimension_numbers = #tpu.dot_dimension_numbers<[1], [0], [0], [1], [0, 0, 1, 1], [], []>} : vector<16x16xf32>, vector<16x32xf32>, vector<16x32xf32> -> vector<16x32xf32>
    %91 = vector.extract_strided_slice %37 {offsets = [0, 96], sizes = [16, 32], strides = [1, 1]} : vector<16x128xf32> to vector<16x32xf32>
    %92 = vector.extract_strided_slice %38 {offsets = [0, 96], sizes = [16, 32], strides = [1, 1]} : vector<16x128xf32> to vector<16x32xf32>
    %93 = vector.extract_strided_slice %39 {offsets = [0, 96], sizes = [16, 32], strides = [1, 1]} : vector<16x128xf32> to vector<16x32xf32>
    %cst_35 = arith.constant dense<0.000000e+00> : vector<16x16xf32>
    %94 = tpu.matmul %91, %92, %cst_35 {dimension_numbers = #tpu.dot_dimension_numbers<[1], [1], [0], [0], [0, 0, 1, 0], [], []>} : vector<16x32xf32>, vector<16x32xf32>, vector<16x16xf32> -> vector<16x16xf32>
    %cst_36 = arith.constant 0.176776692 : f32
    %95 = vector.broadcast %cst_36 : f32 to vector<16x16xf32>
    %96 = arith.mulf %94, %95 : vector<16x16xf32>
    %cst_37 = arith.constant dense<0xFF800000> : vector<16xf32>
    %97 = vector.multi_reduction <maximumf>, %96, %cst_37 [1] : vector<16x16xf32> to vector<16xf32>
    %98 = vector.shape_cast %97 : vector<16xf32> to vector<16x1xf32>
    %99 = vector.broadcast %98 : vector<16x1xf32> to vector<16x16xf32>
    %100 = arith.subf %96, %99 : vector<16x16xf32>
    %101 = math.exp %100 : vector<16x16xf32>
    %cst_38 = arith.constant dense<0.000000e+00> : vector<16xf32>
    %102 = vector.multi_reduction <add>, %101, %cst_38 [1] : vector<16x16xf32> to vector<16xf32>
    %103 = vector.shape_cast %102 : vector<16xf32> to vector<16x1xf32>
    %104 = tpu.reciprocal %103 {approx = true} : vector<16x1xf32> -> vector<16x1xf32>
    %105 = vector.broadcast %104 : vector<16x1xf32> to vector<16x16xf32>
    %106 = arith.mulf %101, %105 : vector<16x16xf32>
    %cst_39 = arith.constant dense<0.000000e+00> : vector<16x32xf32>
    %107 = tpu.matmul %106, %93, %cst_39 {dimension_numbers = #tpu.dot_dimension_numbers<[1], [0], [0], [1], [0, 0, 1, 1], [], []>} : vector<16x16xf32>, vector<16x32xf32>, vector<16x32xf32> -> vector<16x32xf32>
    %108 = tpu.concatenate %56, %73, %90, %107 in 1 : vector<16x32xf32>, vector<16x32xf32>, vector<16x32xf32>, vector<16x32xf32> -> vector<16x128xf32>
    %c0_40 = arith.constant 0 : index
    %c0_41 = arith.constant 0 : index
    %109 = vector.load %arg9[%c0_40, %c0_41] : memref<128x128xf32, #tpu.memory_space<vmem>>, vector<128x128xf32>
    %cst_42 = arith.constant dense<0.000000e+00> : vector<16x128xf32>
    %110 = tpu.matmul %108, %109, %cst_42 {dimension_numbers = #tpu.dot_dimension_numbers<[1], [0], [0], [1], [0, 0, 1, 1], [], []>} : vector<16x128xf32>, vector<128x128xf32>, vector<16x128xf32> -> vector<16x128xf32>
    %111 = arith.addf %8, %110 : vector<16x128xf32>
    %c0_43 = arith.constant 0 : index
    %c0_44 = arith.constant 0 : index
    %112 = vector.load %arg10[%c0_43, %c0_44] : memref<1x128xf32, #tpu.memory_space<vmem>>, vector<1x128xf32>
    %113 = vector.broadcast %112 : vector<1x128xf32> to vector<16x128xf32>
    %114 = arith.addf %111, %113 : vector<16x128xf32>
    %c0_45 = arith.constant 0 : index
    %c0_46 = arith.constant 0 : index
    %115 = vector.load %arg11[%c0_45, %c0_46] : memref<2x128xf32, #tpu.memory_space<vmem>>, vector<2x128xf32>
    %116 = vector.extract_strided_slice %115 {offsets = [0, 0], sizes = [1, 128], strides = [1, 1]} : vector<2x128xf32> to vector<1x128xf32>
    %117 = vector.extract_strided_slice %115 {offsets = [1, 0], sizes = [1, 128], strides = [1, 1]} : vector<2x128xf32> to vector<1x128xf32>
    %cst_47 = arith.constant dense<0.000000e+00> : vector<16xf32>
    %118 = vector.multi_reduction <add>, %114, %cst_47 [1] : vector<16x128xf32> to vector<16xf32>
    %119 = vector.shape_cast %118 : vector<16xf32> to vector<16x1xf32>
    %cst_48 = arith.constant 1.280000e+02 : f32
    %120 = vector.broadcast %cst_48 : f32 to vector<16x1xf32>
    %121 = arith.divf %119, %120 : vector<16x1xf32>
    %122 = vector.broadcast %121 : vector<16x1xf32> to vector<16x128xf32>
    %123 = arith.subf %114, %122 : vector<16x128xf32>
    %124 = arith.mulf %123, %123 : vector<16x128xf32>
    %cst_49 = arith.constant dense<0.000000e+00> : vector<16xf32>
    %125 = vector.multi_reduction <add>, %124, %cst_49 [1] : vector<16x128xf32> to vector<16xf32>
    %126 = vector.shape_cast %125 : vector<16xf32> to vector<16x1xf32>
    %cst_50 = arith.constant 1.280000e+02 : f32
    %127 = vector.broadcast %cst_50 : f32 to vector<16x1xf32>
    %128 = arith.divf %126, %127 : vector<16x1xf32>
    %cst_51 = arith.constant 9.99999974E-6 : f32
    %129 = vector.broadcast %cst_51 : f32 to vector<16x1xf32>
    %130 = arith.addf %128, %129 : vector<16x1xf32>
    %131 = math.rsqrt %130 : vector<16x1xf32>
    %132 = vector.broadcast %131 : vector<16x1xf32> to vector<16x128xf32>
    %133 = arith.mulf %123, %132 : vector<16x128xf32>
    %134 = vector.broadcast %116 : vector<1x128xf32> to vector<16x128xf32>
    %135 = arith.mulf %133, %134 : vector<16x128xf32>
    %136 = vector.broadcast %117 : vector<1x128xf32> to vector<16x128xf32>
    %137 = arith.addf %135, %136 : vector<16x128xf32>
    %c0_52 = arith.constant 0 : index
    %c0_53 = arith.constant 0 : index
    %138 = vector.load %arg12[%c0_52, %c0_53] : memref<128x256xf32, #tpu.memory_space<vmem>>, vector<128x256xf32>
    %cst_54 = arith.constant dense<0.000000e+00> : vector<16x256xf32>
    %139 = tpu.matmul %137, %138, %cst_54 {dimension_numbers = #tpu.dot_dimension_numbers<[1], [0], [0], [1], [0, 0, 1, 1], [], []>} : vector<16x128xf32>, vector<128x256xf32>, vector<16x256xf32> -> vector<16x256xf32>
    %c0_55 = arith.constant 0 : index
    %c0_56 = arith.constant 0 : index
    %140 = vector.load %arg13[%c0_55, %c0_56] : memref<1x256xf32, #tpu.memory_space<vmem>>, vector<1x256xf32>
    %141 = vector.broadcast %140 : vector<1x256xf32> to vector<16x256xf32>
    %142 = arith.addf %139, %141 : vector<16x256xf32>
    %cst_57 = arith.constant 5.000000e-01 : f32
    %143 = vector.broadcast %cst_57 : f32 to vector<16x256xf32>
    %144 = arith.mulf %143, %142 : vector<16x256xf32>
    %cst_58 = arith.constant 4.471500e-02 : f32
    %145 = vector.broadcast %cst_58 : f32 to vector<16x256xf32>
    %146 = arith.mulf %145, %142 : vector<16x256xf32>
    %147 = arith.mulf %146, %142 : vector<16x256xf32>
    %148 = arith.mulf %147, %142 : vector<16x256xf32>
    %149 = arith.addf %142, %148 : vector<16x256xf32>
    %cst_59 = arith.constant 0.797884583 : f32
    %150 = vector.broadcast %cst_59 : f32 to vector<16x256xf32>
    %151 = arith.mulf %150, %149 : vector<16x256xf32>
    %152 = math.tanh %151 : vector<16x256xf32>
    %cst_60 = arith.constant 1.000000e+00 : f32
    %153 = vector.broadcast %cst_60 : f32 to vector<16x256xf32>
    %154 = arith.addf %153, %152 : vector<16x256xf32>
    %155 = arith.mulf %144, %154 : vector<16x256xf32>
    %c0_61 = arith.constant 0 : index
    %c0_62 = arith.constant 0 : index
    %156 = vector.load %arg14[%c0_61, %c0_62] : memref<256x128xf32, #tpu.memory_space<vmem>>, vector<256x128xf32>
    %cst_63 = arith.constant dense<0.000000e+00> : vector<16x128xf32>
    %157 = tpu.matmul %155, %156, %cst_63 {dimension_numbers = #tpu.dot_dimension_numbers<[1], [0], [0], [1], [0, 0, 1, 1], [], []>} : vector<16x256xf32>, vector<256x128xf32>, vector<16x128xf32> -> vector<16x128xf32>
    %c0_64 = arith.constant 0 : index
    %c0_65 = arith.constant 0 : index
    %158 = vector.load %arg15[%c0_64, %c0_65] : memref<1x128xf32, #tpu.memory_space<vmem>>, vector<1x128xf32>
    %159 = vector.broadcast %158 : vector<1x128xf32> to vector<16x128xf32>
    %160 = arith.addf %157, %159 : vector<16x128xf32>
    %161 = arith.addf %114, %160 : vector<16x128xf32>
    %c0_66 = arith.constant 0 : index
    %c0_67 = arith.constant 0 : index
    %c0_68 = arith.constant 0 : index
    %162 = vector.load %arg2[%c0_66, %c0_67, %c0_68] : memref<1x16x128xf32, #tpu.memory_space<vmem>>, vector<1x16x128xf32>
    %163 = vector.shape_cast %162 : vector<1x16x128xf32> to vector<16x128xf32>
    %c0_69 = arith.constant 0 : index
    %c0_70 = arith.constant 0 : index
    %164 = vector.load %arg16[%c0_69, %c0_70] : memref<128x128xf32, #tpu.memory_space<vmem>>, vector<128x128xf32>
    %cst_71 = arith.constant dense<0.000000e+00> : vector<16x128xf32>
    %165 = tpu.matmul %161, %164, %cst_71 {dimension_numbers = #tpu.dot_dimension_numbers<[1], [0], [0], [1], [0, 0, 1, 1], [], []>} : vector<16x128xf32>, vector<128x128xf32>, vector<16x128xf32> -> vector<16x128xf32>
    %c0_72 = arith.constant 0 : index
    %c0_73 = arith.constant 0 : index
    %166 = vector.load %arg17[%c0_72, %c0_73] : memref<1x128xf32, #tpu.memory_space<vmem>>, vector<1x128xf32>
    %167 = vector.broadcast %166 : vector<1x128xf32> to vector<16x128xf32>
    %168 = arith.addf %165, %167 : vector<16x128xf32>
    %c0_74 = arith.constant 0 : index
    %c0_75 = arith.constant 0 : index
    %169 = vector.load %arg18[%c0_74, %c0_75] : memref<128x128xf32, #tpu.memory_space<vmem>>, vector<128x128xf32>
    %cst_76 = arith.constant dense<0.000000e+00> : vector<16x128xf32>
    %170 = tpu.matmul %163, %169, %cst_76 {dimension_numbers = #tpu.dot_dimension_numbers<[1], [0], [0], [1], [0, 0, 1, 1], [], []>} : vector<16x128xf32>, vector<128x128xf32>, vector<16x128xf32> -> vector<16x128xf32>
    %c0_77 = arith.constant 0 : index
    %c0_78 = arith.constant 0 : index
    %171 = vector.load %arg19[%c0_77, %c0_78] : memref<1x128xf32, #tpu.memory_space<vmem>>, vector<1x128xf32>
    %172 = vector.broadcast %171 : vector<1x128xf32> to vector<16x128xf32>
    %173 = arith.addf %170, %172 : vector<16x128xf32>
    %c0_79 = arith.constant 0 : index
    %c0_80 = arith.constant 0 : index
    %174 = vector.load %arg20[%c0_79, %c0_80] : memref<2x128xf32, #tpu.memory_space<vmem>>, vector<2x128xf32>
    %175 = vector.extract_strided_slice %174 {offsets = [0, 0], sizes = [1, 128], strides = [1, 1]} : vector<2x128xf32> to vector<1x128xf32>
    %176 = vector.extract_strided_slice %174 {offsets = [1, 0], sizes = [1, 128], strides = [1, 1]} : vector<2x128xf32> to vector<1x128xf32>
    %cst_81 = arith.constant dense<0.000000e+00> : vector<16xf32>
    %177 = vector.multi_reduction <add>, %168, %cst_81 [1] : vector<16x128xf32> to vector<16xf32>
    %178 = vector.shape_cast %177 : vector<16xf32> to vector<16x1xf32>
    %cst_82 = arith.constant 1.280000e+02 : f32
    %179 = vector.broadcast %cst_82 : f32 to vector<16x1xf32>
    %180 = arith.divf %178, %179 : vector<16x1xf32>
    %181 = vector.broadcast %180 : vector<16x1xf32> to vector<16x128xf32>
    %182 = arith.subf %168, %181 : vector<16x128xf32>
    %183 = arith.mulf %182, %182 : vector<16x128xf32>
    %cst_83 = arith.constant dense<0.000000e+00> : vector<16xf32>
    %184 = vector.multi_reduction <add>, %183, %cst_83 [1] : vector<16x128xf32> to vector<16xf32>
    %185 = vector.shape_cast %184 : vector<16xf32> to vector<16x1xf32>
    %cst_84 = arith.constant 1.280000e+02 : f32
    %186 = vector.broadcast %cst_84 : f32 to vector<16x1xf32>
    %187 = arith.divf %185, %186 : vector<16x1xf32>
    %cst_85 = arith.constant 9.99999974E-6 : f32
    %188 = vector.broadcast %cst_85 : f32 to vector<16x1xf32>
    %189 = arith.addf %187, %188 : vector<16x1xf32>
    %190 = math.rsqrt %189 : vector<16x1xf32>
    %191 = vector.broadcast %190 : vector<16x1xf32> to vector<16x128xf32>
    %192 = arith.mulf %182, %191 : vector<16x128xf32>
    %193 = vector.broadcast %175 : vector<1x128xf32> to vector<16x128xf32>
    %194 = arith.mulf %192, %193 : vector<16x128xf32>
    %195 = vector.broadcast %176 : vector<1x128xf32> to vector<16x128xf32>
    %196 = arith.addf %194, %195 : vector<16x128xf32>
    %c0_86 = arith.constant 0 : index
    %c0_87 = arith.constant 0 : index
    %197 = vector.load %arg21[%c0_86, %c0_87] : memref<2x128xf32, #tpu.memory_space<vmem>>, vector<2x128xf32>
    %198 = vector.extract_strided_slice %197 {offsets = [0, 0], sizes = [1, 128], strides = [1, 1]} : vector<2x128xf32> to vector<1x128xf32>
    %199 = vector.extract_strided_slice %197 {offsets = [1, 0], sizes = [1, 128], strides = [1, 1]} : vector<2x128xf32> to vector<1x128xf32>
    %cst_88 = arith.constant dense<0.000000e+00> : vector<16xf32>
    %200 = vector.multi_reduction <add>, %173, %cst_88 [1] : vector<16x128xf32> to vector<16xf32>
    %201 = vector.shape_cast %200 : vector<16xf32> to vector<16x1xf32>
    %cst_89 = arith.constant 1.280000e+02 : f32
    %202 = vector.broadcast %cst_89 : f32 to vector<16x1xf32>
    %203 = arith.divf %201, %202 : vector<16x1xf32>
    %204 = vector.broadcast %203 : vector<16x1xf32> to vector<16x128xf32>
    %205 = arith.subf %173, %204 : vector<16x128xf32>
    %206 = arith.mulf %205, %205 : vector<16x128xf32>
    %cst_90 = arith.constant dense<0.000000e+00> : vector<16xf32>
    %207 = vector.multi_reduction <add>, %206, %cst_90 [1] : vector<16x128xf32> to vector<16xf32>
    %208 = vector.shape_cast %207 : vector<16xf32> to vector<16x1xf32>
    %cst_91 = arith.constant 1.280000e+02 : f32
    %209 = vector.broadcast %cst_91 : f32 to vector<16x1xf32>
    %210 = arith.divf %208, %209 : vector<16x1xf32>
    %cst_92 = arith.constant 9.99999974E-6 : f32
    %211 = vector.broadcast %cst_92 : f32 to vector<16x1xf32>
    %212 = arith.addf %210, %211 : vector<16x1xf32>
    %213 = math.rsqrt %212 : vector<16x1xf32>
    %214 = vector.broadcast %213 : vector<16x1xf32> to vector<16x128xf32>
    %215 = arith.mulf %205, %214 : vector<16x128xf32>
    %216 = vector.broadcast %198 : vector<1x128xf32> to vector<16x128xf32>
    %217 = arith.mulf %215, %216 : vector<16x128xf32>
    %218 = vector.broadcast %199 : vector<1x128xf32> to vector<16x128xf32>
    %219 = arith.addf %217, %218 : vector<16x128xf32>
    %c0_93 = arith.constant 0 : index
    %c0_94 = arith.constant 0 : index
    %220 = vector.load %arg22[%c0_93, %c0_94] : memref<128x128xf32, #tpu.memory_space<vmem>>, vector<128x128xf32>
    %cst_95 = arith.constant dense<0.000000e+00> : vector<16x128xf32>
    %221 = tpu.matmul %196, %220, %cst_95 {dimension_numbers = #tpu.dot_dimension_numbers<[1], [0], [0], [1], [0, 0, 1, 1], [], []>} : vector<16x128xf32>, vector<128x128xf32>, vector<16x128xf32> -> vector<16x128xf32>
    %c0_96 = arith.constant 0 : index
    %c0_97 = arith.constant 0 : index
    %222 = vector.load %arg23[%c0_96, %c0_97] : memref<1x128xf32, #tpu.memory_space<vmem>>, vector<1x128xf32>
    %223 = vector.broadcast %222 : vector<1x128xf32> to vector<16x128xf32>
    %224 = arith.addf %221, %223 : vector<16x128xf32>
    %c0_98 = arith.constant 0 : index
    %c0_99 = arith.constant 0 : index
    %225 = vector.load %arg24[%c0_98, %c0_99] : memref<128x256xf32, #tpu.memory_space<vmem>>, vector<128x256xf32>
    %cst_100 = arith.constant dense<0.000000e+00> : vector<16x256xf32>
    %226 = tpu.matmul %219, %225, %cst_100 {dimension_numbers = #tpu.dot_dimension_numbers<[1], [0], [0], [1], [0, 0, 1, 1], [], []>} : vector<16x128xf32>, vector<128x256xf32>, vector<16x256xf32> -> vector<16x256xf32>
    %c0_101 = arith.constant 0 : index
    %c0_102 = arith.constant 0 : index
    %227 = vector.load %arg25[%c0_101, %c0_102] : memref<1x256xf32, #tpu.memory_space<vmem>>, vector<1x256xf32>
    %228 = vector.broadcast %227 : vector<1x256xf32> to vector<16x256xf32>
    %229 = arith.addf %226, %228 : vector<16x256xf32>
    %230 = vector.extract_strided_slice %229 {offsets = [0, 0], sizes = [16, 128], strides = [1, 1]} : vector<16x256xf32> to vector<16x128xf32>
    %231 = vector.extract_strided_slice %229 {offsets = [0, 128], sizes = [16, 128], strides = [1, 1]} : vector<16x256xf32> to vector<16x128xf32>
    %232 = vector.extract_strided_slice %224 {offsets = [0, 0], sizes = [16, 32], strides = [1, 1]} : vector<16x128xf32> to vector<16x32xf32>
    %233 = vector.extract_strided_slice %230 {offsets = [0, 0], sizes = [16, 32], strides = [1, 1]} : vector<16x128xf32> to vector<16x32xf32>
    %234 = vector.extract_strided_slice %231 {offsets = [0, 0], sizes = [16, 32], strides = [1, 1]} : vector<16x128xf32> to vector<16x32xf32>
    %cst_103 = arith.constant dense<0.000000e+00> : vector<16x16xf32>
    %235 = tpu.matmul %232, %233, %cst_103 {dimension_numbers = #tpu.dot_dimension_numbers<[1], [1], [0], [0], [0, 0, 1, 0], [], []>} : vector<16x32xf32>, vector<16x32xf32>, vector<16x16xf32> -> vector<16x16xf32>
    %cst_104 = arith.constant 0.176776692 : f32
    %236 = vector.broadcast %cst_104 : f32 to vector<16x16xf32>
    %237 = arith.mulf %235, %236 : vector<16x16xf32>
    %cst_105 = arith.constant dense<0xFF800000> : vector<16xf32>
    %238 = vector.multi_reduction <maximumf>, %237, %cst_105 [1] : vector<16x16xf32> to vector<16xf32>
    %239 = vector.shape_cast %238 : vector<16xf32> to vector<16x1xf32>
    %240 = vector.broadcast %239 : vector<16x1xf32> to vector<16x16xf32>
    %241 = arith.subf %237, %240 : vector<16x16xf32>
    %242 = math.exp %241 : vector<16x16xf32>
    %cst_106 = arith.constant dense<0.000000e+00> : vector<16xf32>
    %243 = vector.multi_reduction <add>, %242, %cst_106 [1] : vector<16x16xf32> to vector<16xf32>
    %244 = vector.shape_cast %243 : vector<16xf32> to vector<16x1xf32>
    %245 = tpu.reciprocal %244 {approx = true} : vector<16x1xf32> -> vector<16x1xf32>
    %246 = vector.broadcast %245 : vector<16x1xf32> to vector<16x16xf32>
    %247 = arith.mulf %242, %246 : vector<16x16xf32>
    %cst_107 = arith.constant dense<0.000000e+00> : vector<16x32xf32>
    %248 = tpu.matmul %247, %234, %cst_107 {dimension_numbers = #tpu.dot_dimension_numbers<[1], [0], [0], [1], [0, 0, 1, 1], [], []>} : vector<16x16xf32>, vector<16x32xf32>, vector<16x32xf32> -> vector<16x32xf32>
    %249 = vector.extract_strided_slice %224 {offsets = [0, 32], sizes = [16, 32], strides = [1, 1]} : vector<16x128xf32> to vector<16x32xf32>
    %250 = vector.extract_strided_slice %230 {offsets = [0, 32], sizes = [16, 32], strides = [1, 1]} : vector<16x128xf32> to vector<16x32xf32>
    %251 = vector.extract_strided_slice %231 {offsets = [0, 32], sizes = [16, 32], strides = [1, 1]} : vector<16x128xf32> to vector<16x32xf32>
    %cst_108 = arith.constant dense<0.000000e+00> : vector<16x16xf32>
    %252 = tpu.matmul %249, %250, %cst_108 {dimension_numbers = #tpu.dot_dimension_numbers<[1], [1], [0], [0], [0, 0, 1, 0], [], []>} : vector<16x32xf32>, vector<16x32xf32>, vector<16x16xf32> -> vector<16x16xf32>
    %cst_109 = arith.constant 0.176776692 : f32
    %253 = vector.broadcast %cst_109 : f32 to vector<16x16xf32>
    %254 = arith.mulf %252, %253 : vector<16x16xf32>
    %cst_110 = arith.constant dense<0xFF800000> : vector<16xf32>
    %255 = vector.multi_reduction <maximumf>, %254, %cst_110 [1] : vector<16x16xf32> to vector<16xf32>
    %256 = vector.shape_cast %255 : vector<16xf32> to vector<16x1xf32>
    %257 = vector.broadcast %256 : vector<16x1xf32> to vector<16x16xf32>
    %258 = arith.subf %254, %257 : vector<16x16xf32>
    %259 = math.exp %258 : vector<16x16xf32>
    %cst_111 = arith.constant dense<0.000000e+00> : vector<16xf32>
    %260 = vector.multi_reduction <add>, %259, %cst_111 [1] : vector<16x16xf32> to vector<16xf32>
    %261 = vector.shape_cast %260 : vector<16xf32> to vector<16x1xf32>
    %262 = tpu.reciprocal %261 {approx = true} : vector<16x1xf32> -> vector<16x1xf32>
    %263 = vector.broadcast %262 : vector<16x1xf32> to vector<16x16xf32>
    %264 = arith.mulf %259, %263 : vector<16x16xf32>
    %cst_112 = arith.constant dense<0.000000e+00> : vector<16x32xf32>
    %265 = tpu.matmul %264, %251, %cst_112 {dimension_numbers = #tpu.dot_dimension_numbers<[1], [0], [0], [1], [0, 0, 1, 1], [], []>} : vector<16x16xf32>, vector<16x32xf32>, vector<16x32xf32> -> vector<16x32xf32>
    %266 = vector.extract_strided_slice %224 {offsets = [0, 64], sizes = [16, 32], strides = [1, 1]} : vector<16x128xf32> to vector<16x32xf32>
    %267 = vector.extract_strided_slice %230 {offsets = [0, 64], sizes = [16, 32], strides = [1, 1]} : vector<16x128xf32> to vector<16x32xf32>
    %268 = vector.extract_strided_slice %231 {offsets = [0, 64], sizes = [16, 32], strides = [1, 1]} : vector<16x128xf32> to vector<16x32xf32>
    %cst_113 = arith.constant dense<0.000000e+00> : vector<16x16xf32>
    %269 = tpu.matmul %266, %267, %cst_113 {dimension_numbers = #tpu.dot_dimension_numbers<[1], [1], [0], [0], [0, 0, 1, 0], [], []>} : vector<16x32xf32>, vector<16x32xf32>, vector<16x16xf32> -> vector<16x16xf32>
    %cst_114 = arith.constant 0.176776692 : f32
    %270 = vector.broadcast %cst_114 : f32 to vector<16x16xf32>
    %271 = arith.mulf %269, %270 : vector<16x16xf32>
    %cst_115 = arith.constant dense<0xFF800000> : vector<16xf32>
    %272 = vector.multi_reduction <maximumf>, %271, %cst_115 [1] : vector<16x16xf32> to vector<16xf32>
    %273 = vector.shape_cast %272 : vector<16xf32> to vector<16x1xf32>
    %274 = vector.broadcast %273 : vector<16x1xf32> to vector<16x16xf32>
    %275 = arith.subf %271, %274 : vector<16x16xf32>
    %276 = math.exp %275 : vector<16x16xf32>
    %cst_116 = arith.constant dense<0.000000e+00> : vector<16xf32>
    %277 = vector.multi_reduction <add>, %276, %cst_116 [1] : vector<16x16xf32> to vector<16xf32>
    %278 = vector.shape_cast %277 : vector<16xf32> to vector<16x1xf32>
    %279 = tpu.reciprocal %278 {approx = true} : vector<16x1xf32> -> vector<16x1xf32>
    %280 = vector.broadcast %279 : vector<16x1xf32> to vector<16x16xf32>
    %281 = arith.mulf %276, %280 : vector<16x16xf32>
    %cst_117 = arith.constant dense<0.000000e+00> : vector<16x32xf32>
    %282 = tpu.matmul %281, %268, %cst_117 {dimension_numbers = #tpu.dot_dimension_numbers<[1], [0], [0], [1], [0, 0, 1, 1], [], []>} : vector<16x16xf32>, vector<16x32xf32>, vector<16x32xf32> -> vector<16x32xf32>
    %283 = vector.extract_strided_slice %224 {offsets = [0, 96], sizes = [16, 32], strides = [1, 1]} : vector<16x128xf32> to vector<16x32xf32>
    %284 = vector.extract_strided_slice %230 {offsets = [0, 96], sizes = [16, 32], strides = [1, 1]} : vector<16x128xf32> to vector<16x32xf32>
    %285 = vector.extract_strided_slice %231 {offsets = [0, 96], sizes = [16, 32], strides = [1, 1]} : vector<16x128xf32> to vector<16x32xf32>
    %cst_118 = arith.constant dense<0.000000e+00> : vector<16x16xf32>
    %286 = tpu.matmul %283, %284, %cst_118 {dimension_numbers = #tpu.dot_dimension_numbers<[1], [1], [0], [0], [0, 0, 1, 0], [], []>} : vector<16x32xf32>, vector<16x32xf32>, vector<16x16xf32> -> vector<16x16xf32>
    %cst_119 = arith.constant 0.176776692 : f32
    %287 = vector.broadcast %cst_119 : f32 to vector<16x16xf32>
    %288 = arith.mulf %286, %287 : vector<16x16xf32>
    %cst_120 = arith.constant dense<0xFF800000> : vector<16xf32>
    %289 = vector.multi_reduction <maximumf>, %288, %cst_120 [1] : vector<16x16xf32> to vector<16xf32>
    %290 = vector.shape_cast %289 : vector<16xf32> to vector<16x1xf32>
    %291 = vector.broadcast %290 : vector<16x1xf32> to vector<16x16xf32>
    %292 = arith.subf %288, %291 : vector<16x16xf32>
    %293 = math.exp %292 : vector<16x16xf32>
    %cst_121 = arith.constant dense<0.000000e+00> : vector<16xf32>
    %294 = vector.multi_reduction <add>, %293, %cst_121 [1] : vector<16x16xf32> to vector<16xf32>
    %295 = vector.shape_cast %294 : vector<16xf32> to vector<16x1xf32>
    %296 = tpu.reciprocal %295 {approx = true} : vector<16x1xf32> -> vector<16x1xf32>
    %297 = vector.broadcast %296 : vector<16x1xf32> to vector<16x16xf32>
    %298 = arith.mulf %293, %297 : vector<16x16xf32>
    %cst_122 = arith.constant dense<0.000000e+00> : vector<16x32xf32>
    %299 = tpu.matmul %298, %285, %cst_122 {dimension_numbers = #tpu.dot_dimension_numbers<[1], [0], [0], [1], [0, 0, 1, 1], [], []>} : vector<16x16xf32>, vector<16x32xf32>, vector<16x32xf32> -> vector<16x32xf32>
    %300 = tpu.concatenate %248, %265, %282, %299 in 1 : vector<16x32xf32>, vector<16x32xf32>, vector<16x32xf32>, vector<16x32xf32> -> vector<16x128xf32>
    %c0_123 = arith.constant 0 : index
    %c0_124 = arith.constant 0 : index
    %301 = vector.load %arg26[%c0_123, %c0_124] : memref<128x128xf32, #tpu.memory_space<vmem>>, vector<128x128xf32>
    %cst_125 = arith.constant dense<0.000000e+00> : vector<16x128xf32>
    %302 = tpu.matmul %300, %301, %cst_125 {dimension_numbers = #tpu.dot_dimension_numbers<[1], [0], [0], [1], [0, 0, 1, 1], [], []>} : vector<16x128xf32>, vector<128x128xf32>, vector<16x128xf32> -> vector<16x128xf32>
    %303 = arith.addf %168, %302 : vector<16x128xf32>
    %c0_126 = arith.constant 0 : index
    %c0_127 = arith.constant 0 : index
    %304 = vector.load %arg27[%c0_126, %c0_127] : memref<1x128xf32, #tpu.memory_space<vmem>>, vector<1x128xf32>
    %305 = vector.broadcast %304 : vector<1x128xf32> to vector<16x128xf32>
    %306 = arith.addf %303, %305 : vector<16x128xf32>
    %c0_128 = arith.constant 0 : index
    %c0_129 = arith.constant 0 : index
    %307 = vector.load %arg28[%c0_128, %c0_129] : memref<2x128xf32, #tpu.memory_space<vmem>>, vector<2x128xf32>
    %308 = vector.extract_strided_slice %307 {offsets = [0, 0], sizes = [1, 128], strides = [1, 1]} : vector<2x128xf32> to vector<1x128xf32>
    %309 = vector.extract_strided_slice %307 {offsets = [1, 0], sizes = [1, 128], strides = [1, 1]} : vector<2x128xf32> to vector<1x128xf32>
    %cst_130 = arith.constant dense<0.000000e+00> : vector<16xf32>
    %310 = vector.multi_reduction <add>, %306, %cst_130 [1] : vector<16x128xf32> to vector<16xf32>
    %311 = vector.shape_cast %310 : vector<16xf32> to vector<16x1xf32>
    %cst_131 = arith.constant 1.280000e+02 : f32
    %312 = vector.broadcast %cst_131 : f32 to vector<16x1xf32>
    %313 = arith.divf %311, %312 : vector<16x1xf32>
    %314 = vector.broadcast %313 : vector<16x1xf32> to vector<16x128xf32>
    %315 = arith.subf %306, %314 : vector<16x128xf32>
    %316 = arith.mulf %315, %315 : vector<16x128xf32>
    %cst_132 = arith.constant dense<0.000000e+00> : vector<16xf32>
    %317 = vector.multi_reduction <add>, %316, %cst_132 [1] : vector<16x128xf32> to vector<16xf32>
    %318 = vector.shape_cast %317 : vector<16xf32> to vector<16x1xf32>
    %cst_133 = arith.constant 1.280000e+02 : f32
    %319 = vector.broadcast %cst_133 : f32 to vector<16x1xf32>
    %320 = arith.divf %318, %319 : vector<16x1xf32>
    %cst_134 = arith.constant 9.99999974E-6 : f32
    %321 = vector.broadcast %cst_134 : f32 to vector<16x1xf32>
    %322 = arith.addf %320, %321 : vector<16x1xf32>
    %323 = math.rsqrt %322 : vector<16x1xf32>
    %324 = vector.broadcast %323 : vector<16x1xf32> to vector<16x128xf32>
    %325 = arith.mulf %315, %324 : vector<16x128xf32>
    %326 = vector.broadcast %308 : vector<1x128xf32> to vector<16x128xf32>
    %327 = arith.mulf %325, %326 : vector<16x128xf32>
    %328 = vector.broadcast %309 : vector<1x128xf32> to vector<16x128xf32>
    %329 = arith.addf %327, %328 : vector<16x128xf32>
    %c0_135 = arith.constant 0 : index
    %c0_136 = arith.constant 0 : index
    %330 = vector.load %arg29[%c0_135, %c0_136] : memref<128x256xf32, #tpu.memory_space<vmem>>, vector<128x256xf32>
    %cst_137 = arith.constant dense<0.000000e+00> : vector<16x256xf32>
    %331 = tpu.matmul %329, %330, %cst_137 {dimension_numbers = #tpu.dot_dimension_numbers<[1], [0], [0], [1], [0, 0, 1, 1], [], []>} : vector<16x128xf32>, vector<128x256xf32>, vector<16x256xf32> -> vector<16x256xf32>
    %c0_138 = arith.constant 0 : index
    %c0_139 = arith.constant 0 : index
    %332 = vector.load %arg30[%c0_138, %c0_139] : memref<1x256xf32, #tpu.memory_space<vmem>>, vector<1x256xf32>
    %333 = vector.broadcast %332 : vector<1x256xf32> to vector<16x256xf32>
    %334 = arith.addf %331, %333 : vector<16x256xf32>
    %cst_140 = arith.constant 5.000000e-01 : f32
    %335 = vector.broadcast %cst_140 : f32 to vector<16x256xf32>
    %336 = arith.mulf %335, %334 : vector<16x256xf32>
    %cst_141 = arith.constant 4.471500e-02 : f32
    %337 = vector.broadcast %cst_141 : f32 to vector<16x256xf32>
    %338 = arith.mulf %337, %334 : vector<16x256xf32>
    %339 = arith.mulf %338, %334 : vector<16x256xf32>
    %340 = arith.mulf %339, %334 : vector<16x256xf32>
    %341 = arith.addf %334, %340 : vector<16x256xf32>
    %cst_142 = arith.constant 0.797884583 : f32
    %342 = vector.broadcast %cst_142 : f32 to vector<16x256xf32>
    %343 = arith.mulf %342, %341 : vector<16x256xf32>
    %344 = math.tanh %343 : vector<16x256xf32>
    %cst_143 = arith.constant 1.000000e+00 : f32
    %345 = vector.broadcast %cst_143 : f32 to vector<16x256xf32>
    %346 = arith.addf %345, %344 : vector<16x256xf32>
    %347 = arith.mulf %336, %346 : vector<16x256xf32>
    %c0_144 = arith.constant 0 : index
    %c0_145 = arith.constant 0 : index
    %348 = vector.load %arg31[%c0_144, %c0_145] : memref<256x128xf32, #tpu.memory_space<vmem>>, vector<256x128xf32>
    %cst_146 = arith.constant dense<0.000000e+00> : vector<16x128xf32>
    %349 = tpu.matmul %347, %348, %cst_146 {dimension_numbers = #tpu.dot_dimension_numbers<[1], [0], [0], [1], [0, 0, 1, 1], [], []>} : vector<16x256xf32>, vector<256x128xf32>, vector<16x128xf32> -> vector<16x128xf32>
    %c0_147 = arith.constant 0 : index
    %c0_148 = arith.constant 0 : index
    %350 = vector.load %arg32[%c0_147, %c0_148] : memref<1x128xf32, #tpu.memory_space<vmem>>, vector<1x128xf32>
    %351 = vector.broadcast %350 : vector<1x128xf32> to vector<16x128xf32>
    %352 = arith.addf %349, %351 : vector<16x128xf32>
    %353 = arith.addf %306, %352 : vector<16x128xf32>
    %c0_149 = arith.constant 0 : index
    %c0_150 = arith.constant 0 : index
    %c0_151 = arith.constant 0 : index
    %354 = vector.load %arg33[%c0_149, %c0_150, %c0_151] : memref<1x16x128xf32, #tpu.memory_space<vmem>>, vector<1x16x128xf32>
    %355 = vector.shape_cast %354 : vector<1x16x128xf32> to vector<16x128xf32>
    %356 = vector.shape_cast %353 : vector<16x128xf32> to vector<1x16x128xf32>
    tpu.vector_store %arg33[%c0_149, %c0_150, %c0_151], %356 {strides = array<i32>} : memref<1x16x128xf32, #tpu.memory_space<vmem>>, vector<1x16x128xf32>,
    return
  }
  func.func @transform_0(%arg0: i32) -> (i32, i32, i32) {
    %c0_i32 = arith.constant 0 : i32
    %c0_i32_0 = arith.constant 0 : i32
    %c0_i32_1 = arith.constant 0 : i32
    return %arg0, %c0_i32, %c0_i32_0 : i32, i32, i32
  }
  func.func @transform_1(%arg0: i32) -> (i32, i32, i32) {
    %c0_i32 = arith.constant 0 : i32
    %c0_i32_0 = arith.constant 0 : i32
    %c0_i32_1 = arith.constant 0 : i32
    return %arg0, %c0_i32, %c0_i32_0 : i32, i32, i32
  }
  func.func @transform_2(%arg0: i32) -> (i32, i32) {
    %c0_i32 = arith.constant 0 : i32
    %c0_i32_0 = arith.constant 0 : i32
    %c0_i32_1 = arith.constant 0 : i32
    return %c0_i32, %c0_i32_0 : i32, i32
  }
  func.func @transform_3(%arg0: i32) -> (i32, i32) {
    %c0_i32 = arith.constant 0 : i32
    %c0_i32_0 = arith.constant 0 : i32
    %c0_i32_1 = arith.constant 0 : i32
    return %c0_i32, %c0_i32_0 : i32, i32
  }
  func.func @transform_4(%arg0: i32) -> (i32, i32) {
    %c0_i32 = arith.constant 0 : i32
    %c0_i32_0 = arith.constant 0 : i32
    %c0_i32_1 = arith.constant 0 : i32
    return %c0_i32, %c0_i32_0 : i32, i32
  }
  func.func @transform_5(%arg0: i32) -> (i32, i32) {
    %c0_i32 = arith.constant 0 : i32
    %c0_i32_0 = arith.constant 0 : i32
    %c0_i32_1 = arith.constant 0 : i32
    return %c0_i32, %c0_i32_0 : i32, i32
  }
  func.func @transform_6(%arg0: i32) -> (i32, i32) {
    %c0_i32 = arith.constant 0 : i32
    %c0_i32_0 = arith.constant 0 : i32
    %c0_i32_1 = arith.constant 0 : i32
    return %c0_i32, %c0_i32_0 : i32, i32
  }
  func.func @transform_7(%arg0: i32) -> (i32, i32) {
    %c0_i32 = arith.constant 0 : i32
    %c0_i32_0 = arith.constant 0 : i32
    %c0_i32_1 = arith.constant 0 : i32
    return %c0_i32, %c0_i32_0 : i32, i32
  }
  func.func @transform_8(%arg0: i32) -> (i32, i32) {
    %c0_i32 = arith.constant 0 : i32
    %c0_i32_0 = arith.constant 0 : i32
    %c0_i32_1 = arith.constant 0 : i32
    return %c0_i32, %c0_i32_0 : i32, i32
  }
  func.func @transform_9(%arg0: i32) -> (i32, i32) {
    %c0_i32 = arith.constant 0 : i32
    %c0_i32_0 = arith.constant 0 : i32
    %c0_i32_1 = arith.constant 0 : i32
    return %c0_i32, %c0_i32_0 : i32, i32
  }
  func.func @transform_10(%arg0: i32) -> (i32, i32) {
    %c0_i32 = arith.constant 0 : i32
    %c0_i32_0 = arith.constant 0 : i32
    %c0_i32_1 = arith.constant 0 : i32
    return %c0_i32, %c0_i32_0 : i32, i32
  }
  func.func @transform_11(%arg0: i32) -> (i32, i32) {
    %c0_i32 = arith.constant 0 : i32
    %c0_i32_0 = arith.constant 0 : i32
    %c0_i32_1 = arith.constant 0 : i32
    return %c0_i32, %c0_i32_0 : i32, i32
  }
  func.func @transform_12(%arg0: i32) -> (i32, i32) {
    %c0_i32 = arith.constant 0 : i32
    %c0_i32_0 = arith.constant 0 : i32
    %c0_i32_1 = arith.constant 0 : i32
    return %c0_i32, %c0_i32_0 : i32, i32
  }
  func.func @transform_13(%arg0: i32) -> (i32, i32) {
    %c0_i32 = arith.constant 0 : i32
    %c0_i32_0 = arith.constant 0 : i32
    %c0_i32_1 = arith.constant 0 : i32
    return %c0_i32, %c0_i32_0 : i32, i32
  }
  func.func @transform_14(%arg0: i32) -> (i32, i32) {
    %c0_i32 = arith.constant 0 : i32
    %c0_i32_0 = arith.constant 0 : i32
    %c0_i32_1 = arith.constant 0 : i32
    return %c0_i32, %c0_i32_0 : i32, i32
  }
  func.func @transform_15(%arg0: i32) -> (i32, i32) {
    %c0_i32 = arith.constant 0 : i32
    %c0_i32_0 = arith.constant 0 : i32
    %c0_i32_1 = arith.constant 0 : i32
    return %c0_i32, %c0_i32_0 : i32, i32
  }
  func.func @transform_16(%arg0: i32) -> (i32, i32) {
    %c0_i32 = arith.constant 0 : i32
    %c0_i32_0 = arith.constant 0 : i32
    %c0_i32_1 = arith.constant 0 : i32
    return %c0_i32, %c0_i32_0 : i32, i32
  }
  func.func @transform_17(%arg0: i32) -> (i32, i32) {
    %c0_i32 = arith.constant 0 : i32
    %c0_i32_0 = arith.constant 0 : i32
    %c0_i32_1 = arith.constant 0 : i32
    return %c0_i32, %c0_i32_0 : i32, i32
  }
  func.func @transform_18(%arg0: i32) -> (i32, i32) {
    %c0_i32 = arith.constant 0 : i32
    %c0_i32_0 = arith.constant 0 : i32
    %c0_i32_1 = arith.constant 0 : i32
    return %c0_i32, %c0_i32_0 : i32, i32
  }
  func.func @transform_19(%arg0: i32) -> (i32, i32) {
    %c0_i32 = arith.constant 0 : i32
    %c0_i32_0 = arith.constant 0 : i32
    %c0_i32_1 = arith.constant 0 : i32
    return %c0_i32, %c0_i32_0 : i32, i32
  }
  func.func @transform_20(%arg0: i32) -> (i32, i32) {
    %c0_i32 = arith.constant 0 : i32
    %c0_i32_0 = arith.constant 0 : i32
    %c0_i32_1 = arith.constant 0 : i32
    return %c0_i32, %c0_i32_0 : i32, i32
  }
  func.func @transform_21(%arg0: i32) -> (i32, i32) {
    %c0_i32 = arith.constant 0 : i32
    %c0_i32_0 = arith.constant 0 : i32
    %c0_i32_1 = arith.constant 0 : i32
    return %c0_i32, %c0_i32_0 : i32, i32
  }
  func.func @transform_22(%arg0: i32) -> (i32, i32) {
    %c0_i32 = arith.constant 0 : i32
    %c0_i32_0 = arith.constant 0 : i32
    %c0_i32_1 = arith.constant 0 : i32
    return %c0_i32, %c0_i32_0 : i32, i32
  }
  func.func @transform_23(%arg0: i32) -> (i32, i32) {
    %c0_i32 = arith.constant 0 : i32
    %c0_i32_0 = arith.constant 0 : i32
    %c0_i32_1 = arith.constant 0 : i32
    return %c0_i32, %c0_i32_0 : i32, i32
  }
  func.func @transform_24(%arg0: i32) -> (i32, i32) {
    %c0_i32 = arith.constant 0 : i32
    %c0_i32_0 = arith.constant 0 : i32
    %c0_i32_1 = arith.constant 0 : i32
    return %c0_i32, %c0_i32_0 : i32, i32
  }
  func.func @transform_25(%arg0: i32) -> (i32, i32) {
    %c0_i32 = arith.constant 0 : i32
    %c0_i32_0 = arith.constant 0 : i32
    %c0_i32_1 = arith.constant 0 : i32
    return %c0_i32, %c0_i32_0 : i32, i32
  }
  func.func @transform_26(%arg0: i32) -> (i32, i32) {
    %c0_i32 = arith.constant 0 : i32
    %c0_i32_0 = arith.constant 0 : i32
    %c0_i32_1 = arith.constant 0 : i32
    return %c0_i32, %c0_i32_0 : i32, i32
  }
  func.func @transform_27(%arg0: i32) -> (i32, i32) {
    %c0_i32 = arith.constant 0 : i32
    %c0_i32_0 = arith.constant 0 : i32
    %c0_i32_1 = arith.constant 0 : i32
    return %c0_i32, %c0_i32_0 : i32, i32
  }
  func.func @transform_28(%arg0: i32) -> (i32, i32) {
    %c0_i32 = arith.constant 0 : i32
    %c0_i32_0 = arith.constant 0 : i32
    %c0_i32_1 = arith.constant 0 : i32
    return %c0_i32, %c0_i32_0 : i32, i32
  }
  func.func @transform_29(%arg0: i32) -> (i32, i32) {
    %c0_i32 = arith.constant 0 : i32
    %c0_i32_0 = arith.constant 0 : i32
    %c0_i32_1 = arith.constant 0 : i32
    return %c0_i32, %c0_i32_0 : i32, i32
  }
  func.func @transform_30(%arg0: i32) -> (i32, i32) {
    %c0_i32 = arith.constant 0 : i32
    %c0_i32_0 = arith.constant 0 : i32
    %c0_i32_1 = arith.constant 0 : i32
    return %c0_i32, %c0_i32_0 : i32, i32
  }
  func.func @transform_31(%arg0: i32) -> (i32, i32) {
    %c0_i32 = arith.constant 0 : i32
    %c0_i32_0 = arith.constant 0 : i32
    %c0_i32_1 = arith.constant 0 : i32
    return %c0_i32, %c0_i32_0 : i32, i32
  }
  func.func @transform_32(%arg0: i32) -> (i32, i32, i32) {
    %c0_i32 = arith.constant 0 : i32
    %c0_i32_0 = arith.constant 0 : i32
    %c0_i32_1 = arith.constant 0 : i32
    return %arg0, %c0_i32, %c0_i32_0 : i32, i32, i32
  }
}

</mosaic_0001>

<llo_original>
// kernel: model_v1_forward.1
$region0: #{model_v1_forward.1}
  #allocation0 [shape = 'u32[]', space=smem, size = 0x4, offset = 0x4, fixed_abs, tag = 'smem constant byte address 0x4 - core index']
  #allocation1 [shape = 'u32[72,128]{1,0:T(1,128)}', space=vmem, size = 0x9000, scoped, tag = 'internal scratch']
  %s0 = inlined_call_operand.smem [shape: u32[33], index: -1, kind: input, shape index: {}]
  %s1 = sld [smem:[%s0]]
  %s2 = scalar_lea.smem %s0, 1
  %s3 = sld [smem:[%s2]]
  %s4 = scalar_lea.smem %s0, 2
  %s5 = sld [smem:[%s4]]
  %s6 = scalar_lea.smem %s0, 3
  %s7 = sld [smem:[%s6]]
  %s8 = scalar_lea.smem %s0, 4
  %s9 = sld [smem:[%s8]]
  %s10 = scalar_lea.smem %s0, 5
  %s11 = sld [smem:[%s10]]
  %s12 = scalar_lea.smem %s0, 6
  %s13 = sld [smem:[%s12]]
  %s14 = scalar_lea.smem %s0, 7
  %s15 = sld [smem:[%s14]]
  %s16 = scalar_lea.smem %s0, 8
  %s17 = sld [smem:[%s16]]
  %s18 = scalar_lea.smem %s0, 9
  %s19 = sld [smem:[%s18]]
  %s20 = scalar_lea.smem %s0, 10
  %s21 = sld [smem:[%s20]]
  %s22 = scalar_lea.smem %s0, 11
  %s23 = sld [smem:[%s22]]
  %s24 = scalar_lea.smem %s0, 12
  %s25 = sld [smem:[%s24]]
  %s26 = scalar_lea.smem %s0, 13
  %s27 = sld [smem:[%s26]]
  %s28 = scalar_lea.smem %s0, 14
  %s29 = sld [smem:[%s28]]
  %s30 = scalar_lea.smem %s0, 15
  %s31 = sld [smem:[%s30]]
  %s32 = scalar_lea.smem %s0, 16
  %s33 = sld [smem:[%s32]]
  %s34 = scalar_lea.smem %s0, 17
  %s35 = sld [smem:[%s34]]
  %s36 = scalar_lea.smem %s0, 18
  %s37 = sld [smem:[%s36]]
  %s38 = scalar_lea.smem %s0, 19
  %s39 = sld [smem:[%s38]]
  %s40 = scalar_lea.smem %s0, 20
  %s41 = sld [smem:[%s40]]
  %s42 = scalar_lea.smem %s0, 21
  %s43 = sld [smem:[%s42]]
  %s44 = scalar_lea.smem %s0, 22
  %s45 = sld [smem:[%s44]]
  %s46 = scalar_lea.smem %s0, 23
  %s47 = sld [smem:[%s46]]
  %s48 = scalar_lea.smem %s0, 24
  %s49 = sld [smem:[%s48]]
  %s50 = scalar_lea.smem %s0, 25
  %s51 = sld [smem:[%s50]]
  %s52 = scalar_lea.smem %s0, 26
  %s53 = sld [smem:[%s52]]
  %s54 = scalar_lea.smem %s0, 27
  %s55 = sld [smem:[%s54]]
  %s56 = scalar_lea.smem %s0, 28
  %s57 = sld [smem:[%s56]]
  %s58 = scalar_lea.smem %s0, 29
  %s59 = sld [smem:[%s58]]
  %s60 = scalar_lea.smem %s0, 30
  %s61 = sld [smem:[%s60]]
  %s62 = scalar_lea.smem %s0, 31
  %s63 = sld [smem:[%s62]]
  %s64 = scalar_lea.smem %s0, 32
  %s65 = sld [smem:[%s64]]
  %s66 = sld [smem:[#allocation0]]
  $region161: #{model_v1_forward.1} parent=0
    _
  %s68 = ssub.s32 1, %s66
  %s69 = scalar_select 0, %s68, %s66
  $region1: #{model_v1_forward.1} parent=0
    #allocation2 [shape = 'u8[16384]{0}', space=vmem, size = 0x4000, scoped, tag = 'output window, operand 0']
    #allocation3 [shape = 's32[2]{0}', space=sflag, size = 0x8, scoped, tag = 'scoped memory for model_v1_forward.1']
    %70 = vsyncpa [#allocation3], 0
    %s71 = scalar_lea.sflag [#allocation3], 1
    %72 = vsyncpa %s71, 0
    loop: start=0, step=1, limit=4
    $region2: #{model_v1_forward.1} parent=1 // loop_pre_header
      _
    $region3: #{model_v1_forward.1} parent=1 // loop_header
      %s74 = sphi 0, %s78
      %p75 = scmp.ge.s32.totalorder %s74, 4
      %s84 = sphi 0, %s86
      %s87 = sphi 0, %s84
      %s88 = sphi 0, %s87
      %s104 = sphi 0, %s88
      %s110 = sphi 0, %s112
      %s113 = sphi 0, %s110
      %s114 = sphi 0, %s113
      %s130 = sphi 0, %s114
      %s134 = sphi 0, %s134
      %s136 = sphi 0, %s134
      %s137 = sphi 0, %s136
      %s151 = sphi 0, %s137
      %s155 = sphi 0, %s155
      %s157 = sphi 0, %s155
      %s158 = sphi 0, %s157
      %s172 = sphi 0, %s158
      %s176 = sphi 0, %s176
      %s178 = sphi 0, %s176
      %s179 = sphi 0, %s178
      %s193 = sphi 0, %s179
      %s197 = sphi 0, %s197
      %s199 = sphi 0, %s197
      %s200 = sphi 0, %s199
      %s214 = sphi 0, %s200
      %s218 = sphi 0, %s218
      %s220 = sphi 0, %s218
      %s221 = sphi 0, %s220
      %s235 = sphi 0, %s221
      %s239 = sphi 0, %s239
      %s241 = sphi 0, %s239
      %s242 = sphi 0, %s241
      %s256 = sphi 0, %s242
      %s260 = sphi 0, %s260
      %s262 = sphi 0, %s260
      %s263 = sphi 0, %s262
      %s277 = sphi 0, %s263
      %s281 = sphi 0, %s281
      %s283 = sphi 0, %s281
      %s284 = sphi 0, %s283
      %s298 = sphi 0, %s284
      %s302 = sphi 0, %s302
      %s304 = sphi 0, %s302
      %s305 = sphi 0, %s304
      %s319 = sphi 0, %s305
      %s323 = sphi 0, %s323
      %s325 = sphi 0, %s323
      %s326 = sphi 0, %s325
      %s340 = sphi 0, %s326
      %s344 = sphi 0, %s344
      %s346 = sphi 0, %s344
      %s347 = sphi 0, %s346
      %s361 = sphi 0, %s347
      %s365 = sphi 0, %s365
      %s367 = sphi 0, %s365
      %s368 = sphi 0, %s367
      %s382 = sphi 0, %s368
      %s386 = sphi 0, %s386
      %s388 = sphi 0, %s386
      %s389 = sphi 0, %s388
      %s403 = sphi 0, %s389
      %s407 = sphi 0, %s407
      %s409 = sphi 0, %s407
      %s410 = sphi 0, %s409
      %s424 = sphi 0, %s410
      %s428 = sphi 0, %s428
      %s430 = sphi 0, %s428
      %s431 = sphi 0, %s430
      %s445 = sphi 0, %s431
      %s449 = sphi 0, %s449
      %s451 = sphi 0, %s449
      %s452 = sphi 0, %s451
      %s466 = sphi 0, %s452
      %s470 = sphi 0, %s470
      %s472 = sphi 0, %s470
      %s473 = sphi 0, %s472
      %s487 = sphi 0, %s473
      %s491 = sphi 0, %s491
      %s493 = sphi 0, %s491
      %s494 = sphi 0, %s493
      %s508 = sphi 0, %s494
      %s512 = sphi 0, %s512
      %s514 = sphi 0, %s512
      %s515 = sphi 0, %s514
      %s529 = sphi 0, %s515
      %s533 = sphi 0, %s533
      %s535 = sphi 0, %s533
      %s536 = sphi 0, %s535
      %s550 = sphi 0, %s536
      %s554 = sphi 0, %s554
      %s556 = sphi 0, %s554
      %s557 = sphi 0, %s556
      %s571 = sphi 0, %s557
      %s575 = sphi 0, %s575
      %s577 = sphi 0, %s575
      %s578 = sphi 0, %s577
      %s592 = sphi 0, %s578
      %s596 = sphi 0, %s596
      %s598 = sphi 0, %s596
      %s599 = sphi 0, %s598
      %s613 = sphi 0, %s599
      %s617 = sphi 0, %s617
      %s619 = sphi 0, %s617
      %s620 = sphi 0, %s619
      %s634 = sphi 0, %s620
      %s638 = sphi 0, %s638
      %s640 = sphi 0, %s638
      %s641 = sphi 0, %s640
      %s655 = sphi 0, %s641
      %s659 = sphi 0, %s659
      %s661 = sphi 0, %s659
      %s662 = sphi 0, %s661
      %s676 = sphi 0, %s662
      %s680 = sphi 0, %s680
      %s682 = sphi 0, %s680
      %s683 = sphi 0, %s682
      %s697 = sphi 0, %s683
      %s701 = sphi 0, %s701
      %s703 = sphi 0, %s701
      %s704 = sphi 0, %s703
      %s718 = sphi 0, %s704
      %s722 = sphi 0, %s722
      %s724 = sphi 0, %s722
      %s725 = sphi 0, %s724
      %s739 = sphi 0, %s725
      %s743 = sphi 0, %s743
      %s745 = sphi 0, %s743
      %s746 = sphi 0, %s745
      %s760 = sphi 0, %s746
      %s766 = sphi 0, %s768
      %s769 = sphi 0, %s766
      %s770 = sphi 0, %s769
      %s786 = sphi 0, %s770
    $region4: #{model_v1_forward.1} parent=1 // loop_header_branch
      %77 = sbr.rel (%p75) target = $region8
    $region5: #{model_v1_forward.1} parent=1 // loop_body
      %s79 = ssub.s32 %s74, 1
      %s80 = ssub.s32 %s74, 2
      %s81 = sadd.s32 %s74, 1
      %s82 = ssub.s32 %s74, %s81
      %p83 = scmp.eq.s32.totalorder %s82, 0
      %s85 = sadd.s32 %s84, 1
      %s86 = scalar_select %p83, %s84, %s85
      %p89 = pneg %p83
      %p90 = scmp.eq.s32.totalorder %s74, 1
      %p91 = por %p89, %p90
      %p92 = scmp.ne.s32.totalorder %s84, %s87
      %p93 = scmp.eq.s32.totalorder %s74, 0
      %p94 = por %p92, %p93
      %p95 = scmp.ne.s32.totalorder %s84, %s87
      %p96 = scmp.eq.s32.totalorder %s79, 1
      %p97 = por %p95, %p96
      %p98 = scmp.ne.s32.totalorder %s87, %s88
      %p99 = scmp.eq.s32.totalorder %s79, 0
      %p100 = por %p98, %p99
      %p101 = scmp.ne.s32.totalorder %s87, %s88
      %p102 = scmp.eq.s32.totalorder %s80, 1
      %p103 = por %p101, %p102
      %p105 = scmp.ne.s32.totalorder %s88, %s104
      %p106 = scmp.eq.s32.totalorder %s80, 0
      %p107 = por %p105, %p106
      %s108 = ssub.s32 %s74, %s81
      %p109 = scmp.eq.s32.totalorder %s108, 0
      %s111 = sadd.s32 %s110, 1
      %s112 = scalar_select %p109, %s110, %s111
      %p115 = pneg %p109
      %p116 = scmp.eq.s32.totalorder %s74, 1
      %p117 = por %p115, %p116
      %p118 = scmp.ne.s32.totalorder %s110, %s113
      %p119 = scmp.eq.s32.totalorder %s74, 0
      %p120 = por %p118, %p119
      %p121 = scmp.ne.s32.totalorder %s110, %s113
      %p122 = scmp.eq.s32.totalorder %s79, 1
      %p123 = por %p121, %p122
      %p124 = scmp.ne.s32.totalorder %s113, %s114
      %p125 = scmp.eq.s32.totalorder %s79, 0
      %p126 = por %p124, %p125
      %p127 = scmp.ne.s32.totalorder %s113, %s114
      %p128 = scmp.eq.s32.totalorder %s80, 1
      %p129 = por %p127, %p128
      %p131 = scmp.ne.s32.totalorder %s114, %s130
      %p132 = scmp.eq.s32.totalorder %s80, 0
      %p133 = por %p131, %p132
      %s135 = sadd.s32 %s134, 1
      %p138 = scmp.eq.s32.totalorder %s74, 1
      %p139 = scmp.ne.s32.totalorder %s134, %s136
      %p140 = scmp.eq.s32.totalorder %s74, 0
      %p141 = por %p139, %p140
      %p142 = scmp.ne.s32.totalorder %s134, %s136
      %p143 = scmp.eq.s32.totalorder %s79, 1
      %p144 = por %p142, %p143
      %p145 = scmp.ne.s32.totalorder %s136, %s137
      %p146 = scmp.eq.s32.totalorder %s79, 0
      %p147 = por %p145, %p146
      %p148 = scmp.ne.s32.totalorder %s136, %s137
      %p149 = scmp.eq.s32.totalorder %s80, 1
      %p150 = por %p148, %p149
      %p152 = scmp.ne.s32.totalorder %s137, %s151
      %p153 = scmp.eq.s32.totalorder %s80, 0
      %p154 = por %p152, %p153
      %s156 = sadd.s32 %s155, 1
      %p159 = scmp.eq.s32.totalorder %s74, 1
      %p160 = scmp.ne.s32.totalorder %s155, %s157
      %p161 = scmp.eq.s32.totalorder %s74, 0
      %p162 = por %p160, %p161
      %p163 = scmp.ne.s32.totalorder %s155, %s157
      %p164 = scmp.eq.s32.totalorder %s79, 1
      %p165 = por %p163, %p164
      %p166 = scmp.ne.s32.totalorder %s157, %s158
      %p167 = scmp.eq.s32.totalorder %s79, 0
      %p168 = por %p166, %p167
      %p169 = scmp.ne.s32.totalorder %s157, %s158
      %p170 = scmp.eq.s32.totalorder %s80, 1
      %p171 = por %p169, %p170
      %p173 = scmp.ne.s32.totalorder %s158, %s172
      %p174 = scmp.eq.s32.totalorder %s80, 0
      %p175 = por %p173, %p174
      %s177 = sadd.s32 %s176, 1
      %p180 = scmp.eq.s32.totalorder %s74, 1
      %p181 = scmp.ne.s32.totalorder %s176, %s178
      %p182 = scmp.eq.s32.totalorder %s74, 0
      %p183 = por %p181, %p182
      %p184 = scmp.ne.s32.totalorder %s176, %s178
      %p185 = scmp.eq.s32.totalorder %s79, 1
      %p186 = por %p184, %p185
      %p187 = scmp.ne.s32.totalorder %s178, %s179
      %p188 = scmp.eq.s32.totalorder %s79, 0
      %p189 = por %p187, %p188
      %p190 = scmp.ne.s32.totalorder %s178, %s179
      %p191 = scmp.eq.s32.totalorder %s80, 1
      %p192 = por %p190, %p191
      %p194 = scmp.ne.s32.totalorder %s179, %s193
      %p195 = scmp.eq.s32.totalorder %s80, 0
      %p196 = por %p194, %p195
      %s198 = sadd.s32 %s197, 1
      %p201 = scmp.eq.s32.totalorder %s74, 1
      %p202 = scmp.ne.s32.totalorder %s197, %s199
      %p203 = scmp.eq.s32.totalorder %s74, 0
      %p204 = por %p202, %p203
      %p205 = scmp.ne.s32.totalorder %s197, %s199
      %p206 = scmp.eq.s32.totalorder %s79, 1
      %p207 = por %p205, %p206
      %p208 = scmp.ne.s32.totalorder %s199, %s200
      %p209 = scmp.eq.s32.totalorder %s79, 0
      %p210 = por %p208, %p209
      %p211 = scmp.ne.s32.totalorder %s199, %s200
      %p212 = scmp.eq.s32.totalorder %s80, 1
      %p213 = por %p211, %p212
      %p215 = scmp.ne.s32.totalorder %s200, %s214
      %p216 = scmp.eq.s32.totalorder %s80, 0
      %p217 = por %p215, %p216
      %s219 = sadd.s32 %s218, 1
      %p222 = scmp.eq.s32.totalorder %s74, 1
      %p223 = scmp.ne.s32.totalorder %s218, %s220
      %p224 = scmp.eq.s32.totalorder %s74, 0
      %p225 = por %p223, %p224
      %p226 = scmp.ne.s32.totalorder %s218, %s220
      %p227 = scmp.eq.s32.totalorder %s79, 1
      %p228 = por %p226, %p227
      %p229 = scmp.ne.s32.totalorder %s220, %s221
      %p230 = scmp.eq.s32.totalorder %s79, 0
      %p231 = por %p229, %p230
      %p232 = scmp.ne.s32.totalorder %s220, %s221
      %p233 = scmp.eq.s32.totalorder %s80, 1
      %p234 = por %p232, %p233
      %p236 = scmp.ne.s32.totalorder %s221, %s235
      %p237 = scmp.eq.s32.totalorder %s80, 0
      %p238 = por %p236, %p237
      %s240 = sadd.s32 %s239, 1
      %p243 = scmp.eq.s32.totalorder %s74, 1
      %p244 = scmp.ne.s32.totalorder %s239, %s241
      %p245 = scmp.eq.s32.totalorder %s74, 0
      %p246 = por %p244, %p245
      %p247 = scmp.ne.s32.totalorder %s239, %s241
      %p248 = scmp.eq.s32.totalorder %s79, 1
      %p249 = por %p247, %p248
      %p250 = scmp.ne.s32.totalorder %s241, %s242
      %p251 = scmp.eq.s32.totalorder %s79, 0
      %p252 = por %p250, %p251
      %p253 = scmp.ne.s32.totalorder %s241, %s242
      %p254 = scmp.eq.s32.totalorder %s80, 1
      %p255 = por %p253, %p254
      %p257 = scmp.ne.s32.totalorder %s242, %s256
      %p258 = scmp.eq.s32.totalorder %s80, 0
      %p259 = por %p257, %p258
      %s261 = sadd.s32 %s260, 1
      %p264 = scmp.eq.s32.totalorder %s74, 1
      %p265 = scmp.ne.s32.totalorder %s260, %s262
      %p266 = scmp.eq.s32.totalorder %s74, 0
      %p267 = por %p265, %p266
      %p268 = scmp.ne.s32.totalorder %s260, %s262
      %p269 = scmp.eq.s32.totalorder %s79, 1
      %p270 = por %p268, %p269
      %p271 = scmp.ne.s32.totalorder %s262, %s263
      %p272 = scmp.eq.s32.totalorder %s79, 0
      %p273 = por %p271, %p272
      %p274 = scmp.ne.s32.totalorder %s262, %s263
      %p275 = scmp.eq.s32.totalorder %s80, 1
      %p276 = por %p274, %p275
      %p278 = scmp.ne.s32.totalorder %s263, %s277
      %p279 = scmp.eq.s32.totalorder %s80, 0
      %p280 = por %p278, %p279
      %s282 = sadd.s32 %s281, 1
      %p285 = scmp.eq.s32.totalorder %s74, 1
      %p286 = scmp.ne.s32.totalorder %s281, %s283
      %p287 = scmp.eq.s32.totalorder %s74, 0
      %p288 = por %p286, %p287
      %p289 = scmp.ne.s32.totalorder %s281, %s283
      %p290 = scmp.eq.s32.totalorder %s79, 1
      %p291 = por %p289, %p290
      %p292 = scmp.ne.s32.totalorder %s283, %s284
      %p293 = scmp.eq.s32.totalorder %s79, 0
      %p294 = por %p292, %p293
      %p295 = scmp.ne.s32.totalorder %s283, %s284
      %p296 = scmp.eq.s32.totalorder %s80, 1
      %p297 = por %p295, %p296
      %p299 = scmp.ne.s32.totalorder %s284, %s298
      %p300 = scmp.eq.s32.totalorder %s80, 0
      %p301 = por %p299, %p300
      %s303 = sadd.s32 %s302, 1
      %p306 = scmp.eq.s32.totalorder %s74, 1
      %p307 = scmp.ne.s32.totalorder %s302, %s304
      %p308 = scmp.eq.s32.totalorder %s74, 0
      %p309 = por %p307, %p308
      %p310 = scmp.ne.s32.totalorder %s302, %s304
      %p311 = scmp.eq.s32.totalorder %s79, 1
      %p312 = por %p310, %p311
      %p313 = scmp.ne.s32.totalorder %s304, %s305
      %p314 = scmp.eq.s32.totalorder %s79, 0
      %p315 = por %p313, %p314
      %p316 = scmp.ne.s32.totalorder %s304, %s305
      %p317 = scmp.eq.s32.totalorder %s80, 1
      %p318 = por %p316, %p317
      %p320 = scmp.ne.s32.totalorder %s305, %s319
      %p321 = scmp.eq.s32.totalorder %s80, 0
      %p322 = por %p320, %p321
      %s324 = sadd.s32 %s323, 1
      %p327 = scmp.eq.s32.totalorder %s74, 1
      %p328 = scmp.ne.s32.totalorder %s323, %s325
      %p329 = scmp.eq.s32.totalorder %s74, 0
      %p330 = por %p328, %p329
      %p331 = scmp.ne.s32.totalorder %s323, %s325
      %p332 = scmp.eq.s32.totalorder %s79, 1
      %p333 = por %p331, %p332
      %p334 = scmp.ne.s32.totalorder %s325, %s326
      %p335 = scmp.eq.s32.totalorder %s79, 0
      %p336 = por %p334, %p335
      %p337 = scmp.ne.s32.totalorder %s325, %s326
      %p338 = scmp.eq.s32.totalorder %s80, 1
      %p339 = por %p337, %p338
      %p341 = scmp.ne.s32.totalorder %s326, %s340
      %p342 = scmp.eq.s32.totalorder %s80, 0
      %p343 = por %p341, %p342
      %s345 = sadd.s32 %s344, 1
      %p348 = scmp.eq.s32.totalorder %s74, 1
      %p349 = scmp.ne.s32.totalorder %s344, %s346
      %p350 = scmp.eq.s32.totalorder %s74, 0
      %p351 = por %p349, %p350
      %p352 = scmp.ne.s32.totalorder %s344, %s346
      %p353 = scmp.eq.s32.totalorder %s79, 1
      %p354 = por %p352, %p353
      %p355 = scmp.ne.s32.totalorder %s346, %s347
      %p356 = scmp.eq.s32.totalorder %s79, 0
      %p357 = por %p355, %p356
      %p358 = scmp.ne.s32.totalorder %s346, %s347
      %p359 = scmp.eq.s32.totalorder %s80, 1
      %p360 = por %p358, %p359
      %p362 = scmp.ne.s32.totalorder %s347, %s361
      %p363 = scmp.eq.s32.totalorder %s80, 0
      %p364 = por %p362, %p363
      %s366 = sadd.s32 %s365, 1
      %p369 = scmp.eq.s32.totalorder %s74, 1
      %p370 = scmp.ne.s32.totalorder %s365, %s367
      %p371 = scmp.eq.s32.totalorder %s74, 0
      %p372 = por %p370, %p371
      %p373 = scmp.ne.s32.totalorder %s365, %s367
      %p374 = scmp.eq.s32.totalorder %s79, 1
      %p375 = por %p373, %p374
      %p376 = scmp.ne.s32.totalorder %s367, %s368
      %p377 = scmp.eq.s32.totalorder %s79, 0
      %p378 = por %p376, %p377
      %p379 = scmp.ne.s32.totalorder %s367, %s368
      %p380 = scmp.eq.s32.totalorder %s80, 1
      %p381 = por %p379, %p380
      %p383 = scmp.ne.s32.totalorder %s368, %s382
      %p384 = scmp.eq.s32.totalorder %s80, 0
      %p385 = por %p383, %p384
      %s387 = sadd.s32 %s386, 1
      %p390 = scmp.eq.s32.totalorder %s74, 1
      %p391 = scmp.ne.s32.totalorder %s386, %s388
      %p392 = scmp.eq.s32.totalorder %s74, 0
      %p393 = por %p391, %p392
      %p394 = scmp.ne.s32.totalorder %s386, %s388
      %p395 = scmp.eq.s32.totalorder %s79, 1
      %p396 = por %p394, %p395
      %p397 = scmp.ne.s32.totalorder %s388, %s389
      %p398 = scmp.eq.s32.totalorder %s79, 0
      %p399 = por %p397, %p398
      %p400 = scmp.ne.s32.totalorder %s388, %s389
      %p401 = scmp.eq.s32.totalorder %s80, 1
      %p402 = por %p400, %p401
      %p404 = scmp.ne.s32.totalorder %s389, %s403
      %p405 = scmp.eq.s32.totalorder %s80, 0
      %p406 = por %p404, %p405
      %s408 = sadd.s32 %s407, 1
      %p411 = scmp.eq.s32.totalorder %s74, 1
      %p412 = scmp.ne.s32.totalorder %s407, %s409
      %p413 = scmp.eq.s32.totalorder %s74, 0
      %p414 = por %p412, %p413
      %p415 = scmp.ne.s32.totalorder %s407, %s409
      %p416 = scmp.eq.s32.totalorder %s79, 1
      %p417 = por %p415, %p416
      %p418 = scmp.ne.s32.totalorder %s409, %s410
      %p419 = scmp.eq.s32.totalorder %s79, 0
      %p420 = por %p418, %p419
      %p421 = scmp.ne.s32.totalorder %s409, %s410
      %p422 = scmp.eq.s32.totalorder %s80, 1
      %p423 = por %p421, %p422
      %p425 = scmp.ne.s32.totalorder %s410, %s424
      %p426 = scmp.eq.s32.totalorder %s80, 0
      %p427 = por %p425, %p426
      %s429 = sadd.s32 %s428, 1
      %p432 = scmp.eq.s32.totalorder %s74, 1
      %p433 = scmp.ne.s32.totalorder %s428, %s430
      %p434 = scmp.eq.s32.totalorder %s74, 0
      %p435 = por %p433, %p434
      %p436 = scmp.ne.s32.totalorder %s428, %s430
      %p437 = scmp.eq.s32.totalorder %s79, 1
      %p438 = por %p436, %p437
      %p439 = scmp.ne.s32.totalorder %s430, %s431
      %p440 = scmp.eq.s32.totalorder %s79, 0
      %p441 = por %p439, %p440
      %p442 = scmp.ne.s32.totalorder %s430, %s431
      %p443 = scmp.eq.s32.totalorder %s80, 1
      %p444 = por %p442, %p443
      %p446 = scmp.ne.s32.totalorder %s431, %s445
      %p447 = scmp.eq.s32.totalorder %s80, 0
      %p448 = por %p446, %p447
      %s450 = sadd.s32 %s449, 1
      %p453 = scmp.eq.s32.totalorder %s74, 1
      %p454 = scmp.ne.s32.totalorder %s449, %s451
      %p455 = scmp.eq.s32.totalorder %s74, 0
      %p456 = por %p454, %p455
      %p457 = scmp.ne.s32.totalorder %s449, %s451
      %p458 = scmp.eq.s32.totalorder %s79, 1
      %p459 = por %p457, %p458
      %p460 = scmp.ne.s32.totalorder %s451, %s452
      %p461 = scmp.eq.s32.totalorder %s79, 0
      %p462 = por %p460, %p461
      %p463 = scmp.ne.s32.totalorder %s451, %s452
      %p464 = scmp.eq.s32.totalorder %s80, 1
      %p465 = por %p463, %p464
      %p467 = scmp.ne.s32.totalorder %s452, %s466
      %p468 = scmp.eq.s32.totalorder %s80, 0
      %p469 = por %p467, %p468
      %s471 = sadd.s32 %s470, 1
      %p474 = scmp.eq.s32.totalorder %s74, 1
      %p475 = scmp.ne.s32.totalorder %s470, %s472
      %p476 = scmp.eq.s32.totalorder %s74, 0
      %p477 = por %p475, %p476
      %p478 = scmp.ne.s32.totalorder %s470, %s472
      %p479 = scmp.eq.s32.totalorder %s79, 1
      %p480 = por %p478, %p479
      %p481 = scmp.ne.s32.totalorder %s472, %s473
      %p482 = scmp.eq.s32.totalorder %s79, 0
      %p483 = por %p481, %p482
      %p484 = scmp.ne.s32.totalorder %s472, %s473
      %p485 = scmp.eq.s32.totalorder %s80, 1
      %p486 = por %p484, %p485
      %p488 = scmp.ne.s32.totalorder %s473, %s487
      %p489 = scmp.eq.s32.totalorder %s80, 0
      %p490 = por %p488, %p489
      %s492 = sadd.s32 %s491, 1
      %p495 = scmp.eq.s32.totalorder %s74, 1
      %p496 = scmp.ne.s32.totalorder %s491, %s493
      %p497 = scmp.eq.s32.totalorder %s74, 0
      %p498 = por %p496, %p497
      %p499 = scmp.ne.s32.totalorder %s491, %s493
      %p500 = scmp.eq.s32.totalorder %s79, 1
      %p501 = por %p499, %p500
      %p502 = scmp.ne.s32.totalorder %s493, %s494
      %p503 = scmp.eq.s32.totalorder %s79, 0
      %p504 = por %p502, %p503
      %p505 = scmp.ne.s32.totalorder %s493, %s494
      %p506 = scmp.eq.s32.totalorder %s80, 1
      %p507 = por %p505, %p506
      %p509 = scmp.ne.s32.totalorder %s494, %s508
      %p510 = scmp.eq.s32.totalorder %s80, 0
      %p511 = por %p509, %p510
      %s513 = sadd.s32 %s512, 1
      %p516 = scmp.eq.s32.totalorder %s74, 1
      %p517 = scmp.ne.s32.totalorder %s512, %s514
      %p518 = scmp.eq.s32.totalorder %s74, 0
      %p519 = por %p517, %p518
      %p520 = scmp.ne.s32.totalorder %s512, %s514
      %p521 = scmp.eq.s32.totalorder %s79, 1
      %p522 = por %p520, %p521
      %p523 = scmp.ne.s32.totalorder %s514, %s515
      %p524 = scmp.eq.s32.totalorder %s79, 0
      %p525 = por %p523, %p524
      %p526 = scmp.ne.s32.totalorder %s514, %s515
      %p527 = scmp.eq.s32.totalorder %s80, 1
      %p528 = por %p526, %p527
      %p530 = scmp.ne.s32.totalorder %s515, %s529
      %p531 = scmp.eq.s32.totalorder %s80, 0
      %p532 = por %p530, %p531
      %s534 = sadd.s32 %s533, 1
      %p537 = scmp.eq.s32.totalorder %s74, 1
      %p538 = scmp.ne.s32.totalorder %s533, %s535
      %p539 = scmp.eq.s32.totalorder %s74, 0
      %p540 = por %p538, %p539
      %p541 = scmp.ne.s32.totalorder %s533, %s535
      %p542 = scmp.eq.s32.totalorder %s79, 1
      %p543 = por %p541, %p542
      %p544 = scmp.ne.s32.totalorder %s535, %s536
      %p545 = scmp.eq.s32.totalorder %s79, 0
      %p546 = por %p544, %p545
      %p547 = scmp.ne.s32.totalorder %s535, %s536
      %p548 = scmp.eq.s32.totalorder %s80, 1
      %p549 = por %p547, %p548
      %p551 = scmp.ne.s32.totalorder %s536, %s550
      %p552 = scmp.eq.s32.totalorder %s80, 0
      %p553 = por %p551, %p552
      %s555 = sadd.s32 %s554, 1
      %p558 = scmp.eq.s32.totalorder %s74, 1
      %p559 = scmp.ne.s32.totalorder %s554, %s556
      %p560 = scmp.eq.s32.totalorder %s74, 0
      %p561 = por %p559, %p560
      %p562 = scmp.ne.s32.totalorder %s554, %s556
      %p563 = scmp.eq.s32.totalorder %s79, 1
      %p564 = por %p562, %p563
      %p565 = scmp.ne.s32.totalorder %s556, %s557
      %p566 = scmp.eq.s32.totalorder %s79, 0
      %p567 = por %p565, %p566
      %p568 = scmp.ne.s32.totalorder %s556, %s557
      %p569 = scmp.eq.s32.totalorder %s80, 1
      %p570 = por %p568, %p569
      %p572 = scmp.ne.s32.totalorder %s557, %s571
      %p573 = scmp.eq.s32.totalorder %s80, 0
      %p574 = por %p572, %p573
      %s576 = sadd.s32 %s575, 1
      %p579 = scmp.eq.s32.totalorder %s74, 1
      %p580 = scmp.ne.s32.totalorder %s575, %s577
      %p581 = scmp.eq.s32.totalorder %s74, 0
      %p582 = por %p580, %p581
      %p583 = scmp.ne.s32.totalorder %s575, %s577
      %p584 = scmp.eq.s32.totalorder %s79, 1
      %p585 = por %p583, %p584
      %p586 = scmp.ne.s32.totalorder %s577, %s578
      %p587 = scmp.eq.s32.totalorder %s79, 0
      %p588 = por %p586, %p587
      %p589 = scmp.ne.s32.totalorder %s577, %s578
      %p590 = scmp.eq.s32.totalorder %s80, 1
      %p591 = por %p589, %p590
      %p593 = scmp.ne.s32.totalorder %s578, %s592
      %p594 = scmp.eq.s32.totalorder %s80, 0
      %p595 = por %p593, %p594
      %s597 = sadd.s32 %s596, 1
      %p600 = scmp.eq.s32.totalorder %s74, 1
      %p601 = scmp.ne.s32.totalorder %s596, %s598
      %p602 = scmp.eq.s32.totalorder %s74, 0
      %p603 = por %p601, %p602
      %p604 = scmp.ne.s32.totalorder %s596, %s598
      %p605 = scmp.eq.s32.totalorder %s79, 1
      %p606 = por %p604, %p605
      %p607 = scmp.ne.s32.totalorder %s598, %s599
      %p608 = scmp.eq.s32.totalorder %s79, 0
      %p609 = por %p607, %p608
      %p610 = scmp.ne.s32.totalorder %s598, %s599
      %p611 = scmp.eq.s32.totalorder %s80, 1
      %p612 = por %p610, %p611
      %p614 = scmp.ne.s32.totalorder %s599, %s613
      %p615 = scmp.eq.s32.totalorder %s80, 0
      %p616 = por %p614, %p615
      %s618 = sadd.s32 %s617, 1
      %p621 = scmp.eq.s32.totalorder %s74, 1
      %p622 = scmp.ne.s32.totalorder %s617, %s619
      %p623 = scmp.eq.s32.totalorder %s74, 0
      %p624 = por %p622, %p623
      %p625 = scmp.ne.s32.totalorder %s617, %s619
      %p626 = scmp.eq.s32.totalorder %s79, 1
      %p627 = por %p625, %p626
      %p628 = scmp.ne.s32.totalorder %s619, %s620
      %p629 = scmp.eq.s32.totalorder %s79, 0
      %p630 = por %p628, %p629
      %p631 = scmp.ne.s32.totalorder %s619, %s620
      %p632 = scmp.eq.s32.totalorder %s80, 1
      %p633 = por %p631, %p632
      %p635 = scmp.ne.s32.totalorder %s620, %s634
      %p636 = scmp.eq.s32.totalorder %s80, 0
      %p637 = por %p635, %p636
      %s639 = sadd.s32 %s638, 1
      %p642 = scmp.eq.s32.totalorder %s74, 1
      %p643 = scmp.ne.s32.totalorder %s638, %s640
      %p644 = scmp.eq.s32.totalorder %s74, 0
      %p645 = por %p643, %p644
      %p646 = scmp.ne.s32.totalorder %s638, %s640
      %p647 = scmp.eq.s32.totalorder %s79, 1
      %p648 = por %p646, %p647
      %p649 = scmp.ne.s32.totalorder %s640, %s641
      %p650 = scmp.eq.s32.totalorder %s79, 0
      %p651 = por %p649, %p650
      %p652 = scmp.ne.s32.totalorder %s640, %s641
      %p653 = scmp.eq.s32.totalorder %s80, 1
      %p654 = por %p652, %p653
      %p656 = scmp.ne.s32.totalorder %s641, %s655
      %p657 = scmp.eq.s32.totalorder %s80, 0
      %p658 = por %p656, %p657
      %s660 = sadd.s32 %s659, 1
      %p663 = scmp.eq.s32.totalorder %s74, 1
      %p664 = scmp.ne.s32.totalorder %s659, %s661
      %p665 = scmp.eq.s32.totalorder %s74, 0
      %p666 = por %p664, %p665
      %p667 = scmp.ne.s32.totalorder %s659, %s661
      %p668 = scmp.eq.s32.totalorder %s79, 1
      %p669 = por %p667, %p668
      %p670 = scmp.ne.s32.totalorder %s661, %s662
      %p671 = scmp.eq.s32.totalorder %s79, 0
      %p672 = por %p670, %p671
      %p673 = scmp.ne.s32.totalorder %s661, %s662
      %p674 = scmp.eq.s32.totalorder %s80, 1
      %p675 = por %p673, %p674
      %p677 = scmp.ne.s32.totalorder %s662, %s676
      %p678 = scmp.eq.s32.totalorder %s80, 0
      %p679 = por %p677, %p678
      %s681 = sadd.s32 %s680, 1
      %p684 = scmp.eq.s32.totalorder %s74, 1
      %p685 = scmp.ne.s32.totalorder %s680, %s682
      %p686 = scmp.eq.s32.totalorder %s74, 0
      %p687 = por %p685, %p686
      %p688 = scmp.ne.s32.totalorder %s680, %s682
      %p689 = scmp.eq.s32.totalorder %s79, 1
      %p690 = por %p688, %p689
      %p691 = scmp.ne.s32.totalorder %s682, %s683
      %p692 = scmp.eq.s32.totalorder %s79, 0
      %p693 = por %p691, %p692
      %p694 = scmp.ne.s32.totalorder %s682, %s683
      %p695 = scmp.eq.s32.totalorder %s80, 1
      %p696 = por %p694, %p695
      %p698 = scmp.ne.s32.totalorder %s683, %s697
      %p699 = scmp.eq.s32.totalorder %s80, 0
      %p700 = por %p698, %p699
      %s702 = sadd.s32 %s701, 1
      %p705 = scmp.eq.s32.totalorder %s74, 1
      %p706 = scmp.ne.s32.totalorder %s701, %s703
      %p707 = scmp.eq.s32.totalorder %s74, 0
      %p708 = por %p706, %p707
      %p709 = scmp.ne.s32.totalorder %s701, %s703
      %p710 = scmp.eq.s32.totalorder %s79, 1
      %p711 = por %p709, %p710
      %p712 = scmp.ne.s32.totalorder %s703, %s704
      %p713 = scmp.eq.s32.totalorder %s79, 0
      %p714 = por %p712, %p713
      %p715 = scmp.ne.s32.totalorder %s703, %s704
      %p716 = scmp.eq.s32.totalorder %s80, 1
      %p717 = por %p715, %p716
      %p719 = scmp.ne.s32.totalorder %s704, %s718
      %p720 = scmp.eq.s32.totalorder %s80, 0
      %p721 = por %p719, %p720
      %s723 = sadd.s32 %s722, 1
      %p726 = scmp.eq.s32.totalorder %s74, 1
      %p727 = scmp.ne.s32.totalorder %s722, %s724
      %p728 = scmp.eq.s32.totalorder %s74, 0
      %p729 = por %p727, %p728
      %p730 = scmp.ne.s32.totalorder %s722, %s724
      %p731 = scmp.eq.s32.totalorder %s79, 1
      %p732 = por %p730, %p731
      %p733 = scmp.ne.s32.totalorder %s724, %s725
      %p734 = scmp.eq.s32.totalorder %s79, 0
      %p735 = por %p733, %p734
      %p736 = scmp.ne.s32.totalorder %s724, %s725
      %p737 = scmp.eq.s32.totalorder %s80, 1
      %p738 = por %p736, %p737
      %p740 = scmp.ne.s32.totalorder %s725, %s739
      %p741 = scmp.eq.s32.totalorder %s80, 0
      %p742 = por %p740, %p741
      %s744 = sadd.s32 %s743, 1
      %p747 = scmp.eq.s32.totalorder %s74, 1
      %p748 = scmp.ne.s32.totalorder %s743, %s745
      %p749 = scmp.eq.s32.totalorder %s74, 0
      %p750 = por %p748, %p749
      %p751 = scmp.ne.s32.totalorder %s743, %s745
      %p752 = scmp.eq.s32.totalorder %s79, 1
      %p753 = por %p751, %p752
      %p754 = scmp.ne.s32.totalorder %s745, %s746
      %p755 = scmp.eq.s32.totalorder %s79, 0
      %p756 = por %p754, %p755
      %p757 = scmp.ne.s32.totalorder %s745, %s746
      %p758 = scmp.eq.s32.totalorder %s80, 1
      %p759 = por %p757, %p758
      %p761 = scmp.ne.s32.totalorder %s746, %s760
      %p762 = scmp.eq.s32.totalorder %s80, 0
      %p763 = por %p761, %p762
      %s764 = ssub.s32 %s74, %s81
      %p765 = scmp.eq.s32.totalorder %s764, 0
      %s767 = sadd.s32 %s766, 1
      %s768 = scalar_select %p765, %s766, %s767
      %p771 = pneg %p765
      %p772 = scmp.eq.s32.totalorder %s74, 1
      %p773 = por %p771, %p772
      %p774 = scmp.ne.s32.totalorder %s766, %s769
      %p775 = scmp.eq.s32.totalorder %s74, 0
      %p776 = por %p774, %p775
      %p777 = scmp.ne.s32.totalorder %s766, %s769
      %p778 = scmp.eq.s32.totalorder %s79, 1
      %p779 = por %p777, %p778
      %p780 = scmp.ne.s32.totalorder %s769, %s770
      %p781 = scmp.eq.s32.totalorder %s79, 0
      %p782 = por %p780, %p781
      %p783 = scmp.ne.s32.totalorder %s769, %s770
      %p784 = scmp.eq.s32.totalorder %s80, 1
      %p785 = por %p783, %p784
      %p787 = scmp.ne.s32.totalorder %s770, %s786
      %p788 = scmp.eq.s32.totalorder %s80, 0
      %p789 = por %p787, %p788
      %p790 = scmp.le.s32.totalorder 1, %s74
      %p791 = scmp.lt.s32.totalorder %s74, 3
      %p792 = pnand %p790, %p791
      %p793 = pneg %p792
      // Predicated region
      $region9: #{model_v1_forward.1} parent=5 // pred_check
        _
      $region10: #{model_v1_forward.1} parent=5 // pred_check_branch
        %795 = sbr.rel (%p792) target = $region12
      $region11: #{model_v1_forward.1} parent=5 // pred_region
        %s796 = ssub.s32 %s74, 1
        // Predicated region
        $region13: #{model_v1_forward.1} parent=11 // pred_check
          %p797 = pneg %p147
        $region14: #{model_v1_forward.1} parent=11 // pred_check_branch
          %799 = sbr.rel (%p797) target = $region16
        $region15: #{model_v1_forward.1} parent=11 // pred_region
          _
        $region16: #{model_v1_forward.1} parent=11 // pred_fallthru
          _
        // Predicated region
        $region17: #{model_v1_forward.1} parent=11 // pred_check
          %p800 = pneg %p168
        $region18: #{model_v1_forward.1} parent=11 // pred_check_branch
          %802 = sbr.rel (%p800) target = $region20
        $region19: #{model_v1_forward.1} parent=11 // pred_region
          _
        $region20: #{model_v1_forward.1} parent=11 // pred_fallthru
          _
        // Predicated region
        $region21: #{model_v1_forward.1} parent=11 // pred_check
          %p803 = pneg %p189
        $region22: #{model_v1_forward.1} parent=11 // pred_check_branch
          %805 = sbr.rel (%p803) target = $region24
        $region23: #{model_v1_forward.1} parent=11 // pred_region
          _
        $region24: #{model_v1_forward.1} parent=11 // pred_fallthru
          _
        // Predicated region
        $region25: #{model_v1_forward.1} parent=11 // pred_check
          %p806 = pneg %p210
        $region26: #{model_v1_forward.1} parent=11 // pred_check_branch
          %808 = sbr.rel (%p806) target = $region28
        $region27: #{model_v1_forward.1} parent=11 // pred_region
          _
        $region28: #{model_v1_forward.1} parent=11 // pred_fallthru
          _
        // Predicated region
        $region29: #{model_v1_forward.1} parent=11 // pred_check
          %p809 = pneg %p231
        $region30: #{model_v1_forward.1} parent=11 // pred_check_branch
          %811 = sbr.rel (%p809) target = $region32
        $region31: #{model_v1_forward.1} parent=11 // pred_region
          _
        $region32: #{model_v1_forward.1} parent=11 // pred_fallthru
          _
        // Predicated region
        $region33: #{model_v1_forward.1} parent=11 // pred_check
          %p812 = pneg %p252
        $region34: #{model_v1_forward.1} parent=11 // pred_check_branch
          %814 = sbr.rel (%p812) target = $region36
        $region35: #{model_v1_forward.1} parent=11 // pred_region
          _
        $region36: #{model_v1_forward.1} parent=11 // pred_fallthru
          _
        // Predicated region
        $region37: #{model_v1_forward.1} parent=11 // pred_check
          %p815 = pneg %p273
        $region38: #{model_v1_forward.1} parent=11 // pred_check_branch
          %817 = sbr.rel (%p815) target = $region40
        $region39: #{model_v1_forward.1} parent=11 // pred_region
          _
        $region40: #{model_v1_forward.1} parent=11 // pred_fallthru
          _
        // Predicated region
        $region41: #{model_v1_forward.1} parent=11 // pred_check
          %p818 = pneg %p294
        $region42: #{model_v1_forward.1} parent=11 // pred_check_branch
          %820 = sbr.rel (%p818) target = $region44
        $region43: #{model_v1_forward.1} parent=11 // pred_region
          _
        $region44: #{model_v1_forward.1} parent=11 // pred_fallthru
          _
        // Predicated region
        $region45: #{model_v1_forward.1} parent=11 // pred_check
          %p821 = pneg %p315
        $region46: #{model_v1_forward.1} parent=11 // pred_check_branch
          %823 = sbr.rel (%p821) target = $region48
        $region47: #{model_v1_forward.1} parent=11 // pred_region
          _
        $region48: #{model_v1_forward.1} parent=11 // pred_fallthru
          _
        // Predicated region
        $region49: #{model_v1_forward.1} parent=11 // pred_check
          %p824 = pneg %p336
        $region50: #{model_v1_forward.1} parent=11 // pred_check_branch
          %826 = sbr.rel (%p824) target = $region52
        $region51: #{model_v1_forward.1} parent=11 // pred_region
          _
        $region52: #{model_v1_forward.1} parent=11 // pred_fallthru
          _
        // Predicated region
        $region53: #{model_v1_forward.1} parent=11 // pred_check
          %p827 = pneg %p357
        $region54: #{model_v1_forward.1} parent=11 // pred_check_branch
          %829 = sbr.rel (%p827) target = $region56
        $region55: #{model_v1_forward.1} parent=11 // pred_region
          _
        $region56: #{model_v1_forward.1} parent=11 // pred_fallthru
          _
        // Predicated region
        $region57: #{model_v1_forward.1} parent=11 // pred_check
          %p830 = pneg %p378
        $region58: #{model_v1_forward.1} parent=11 // pred_check_branch
          %832 = sbr.rel (%p830) target = $region60
        $region59: #{model_v1_forward.1} parent=11 // pred_region
          _
        $region60: #{model_v1_forward.1} parent=11 // pred_fallthru
          _
        // Predicated region
        $region61: #{model_v1_forward.1} parent=11 // pred_check
          %p833 = pneg %p399
        $region62: #{model_v1_forward.1} parent=11 // pred_check_branch
          %835 = sbr.rel (%p833) target = $region64
        $region63: #{model_v1_forward.1} parent=11 // pred_region
          _
        $region64: #{model_v1_forward.1} parent=11 // pred_fallthru
          _
        // Predicated region
        $region65: #{model_v1_forward.1} parent=11 // pred_check
          %p836 = pneg %p420
        $region66: #{model_v1_forward.1} parent=11 // pred_check_branch
          %838 = sbr.rel (%p836) target = $region68
        $region67: #{model_v1_forward.1} parent=11 // pred_region
          _
        $region68: #{model_v1_forward.1} parent=11 // pred_fallthru
          _
        // Predicated region
        $region69: #{model_v1_forward.1} parent=11 // pred_check
          %p839 = pneg %p441
        $region70: #{model_v1_forward.1} parent=11 // pred_check_branch
          %841 = sbr.rel (%p839) target = $region72
        $region71: #{model_v1_forward.1} parent=11 // pred_region
          _
        $region72: #{model_v1_forward.1} parent=11 // pred_fallthru
          _
        // Predicated region
        $region73: #{model_v1_forward.1} parent=11 // pred_check
          %p842 = pneg %p462
        $region74: #{model_v1_forward.1} parent=11 // pred_check_branch
          %844 = sbr.rel (%p842) target = $region76
        $region75: #{model_v1_forward.1} parent=11 // pred_region
          _
        $region76: #{model_v1_forward.1} parent=11 // pred_fallthru
          _
        // Predicated region
        $region77: #{model_v1_forward.1} parent=11 // pred_check
          %p845 = pneg %p483
        $region78: #{model_v1_forward.1} parent=11 // pred_check_branch
          %847 = sbr.rel (%p845) target = $region80
        $region79: #{model_v1_forward.1} parent=11 // pred_region
          _
        $region80: #{model_v1_forward.1} parent=11 // pred_fallthru
          _
        // Predicated region
        $region81: #{model_v1_forward.1} parent=11 // pred_check
          %p848 = pneg %p504
        $region82: #{model_v1_forward.1} parent=11 // pred_check_branch
          %850 = sbr.rel (%p848) target = $region84
        $region83: #{model_v1_forward.1} parent=11 // pred_region
          _
        $region84: #{model_v1_forward.1} parent=11 // pred_fallthru
          _
        // Predicated region
        $region85: #{model_v1_forward.1} parent=11 // pred_check
          %p851 = pneg %p525
        $region86: #{model_v1_forward.1} parent=11 // pred_check_branch
          %853 = sbr.rel (%p851) target = $region88
        $region87: #{model_v1_forward.1} parent=11 // pred_region
          _
        $region88: #{model_v1_forward.1} parent=11 // pred_fallthru
          _
        // Predicated region
        $region89: #{model_v1_forward.1} parent=11 // pred_check
          %p854 = pneg %p546
        $region90: #{model_v1_forward.1} parent=11 // pred_check_branch
          %856 = sbr.rel (%p854) target = $region92
        $region91: #{model_v1_forward.1} parent=11 // pred_region
          _
        $region92: #{model_v1_forward.1} parent=11 // pred_fallthru
          _
        // Predicated region
        $region93: #{model_v1_forward.1} parent=11 // pred_check
          %p857 = pneg %p567
        $region94: #{model_v1_forward.1} parent=11 // pred_check_branch
          %859 = sbr.rel (%p857) target = $region96
        $region95: #{model_v1_forward.1} parent=11 // pred_region
          _
        $region96: #{model_v1_forward.1} parent=11 // pred_fallthru
          _
        // Predicated region
        $region97: #{model_v1_forward.1} parent=11 // pred_check
          %p860 = pneg %p588
        $region98: #{model_v1_forward.1} parent=11 // pred_check_branch
          %862 = sbr.rel (%p860) target = $region100
        $region99: #{model_v1_forward.1} parent=11 // pred_region
          _
        $region100: #{model_v1_forward.1} parent=11 // pred_fallthru
          _
        // Predicated region
        $region101: #{model_v1_forward.1} parent=11 // pred_check
          %p863 = pneg %p609
        $region102: #{model_v1_forward.1} parent=11 // pred_check_branch
          %865 = sbr.rel (%p863) target = $region104
        $region103: #{model_v1_forward.1} parent=11 // pred_region
          _
        $region104: #{model_v1_forward.1} parent=11 // pred_fallthru
          _
        // Predicated region
        $region105: #{model_v1_forward.1} parent=11 // pred_check
          %p866 = pneg %p630
        $region106: #{model_v1_forward.1} parent=11 // pred_check_branch
          %868 = sbr.rel (%p866) target = $region108
        $region107: #{model_v1_forward.1} parent=11 // pred_region
          _
        $region108: #{model_v1_forward.1} parent=11 // pred_fallthru
          _
        // Predicated region
        $region109: #{model_v1_forward.1} parent=11 // pred_check
          %p869 = pneg %p651
        $region110: #{model_v1_forward.1} parent=11 // pred_check_branch
          %871 = sbr.rel (%p869) target = $region112
        $region111: #{model_v1_forward.1} parent=11 // pred_region
          _
        $region112: #{model_v1_forward.1} parent=11 // pred_fallthru
          _
        // Predicated region
        $region113: #{model_v1_forward.1} parent=11 // pred_check
          %p872 = pneg %p672
        $region114: #{model_v1_forward.1} parent=11 // pred_check_branch
          %874 = sbr.rel (%p872) target = $region116
        $region115: #{model_v1_forward.1} parent=11 // pred_region
          _
        $region116: #{model_v1_forward.1} parent=11 // pred_fallthru
          _
        // Predicated region
        $region117: #{model_v1_forward.1} parent=11 // pred_check
          %p875 = pneg %p693
        $region118: #{model_v1_forward.1} parent=11 // pred_check_branch
          %877 = sbr.rel (%p875) target = $region120
        $region119: #{model_v1_forward.1} parent=11 // pred_region
          _
        $region120: #{model_v1_forward.1} parent=11 // pred_fallthru
          _
        // Predicated region
        $region121: #{model_v1_forward.1} parent=11 // pred_check
          %p878 = pneg %p714
        $region122: #{model_v1_forward.1} parent=11 // pred_check_branch
          %880 = sbr.rel (%p878) target = $region124
        $region123: #{model_v1_forward.1} parent=11 // pred_region
          _
        $region124: #{model_v1_forward.1} parent=11 // pred_fallthru
          _
        // Predicated region
        $region125: #{model_v1_forward.1} parent=11 // pred_check
          %p881 = pneg %p735
        $region126: #{model_v1_forward.1} parent=11 // pred_check_branch
          %883 = sbr.rel (%p881) target = $region128
        $region127: #{model_v1_forward.1} parent=11 // pred_region
          _
        $region128: #{model_v1_forward.1} parent=11 // pred_fallthru
          _
        // Predicated region
        $region129: #{model_v1_forward.1} parent=11 // pred_check
          %p884 = pneg %p756
        $region130: #{model_v1_forward.1} parent=11 // pred_check_branch
          %886 = sbr.rel (%p884) target = $region132
        $region131: #{model_v1_forward.1} parent=11 // pred_region
          _
        $region132: #{model_v1_forward.1} parent=11 // pred_fallthru
          _
      $region12: #{model_v1_forward.1} parent=5 // pred_fallthru
        _
      %p887 = scmp.lt.s32.totalorder %s74, 2
      // Predicated region
      $region133: #{model_v1_forward.1} parent=5 // pred_check
        %p888 = pneg %p887
      $region134: #{model_v1_forward.1} parent=5 // pred_check_branch
        %890 = sbr.rel (%p888) target = $region136
      $region135: #{model_v1_forward.1} parent=5 // pred_region
        // Predicated region
        $region137: #{model_v1_forward.1} parent=135 // pred_check
          %p891 = pneg %p94
        $region138: #{model_v1_forward.1} parent=135 // pred_check_branch
          %893 = sbr.rel (%p891) target = $region140
        $region139: #{model_v1_forward.1} parent=135 // pred_region
          %p894 = scmp.lt.s32.totalorder %s74, 1
          %s895 = scalar_select %p894, %s74, 1
          %s896 = smul.addr %s895, 4
          %s897 = smul.addr %s896, 8
          %s898 = scalar_lea.vmem %s1, %s897
        $region140: #{model_v1_forward.1} parent=135 // pred_fallthru
          _
        // Predicated region
        $region141: #{model_v1_forward.1} parent=135 // pred_check
          %p899 = pneg %p120
        $region142: #{model_v1_forward.1} parent=135 // pred_check_branch
          %901 = sbr.rel (%p899) target = $region144
        $region143: #{model_v1_forward.1} parent=135 // pred_region
          %p902 = scmp.lt.s32.totalorder %s74, 1
          %s903 = scalar_select %p902, %s74, 1
          %s904 = smul.addr %s903, 2
          %s905 = smul.addr %s904, 8
          %s906 = scalar_lea.vmem %s3, %s905
        $region144: #{model_v1_forward.1} parent=135 // pred_fallthru
          _
      $region136: #{model_v1_forward.1} parent=5 // pred_fallthru
        _
      %p907 = scmp.le.s32.totalorder 1, %s74
      %p908 = scmp.lt.s32.totalorder %s74, 3
      %p909 = pnand %p907, %p908
      %p910 = pneg %p909
      // Predicated region
      $region145: #{model_v1_forward.1} parent=5 // pred_check
        _
      $region146: #{model_v1_forward.1} parent=5 // pred_check_branch
        %912 = sbr.rel (%p909) target = $region148
      $region147: #{model_v1_forward.1} parent=5 // pred_region
        %s913 = ssub.s32 %s74, 1
        %p914 = scmp.lt.s32.totalorder %s79, 1
        %s915 = scalar_select %p914, %s79, 1
        %s916 = smul.addr %s915, 4
        %s917 = smul.addr %s916, 8
        %s918 = scalar_lea.vmem %s1, %s917
        %p919 = pneg %p100
        %p920 = pneg %p97
        %p921 = scmp.lt.s32.totalorder %s79, 1
        %s922 = scalar_select %p921, %s79, 1
        %s923 = smul.addr %s922, 2
        %s924 = smul.addr %s923, 8
        %s925 = scalar_lea.vmem %s3, %s924
        %p926 = pneg %p126
        %p927 = pneg %p123
        %p928 = pneg %p147
        %p929 = pneg %p144
        %p930 = pneg %p168
        %p931 = pneg %p165
        %p932 = pneg %p189
        %p933 = pneg %p186
        %p934 = pneg %p210
        %p935 = pneg %p207
        %p936 = pneg %p231
        %p937 = pneg %p228
        %p938 = pneg %p252
        %p939 = pneg %p249
        %p940 = pneg %p273
        %p941 = pneg %p270
        %p942 = pneg %p294
        %p943 = pneg %p291
        %p944 = pneg %p315
        %p945 = pneg %p312
        %p946 = pneg %p336
        %p947 = pneg %p333
        %p948 = pneg %p357
        %p949 = pneg %p354
        %p950 = pneg %p378
        %p951 = pneg %p375
        %p952 = pneg %p399
        %p953 = pneg %p396
        %p954 = pneg %p420
        %p955 = pneg %p417
        %p956 = pneg %p441
        %p957 = pneg %p438
        %p958 = pneg %p462
        %p959 = pneg %p459
        %p960 = pneg %p483
        %p961 = pneg %p480
        %p962 = pneg %p504
        %p963 = pneg %p501
        %p964 = pneg %p525
        %p965 = pneg %p522
        %p966 = pneg %p546
        %p967 = pneg %p543
        %p968 = pneg %p567
        %p969 = pneg %p564
        %p970 = pneg %p588
        %p971 = pneg %p585
        %p972 = pneg %p609
        %p973 = pneg %p606
        %p974 = pneg %p630
        %p975 = pneg %p627
        %p976 = pneg %p651
        %p977 = pneg %p648
        %p978 = pneg %p672
        %p979 = pneg %p669
        %p980 = pneg %p693
        %p981 = pneg %p690
        %p982 = pneg %p714
        %p983 = pneg %p711
        %p984 = pneg %p735
        %p985 = pneg %p732
        %p986 = pneg %p756
        %p987 = pneg %p753
        %p988 = pneg %p782
        %p989 = pneg %p779
        %s990 = sand.u32 %s769, 1
        %s991 = scalar_lea.sflag [#allocation3], %s990
        %s992 = sand.u32 %s769, 1
        %s993 = smul.addr %s992, 16
        %s994 = scalar_lea.vmem [#allocation2], %s993
        %p995 = scmp.lt.s32.totalorder %s79, 1
        %s996 = scalar_select %p995, %s79, 1
        %s997 = smul.addr %s996, 4
        %s998 = smul.addr %s997, 8
        %s999 = scalar_lea.vmem %s1, %s998
        %p1000 = scmp.lt.s32.totalorder %s79, 1
        %s1001 = scalar_select %p1000, %s79, 1
        %s1002 = smul.addr %s1001, 2
        %s1003 = smul.addr %s1002, 8
        %s1004 = scalar_lea.vmem %s3, %s1003
        %v1005 = vld [vmem:[%s999] sm:$0xff]
        %v1006 = vld [vmem:[%s999 + $0x8] sm:$0xff]
        %v1007 = vld [vmem:[%s999 + $0x10] sm:$0xff]
        %v1008 = vld [vmem:[%s999 + $0x18] sm:$0xff]
        %v1009 = vld [vmem:[%s5] sm:$0xff]
        %v1010 = vld [vmem:[%s5 + $0x8] sm:$0xff]
        %v1011 = vld [vmem:[%s5 + $0x10] sm:$0xff]
        %v1012 = vld [vmem:[%s5 + $0x18] sm:$0xff]
        %v1013 = vld [vmem:[%s5 + $0x20] sm:$0xff]
        %v1014 = vld [vmem:[%s5 + $0x28] sm:$0xff]
        %v1015 = vld [vmem:[%s5 + $0x30] sm:$0xff]
        %v1016 = vld [vmem:[%s5 + $0x38] sm:$0xff]
        %v1017 = vld [vmem:[%s5 + $0x40] sm:$0xff]
        %v1018 = vld [vmem:[%s5 + $0x48] sm:$0xff]
        %v1019 = vld [vmem:[%s5 + $0x50] sm:$0xff]
        %v1020 = vld [vmem:[%s5 + $0x58] sm:$0xff]
        %v1021 = vld [vmem:[%s5 + $0x60] sm:$0xff]
        %v1022 = vld [vmem:[%s5 + $0x68] sm:$0xff]
        %v1023 = vld [vmem:[%s5 + $0x70] sm:$0xff]
        %v1024 = vld [vmem:[%s5 + $0x78] sm:$0xff]
        %v1025 = vld [vmem:[%s5 + $0x80] sm:$0xff]
        %v1026 = vld [vmem:[%s5 + $0x88] sm:$0xff]
        %v1027 = vld [vmem:[%s5 + $0x90] sm:$0xff]
        %v1028 = vld [vmem:[%s5 + $0x98] sm:$0xff]
        %v1029 = vld [vmem:[%s5 + $0xa0] sm:$0xff]
        %v1030 = vld [vmem:[%s5 + $0xa8] sm:$0xff]
        %v1031 = vld [vmem:[%s5 + $0xb0] sm:$0xff]
        %v1032 = vld [vmem:[%s5 + $0xb8] sm:$0xff]
        %v1033 = vld [vmem:[%s7] sm:$0x1]
        %v1035 = vperm.slane %v1033, 0
        %vm1037 = vcmask 523264
        %v1039 = vsel %vm1037, %v1006, 0
        %v1042 = vsel %vm1037, %v1008, 0
        %1044 = vmatpush.msra.mxu0 %v1024
        %1045 = vmatpush.msra.mxu0 %v1023
        %1046 = vmatpush.msra.mxu0 %v1022
        %1047 = vmatpush.msra.mxu0 %v1021
        %1048 = vmatpush.msra.mxu0 %v1020
        %1049 = vmatpush.msra.mxu0 %v1019
        %1050 = vmatpush.msra.mxu0 %v1018
        %1051 = vmatpush.msra.mxu0 %v1017
        %1052 = vmatpush.msra.mxu0 %v1016
        %1053 = vmatpush.msra.mxu0 %v1015
        %1054 = vmatpush.msra.mxu0 %v1014
        %1055 = vmatpush.msra.mxu0 %v1013
        %1056 = vmatpush.msra.mxu0 %v1012
        %1057 = vmatpush.msra.mxu0 %v1011
        %1058 = vmatpush.msra.mxu0 %v1010
        %1059 = vmatpush.msra.mxu0 %v1009
        %1060 = vmatmul.f32.gmra.mxu0 %v1005
        %v1061 = vpop.f32.mrf.mxu0
        %v1062 = vadd.f32 %v1035, %v1061
        %1063 = vmatmul.f32.gmra.mxu0 %v1007
        %v1064 = vpop.f32.mrf.mxu0
        %v1065 = vadd.f32 %v1035, %v1064
        %1066 = vdwg.mxu0
        %1067 = vmatpush.msra.mxu0 0.0
        %1068 = vmatpush.msra.mxu0 0.0
        %1069 = vmatpush.msra.mxu0 0.0
        %1070 = vmatpush.msra.mxu0 0.0
        %1071 = vmatpush.msra.mxu0 0.0
        %1072 = vmatpush.msra.mxu0 0.0
        %1073 = vmatpush.msra.mxu0 0.0
        %1074 = vmatpush.msra.mxu0 0.0
        %1075 = vmatpush.msra.mxu0 %v1032
        %1076 = vmatpush.msra.mxu0 %v1031
        %1077 = vmatpush.msra.mxu0 %v1030
        %1078 = vmatpush.msra.mxu0 %v1029
        %1079 = vmatpush.msra.mxu0 %v1028
        %1080 = vmatpush.msra.mxu0 %v1027
        %1081 = vmatpush.msra.mxu0 %v1026
        %1082 = vmatpush.msra.mxu0 %v1025
        %1083 = vmatmul.f32.gmra.mxu0 %v1039
        %v1084 = vpop.f32.mrf.mxu0
        %v1085 = vadd.f32 %v1062, %v1084
        %1086 = vmatmul.f32.gmra.mxu0 %v1042
        %v1087 = vpop.f32.mrf.mxu0
        %v1088 = vadd.f32 %v1065, %v1087
        %1089 = vdwg.mxu0
        %v1090 = vld [vmem:[%s9] sm:$0xff]
        %v1091 = vld [vmem:[%s9 + $0x8] sm:$0xff]
        %v1092 = vadd.f32 %v1085, %v1090
        %v1093 = vadd.f32 %v1088, %v1091
        %v1094 = vld [vmem:[%s11] sm:$0x3]
        %1095 = vadd.xlane.f32.xlu0 %v1092
        %v1096 = vpop.xlane.xlu0 %1095
        %1097 = vadd.xlane.f32.xlu0 %v1093
        %v1098 = vpop.xlane.xlu0 %1097
        %v1099 = vrcp.pop 128.0
        %v1100 = vmul.f32 128.0, %v1099
        %v1101 = vsub.f32 1.0, %v1100
        %v1102 = vmul.f32 %v1099, %v1101
        %v1103 = vadd.f32 %v1099, %v1102
        %vm1104 = vweird.f32 %v1099
        %v1105 = vsel %vm1104, %v1099, %v1103
        %v1106 = vmul.f32 %v1096, %v1105
        %v1107 = vmul.f32 %v1098, %v1105
        %v1108 = vsub.f32 %v1092, %v1106
        %v1109 = vsub.f32 %v1093, %v1107
        %v1110 = vmul.f32 %v1108, %v1108
        %v1111 = vmul.f32 %v1109, %v1109
        %1112 = vadd.xlane.f32.xlu0 %v1110
        %v1113 = vpop.xlane.xlu0 %1112
        %1114 = vadd.xlane.f32.xlu0 %v1111
        %v1115 = vpop.xlane.xlu0 %1114
        %v1116 = vmul.f32 %v1113, %v1105
        %v1117 = vmul.f32 %v1115, %v1105
        %v1118 = vadd.f32 %v1116, 1e-05
        %v1119 = vadd.f32 %v1117, 1e-05
        %v1120 = vrsqrt.pop %v1118
        %v1121 = vmul.f32 %v1120, %v1118
        %v1122 = vmul.f32 %v1121, %v1120
        %v1123 = vmul.f32 0.5, %v1122
        %v1124 = vsub.f32 1.5, %v1123
        %v1125 = vmul.f32 %v1120, %v1124
        %vm1126 = vweird.f32 %v1118
        %vm1127 = vweird.f32 %v1120
        %vm1128 = vmor %vm1126, %vm1127
        %v1129 = vsel %vm1128, %v1120, %v1125
        %v1130 = vrsqrt.pop %v1119
        %v1131 = vmul.f32 %v1130, %v1119
        %v1132 = vmul.f32 %v1131, %v1130
        %v1133 = vmul.f32 0.5, %v1132
        %v1134 = vsub.f32 1.5, %v1133
        %v1135 = vmul.f32 %v1130, %v1134
        %vm1136 = vweird.f32 %v1119
        %vm1137 = vweird.f32 %v1130
        %vm1138 = vmor %vm1136, %vm1137
        %v1139 = vsel %vm1138, %v1130, %v1135
        %v1140 = vmul.f32 %v1108, %v1129
        %v1141 = vmul.f32 %v1109, %v1139
        %v1142 = vperm.slane %v1094, 0
        %v1143 = vmul.f32 %v1140, %v1142
        %v1144 = vmul.f32 %v1141, %v1142
        %v1145 = vperm.slane %v1094, 1
        %v1146 = vadd.f32 %v1143, %v1145
        %v1147 = vadd.f32 %v1144, %v1145
        %v1148 = vld [vmem:[%s13] sm:$0xff]
        %v1149 = vld [vmem:[%s13 + $0x8] sm:$0xff]
        %v1150 = vld [vmem:[%s13 + $0x10] sm:$0xff]
        %v1151 = vld [vmem:[%s13 + $0x18] sm:$0xff]
        %v1152 = vld [vmem:[%s13 + $0x20] sm:$0xff]
        %v1153 = vld [vmem:[%s13 + $0x28] sm:$0xff]
        %v1154 = vld [vmem:[%s13 + $0x30] sm:$0xff]
        %v1155 = vld [vmem:[%s13 + $0x38] sm:$0xff]
        %v1156 = vld [vmem:[%s13 + $0x40] sm:$0xff]
        %v1157 = vld [vmem:[%s13 + $0x48] sm:$0xff]
        %v1158 = vld [vmem:[%s13 + $0x50] sm:$0xff]
        %v1159 = vld [vmem:[%s13 + $0x58] sm:$0xff]
        %v1160 = vld [vmem:[%s13 + $0x60] sm:$0xff]
        %v1161 = vld [vmem:[%s13 + $0x68] sm:$0xff]
        %v1162 = vld [vmem:[%s13 + $0x70] sm:$0xff]
        %v1163 = vld [vmem:[%s13 + $0x78] sm:$0xff]
        %v1164 = vld [vmem:[%s13 + $0x80] sm:$0xff]
        %v1165 = vld [vmem:[%s13 + $0x88] sm:$0xff]
        %v1166 = vld [vmem:[%s13 + $0x90] sm:$0xff]
        %v1167 = vld [vmem:[%s13 + $0x98] sm:$0xff]
        %v1168 = vld [vmem:[%s13 + $0xa0] sm:$0xff]
        %v1169 = vld [vmem:[%s13 + $0xa8] sm:$0xff]
        %v1170 = vld [vmem:[%s13 + $0xb0] sm:$0xff]
        %v1171 = vld [vmem:[%s13 + $0xb8] sm:$0xff]
        %v1172 = vld [vmem:[%s13 + $0xc0] sm:$0xff]
        %v1173 = vld [vmem:[%s13 + $0xc8] sm:$0xff]
        %v1174 = vld [vmem:[%s13 + $0xd0] sm:$0xff]
        %v1175 = vld [vmem:[%s13 + $0xd8] sm:$0xff]
        %v1176 = vld [vmem:[%s13 + $0xe0] sm:$0xff]
        %v1177 = vld [vmem:[%s13 + $0xe8] sm:$0xff]
        %v1178 = vld [vmem:[%s13 + $0xf0] sm:$0xff]
        %v1179 = vld [vmem:[%s13 + $0xf8] sm:$0xff]
        %v1180 = vld [vmem:[%s13 + $0x100] sm:$0xff]
        %v1181 = vld [vmem:[%s13 + $0x108] sm:$0xff]
        %v1182 = vld [vmem:[%s13 + $0x110] sm:$0xff]
        %v1183 = vld [vmem:[%s13 + $0x118] sm:$0xff]
        %v1184 = vld [vmem:[%s13 + $0x120] sm:$0xff]
        %v1185 = vld [vmem:[%s13 + $0x128] sm:$0xff]
        %v1186 = vld [vmem:[%s13 + $0x130] sm:$0xff]
        %v1187 = vld [vmem:[%s13 + $0x138] sm:$0xff]
        %v1188 = vld [vmem:[%s13 + $0x140] sm:$0xff]
        %v1189 = vld [vmem:[%s13 + $0x148] sm:$0xff]
        %v1190 = vld [vmem:[%s13 + $0x150] sm:$0xff]
        %v1191 = vld [vmem:[%s13 + $0x158] sm:$0xff]
        %v1192 = vld [vmem:[%s13 + $0x160] sm:$0xff]
        %v1193 = vld [vmem:[%s13 + $0x168] sm:$0xff]
        %v1194 = vld [vmem:[%s13 + $0x170] sm:$0xff]
        %v1195 = vld [vmem:[%s13 + $0x178] sm:$0xff]
        %v1196 = vld [vmem:[%s15] sm:$0x7]
        %v1198 = vperm.slane %v1196, 0
        %v1199 = vperm.slane %v1196, 1
        %v1200 = vperm.slane %v1196, 2
        %1204 = vmatpush.msra.mxu0 %v1193
        %1205 = vmatpush.msra.mxu0 %v1190
        %1206 = vmatpush.msra.mxu0 %v1187
        %1207 = vmatpush.msra.mxu0 %v1184
        %1208 = vmatpush.msra.mxu0 %v1181
        %1209 = vmatpush.msra.mxu0 %v1178
        %1210 = vmatpush.msra.mxu0 %v1175
        %1211 = vmatpush.msra.mxu0 %v1172
        %1212 = vmatpush.msra.mxu0 %v1169
        %1213 = vmatpush.msra.mxu0 %v1166
        %1214 = vmatpush.msra.mxu0 %v1163
        %1215 = vmatpush.msra.mxu0 %v1160
        %1216 = vmatpush.msra.mxu0 %v1157
        %1217 = vmatpush.msra.mxu0 %v1154
        %1218 = vmatpush.msra.mxu0 %v1151
        %1219 = vmatpush.msra.mxu0 %v1148
        %1220 = vmatmul.f32.gmra.mxu0 %v1146
        %v1221 = vpop.f32.mrf.mxu0
        %v1222 = vadd.f32 %v1198, %v1221
        %1223 = vmatmul.f32.gmra.mxu0 %v1147
        %v1224 = vpop.f32.mrf.mxu0
        %v1225 = vadd.f32 %v1198, %v1224
        %1226 = vdwg.mxu0
        %1227 = vmatpush.msra.mxu0 %v1194
        %1228 = vmatpush.msra.mxu0 %v1191
        %1229 = vmatpush.msra.mxu0 %v1188
        %1230 = vmatpush.msra.mxu0 %v1185
        %1231 = vmatpush.msra.mxu0 %v1182
        %1232 = vmatpush.msra.mxu0 %v1179
        %1233 = vmatpush.msra.mxu0 %v1176
        %1234 = vmatpush.msra.mxu0 %v1173
        %1235 = vmatpush.msra.mxu0 %v1170
        %1236 = vmatpush.msra.mxu0 %v1167
        %1237 = vmatpush.msra.mxu0 %v1164
        %1238 = vmatpush.msra.mxu0 %v1161
        %1239 = vmatpush.msra.mxu0 %v1158
        %1240 = vmatpush.msra.mxu0 %v1155
        %1241 = vmatpush.msra.mxu0 %v1152
        %1242 = vmatpush.msra.mxu0 %v1149
        %1243 = vmatmul.f32.gmra.mxu0 %v1146
        %v1244 = vpop.f32.mrf.mxu0
        %v1245 = vadd.f32 %v1199, %v1244
        %1246 = vmatmul.f32.gmra.mxu0 %v1147
        %v1247 = vpop.f32.mrf.mxu0
        %v1248 = vadd.f32 %v1199, %v1247
        %1249 = vdwg.mxu0
        %1250 = vmatpush.msra.mxu0 %v1195
        %1251 = vmatpush.msra.mxu0 %v1192
        %1252 = vmatpush.msra.mxu0 %v1189
        %1253 = vmatpush.msra.mxu0 %v1186
        %1254 = vmatpush.msra.mxu0 %v1183
        %1255 = vmatpush.msra.mxu0 %v1180
        %1256 = vmatpush.msra.mxu0 %v1177
        %1257 = vmatpush.msra.mxu0 %v1174
        %1258 = vmatpush.msra.mxu0 %v1171
        %1259 = vmatpush.msra.mxu0 %v1168
        %1260 = vmatpush.msra.mxu0 %v1165
        %1261 = vmatpush.msra.mxu0 %v1162
        %1262 = vmatpush.msra.mxu0 %v1159
        %1263 = vmatpush.msra.mxu0 %v1156
        %1264 = vmatpush.msra.mxu0 %v1153
        %1265 = vmatpush.msra.mxu0 %v1150
        %1266 = vmatmul.f32.gmra.mxu0 %v1146
        %v1267 = vpop.f32.mrf.mxu0
        %v1268 = vadd.f32 %v1200, %v1267
        %1269 = vmatmul.f32.gmra.mxu0 %v1147
        %v1270 = vpop.f32.mrf.mxu0
        %v1271 = vadd.f32 %v1200, %v1270
        %1272 = vdwg.mxu0
        %vm1273 = vcmask 261120
        %v1275 = vsel %vm1273, %v1222, 0
        %v1278 = vsel %vm1273, %v1225, 0
        %v1281 = vsel %vm1273, %v1245, 0
        %v1284 = vsel %vm1273, %v1248, 0
        %1286 = vmatpush.xpose.msra.mxu0 0.0
        %1287 = vmatpush.xpose.msra.mxu0 0.0
        %1288 = vmatpush.xpose.msra.mxu0 0.0
        %1289 = vmatpush.xpose.msra.mxu0 0.0
        %1290 = vmatpush.xpose.msra.mxu0 0.0
        %1291 = vmatpush.xpose.msra.mxu0 0.0
        %1292 = vmatpush.xpose.msra.mxu0 0.0
        %1293 = vmatpush.xpose.msra.mxu0 0.0
        %1294 = vmatpush.xpose.msra.mxu0 0.0
        %1295 = vmatpush.xpose.msra.mxu0 0.0
        %1296 = vmatpush.xpose.msra.mxu0 0.0
        %1297 = vmatpush.xpose.msra.mxu0 0.0
        %1298 = vmatpush.xpose.msra.mxu0 0.0
        %1299 = vmatpush.xpose.msra.mxu0 0.0
        %1300 = vmatpush.xpose.msra.mxu0 %v1284
        %1301 = vmatpush.xpose.msra.mxu0 %v1281
        %1302 = vmatmul.f32.gmra.mxu0 %v1275
        %v1303 = vpop.f32.mrf.mxu0
        %v1304 = vadd.f32 0.0, %v1303
        %1305 = vmatmul.f32.gmra.mxu0 %v1278
        %v1306 = vpop.f32.mrf.mxu0
        %v1307 = vadd.f32 0.0, %v1306
        %1308 = vdwg.mxu0
        %v1309 = vmul.f32 %v1304, 0.17677669
        %v1310 = vmul.f32 %v1307, 0.17677669
        %vm1311 = vcmask 130048
        %v1312 = vsel %vm1311, %v1309, -inf
        %1313 = vmax.xlane.f32.xlu0 %v1312
        %v1314 = vpop.xlane.xlu0 %1313
        %v1315 = vsel %vm1311, %v1310, -inf
        %1316 = vmax.xlane.f32.xlu0 %v1315
        %v1317 = vpop.xlane.xlu0 %1316
        %v1318 = vsub.f32 %v1309, %v1314
        %v1319 = vsub.f32 %v1310, %v1317
        %v1320 = vmul.f32 %v1318, 1.442695
        %v1321 = vpow.pop %v1320
        %v1322 = vmul.f32 %v1319, 1.442695
        %v1323 = vpow.pop %v1322
        %v1324 = vsel %vm1311, %v1321, 0.0
        %1325 = vadd.xlane.f32.xlu0 %v1324
        %v1326 = vpop.xlane.xlu0 %1325
        %v1327 = vsel %vm1311, %v1323, 0.0
        %1328 = vadd.xlane.f32.xlu0 %v1327
        %v1329 = vpop.xlane.xlu0 %1328
        %v1330 = vrcp.pop %v1326
        %v1331 = vrcp.pop %v1329
        %v1332 = vmul.f32 %v1321, %v1330
        %v1333 = vmul.f32 %v1323, %v1331
        %v1335 = vsel %vm1311, %v1332, 0
        %v1338 = vsel %vm1311, %v1333, 0
        %1340 = vmatpush.msra.mxu0 0.0
        %1341 = vmatpush.msra.mxu0 0.0
        %1342 = vmatpush.msra.mxu0 0.0
        %1343 = vmatpush.msra.mxu0 0.0
        %1344 = vmatpush.msra.mxu0 0.0
        %1345 = vmatpush.msra.mxu0 0.0
        %1346 = vmatpush.msra.mxu0 0.0
        %1347 = vmatpush.msra.mxu0 0.0
        %1348 = vmatpush.msra.mxu0 0.0
        %1349 = vmatpush.msra.mxu0 0.0
        %1350 = vmatpush.msra.mxu0 0.0
        %1351 = vmatpush.msra.mxu0 0.0
        %1352 = vmatpush.msra.mxu0 0.0
        %1353 = vmatpush.msra.mxu0 0.0
        %1354 = vmatpush.msra.mxu0 %v1271
        %1355 = vmatpush.msra.mxu0 %v1268
        %1356 = vmatmul.f32.gmra.mxu0 %v1335
        %v1357 = vpop.f32.mrf.mxu0
        %v1358 = vadd.f32 0.0, %v1357
        %1359 = vmatmul.f32.gmra.mxu0 %v1338
        %v1360 = vpop.f32.mrf.mxu0
        %v1361 = vadd.f32 0.0, %v1360
        %1362 = vdwg.mxu0
        %1363 = vrot.lane.b32.xlu0 %v1222, 96
        %v1364 = vpop.permute.xlu0 %1363
        %1365 = vrot.lane.b32.xlu0 %v1225, 96
        %v1366 = vpop.permute.xlu0 %1365
        %1367 = vrot.lane.b32.xlu0 %v1245, 96
        %v1368 = vpop.permute.xlu0 %1367
        %1369 = vrot.lane.b32.xlu0 %v1248, 96
        %v1370 = vpop.permute.xlu0 %1369
        %v1371 = vsel %vm1273, %v1364, 0
        %v1373 = vsel %vm1273, %v1366, 0
        %v1375 = vsel %vm1273, %v1368, 0
        %v1377 = vsel %vm1273, %v1370, 0
        %1379 = vmatpush.xpose.msra.mxu0 0.0
        %1380 = vmatpush.xpose.msra.mxu0 0.0
        %1381 = vmatpush.xpose.msra.mxu0 0.0
        %1382 = vmatpush.xpose.msra.mxu0 0.0
        %1383 = vmatpush.xpose.msra.mxu0 0.0
        %1384 = vmatpush.xpose.msra.mxu0 0.0
        %1385 = vmatpush.xpose.msra.mxu0 0.0
        %1386 = vmatpush.xpose.msra.mxu0 0.0
        %1387 = vmatpush.xpose.msra.mxu0 0.0
        %1388 = vmatpush.xpose.msra.mxu0 0.0
        %1389 = vmatpush.xpose.msra.mxu0 0.0
        %1390 = vmatpush.xpose.msra.mxu0 0.0
        %1391 = vmatpush.xpose.msra.mxu0 0.0
        %1392 = vmatpush.xpose.msra.mxu0 0.0
        %1393 = vmatpush.xpose.msra.mxu0 %v1377
        %1394 = vmatpush.xpose.msra.mxu0 %v1375
        %1395 = vmatmul.f32.gmra.mxu0 %v1371
        %v1396 = vpop.f32.mrf.mxu0
        %v1397 = vadd.f32 0.0, %v1396
        %1398 = vmatmul.f32.gmra.mxu0 %v1373
        %v1399 = vpop.f32.mrf.mxu0
        %v1400 = vadd.f32 0.0, %v1399
        %1401 = vdwg.mxu0
        %v1402 = vmul.f32 %v1397, 0.17677669
        %v1403 = vmul.f32 %v1400, 0.17677669
        %v1404 = vsel %vm1311, %v1402, -inf
        %1405 = vmax.xlane.f32.xlu0 %v1404
        %v1406 = vpop.xlane.xlu0 %1405
        %v1407 = vsel %vm1311, %v1403, -inf
        %1408 = vmax.xlane.f32.xlu0 %v1407
        %v1409 = vpop.xlane.xlu0 %1408
        %v1410 = vsub.f32 %v1402, %v1406
        %v1411 = vsub.f32 %v1403, %v1409
        %v1412 = vmul.f32 %v1410, 1.442695
        %v1413 = vpow.pop %v1412
        %v1414 = vmul.f32 %v1411, 1.442695
        %v1415 = vpow.pop %v1414
        %v1416 = vsel %vm1311, %v1413, 0.0
        %1417 = vadd.xlane.f32.xlu0 %v1416
        %v1418 = vpop.xlane.xlu0 %1417
        %v1419 = vsel %vm1311, %v1415, 0.0
        %1420 = vadd.xlane.f32.xlu0 %v1419
        %v1421 = vpop.xlane.xlu0 %1420
        %v1422 = vrcp.pop %v1418
        %v1423 = vrcp.pop %v1421
        %v1424 = vmul.f32 %v1413, %v1422
        %v1425 = vmul.f32 %v1415, %v1423
        %1428 = vrot.lane.b32.xlu0 %v1268, 96
        %v1429 = vpop.permute.xlu0 %1428
        %1430 = vrot.lane.b32.xlu0 %v1271, 96
        %v1431 = vpop.permute.xlu0 %1430
        %v1435 = vsel %vm1311, %v1424, 0
        %v1438 = vsel %vm1311, %v1425, 0
        %1440 = vmatpush.msra.mxu0 0.0
        %1441 = vmatpush.msra.mxu0 0.0
        %1442 = vmatpush.msra.mxu0 0.0
        %1443 = vmatpush.msra.mxu0 0.0
        %1444 = vmatpush.msra.mxu0 0.0
        %1445 = vmatpush.msra.mxu0 0.0
        %1446 = vmatpush.msra.mxu0 0.0
        %1447 = vmatpush.msra.mxu0 0.0
        %1448 = vmatpush.msra.mxu0 0.0
        %1449 = vmatpush.msra.mxu0 0.0
        %1450 = vmatpush.msra.mxu0 0.0
        %1451 = vmatpush.msra.mxu0 0.0
        %1452 = vmatpush.msra.mxu0 0.0
        %1453 = vmatpush.msra.mxu0 0.0
        %1454 = vmatpush.msra.mxu0 %v1431
        %1455 = vmatpush.msra.mxu0 %v1429
        %1456 = vmatmul.f32.gmra.mxu0 %v1435
        %v1457 = vpop.f32.mrf.mxu0
        %v1458 = vadd.f32 0.0, %v1457
        %1459 = vmatmul.f32.gmra.mxu0 %v1438
        %v1460 = vpop.f32.mrf.mxu0
        %v1461 = vadd.f32 0.0, %v1460
        %1462 = vdwg.mxu0
        %1463 = vrot.lane.b32.xlu0 %v1222, 64
        %v1464 = vpop.permute.xlu0 %1463
        %1465 = vrot.lane.b32.xlu0 %v1225, 64
        %v1466 = vpop.permute.xlu0 %1465
        %1467 = vrot.lane.b32.xlu0 %v1245, 64
        %v1468 = vpop.permute.xlu0 %1467
        %1469 = vrot.lane.b32.xlu0 %v1248, 64
        %v1470 = vpop.permute.xlu0 %1469
        %v1471 = vsel %vm1273, %v1464, 0
        %v1473 = vsel %vm1273, %v1466, 0
        %v1475 = vsel %vm1273, %v1468, 0
        %v1477 = vsel %vm1273, %v1470, 0
        %1479 = vmatpush.xpose.msra.mxu0 0.0
        %1480 = vmatpush.xpose.msra.mxu0 0.0
        %1481 = vmatpush.xpose.msra.mxu0 0.0
        %1482 = vmatpush.xpose.msra.mxu0 0.0
        %1483 = vmatpush.xpose.msra.mxu0 0.0
        %1484 = vmatpush.xpose.msra.mxu0 0.0
        %1485 = vmatpush.xpose.msra.mxu0 0.0
        %1486 = vmatpush.xpose.msra.mxu0 0.0
        %1487 = vmatpush.xpose.msra.mxu0 0.0
        %1488 = vmatpush.xpose.msra.mxu0 0.0
        %1489 = vmatpush.xpose.msra.mxu0 0.0
        %1490 = vmatpush.xpose.msra.mxu0 0.0
        %1491 = vmatpush.xpose.msra.mxu0 0.0
        %1492 = vmatpush.xpose.msra.mxu0 0.0
        %1493 = vmatpush.xpose.msra.mxu0 %v1477
        %1494 = vmatpush.xpose.msra.mxu0 %v1475
        %1495 = vmatmul.f32.gmra.mxu0 %v1471
        %v1496 = vpop.f32.mrf.mxu0
        %v1497 = vadd.f32 0.0, %v1496
        %1498 = vmatmul.f32.gmra.mxu0 %v1473
        %v1499 = vpop.f32.mrf.mxu0
        %v1500 = vadd.f32 0.0, %v1499
        %1501 = vdwg.mxu0
        %v1502 = vmul.f32 %v1497, 0.17677669
        %v1503 = vmul.f32 %v1500, 0.17677669
        %v1504 = vsel %vm1311, %v1502, -inf
        %1505 = vmax.xlane.f32.xlu0 %v1504
        %v1506 = vpop.xlane.xlu0 %1505
        %v1507 = vsel %vm1311, %v1503, -inf
        %1508 = vmax.xlane.f32.xlu0 %v1507
        %v1509 = vpop.xlane.xlu0 %1508
        %v1510 = vsub.f32 %v1502, %v1506
        %v1511 = vsub.f32 %v1503, %v1509
        %v1512 = vmul.f32 %v1510, 1.442695
        %v1513 = vpow.pop %v1512
        %v1514 = vmul.f32 %v1511, 1.442695
        %v1515 = vpow.pop %v1514
        %v1516 = vsel %vm1311, %v1513, 0.0
        %1517 = vadd.xlane.f32.xlu0 %v1516
        %v1518 = vpop.xlane.xlu0 %1517
        %v1519 = vsel %vm1311, %v1515, 0.0
        %1520 = vadd.xlane.f32.xlu0 %v1519
        %v1521 = vpop.xlane.xlu0 %1520
        %v1522 = vrcp.pop %v1518
        %v1523 = vrcp.pop %v1521
        %v1524 = vmul.f32 %v1513, %v1522
        %v1525 = vmul.f32 %v1515, %v1523
        %1526 = vrot.lane.b32.xlu0 %v1268, 64
        %v1527 = vpop.permute.xlu0 %1526
        %1528 = vrot.lane.b32.xlu0 %v1271, 64
        %v1529 = vpop.permute.xlu0 %1528
        %v1533 = vsel %vm1311, %v1524, 0
        %v1536 = vsel %vm1311, %v1525, 0
        %1538 = vmatpush.msra.mxu0 0.0
        %1539 = vmatpush.msra.mxu0 0.0
        %1540 = vmatpush.msra.mxu0 0.0
        %1541 = vmatpush.msra.mxu0 0.0
        %1542 = vmatpush.msra.mxu0 0.0
        %1543 = vmatpush.msra.mxu0 0.0
        %1544 = vmatpush.msra.mxu0 0.0
        %1545 = vmatpush.msra.mxu0 0.0
        %1546 = vmatpush.msra.mxu0 0.0
        %1547 = vmatpush.msra.mxu0 0.0
        %1548 = vmatpush.msra.mxu0 0.0
        %1549 = vmatpush.msra.mxu0 0.0
        %1550 = vmatpush.msra.mxu0 0.0
        %1551 = vmatpush.msra.mxu0 0.0
        %1552 = vmatpush.msra.mxu0 %v1529
        %1553 = vmatpush.msra.mxu0 %v1527
        %1554 = vmatmul.f32.gmra.mxu0 %v1533
        %v1555 = vpop.f32.mrf.mxu0
        %v1556 = vadd.f32 0.0, %v1555
        %1557 = vmatmul.f32.gmra.mxu0 %v1536
        %v1558 = vpop.f32.mrf.mxu0
        %v1559 = vadd.f32 0.0, %v1558
        %1560 = vdwg.mxu0
        %1561 = vrot.lane.b32.xlu0 %v1222, 32
        %v1562 = vpop.permute.xlu0 %1561
        %1563 = vrot.lane.b32.xlu0 %v1225, 32
        %v1564 = vpop.permute.xlu0 %1563
        %1565 = vrot.lane.b32.xlu0 %v1245, 32
        %v1566 = vpop.permute.xlu0 %1565
        %1567 = vrot.lane.b32.xlu0 %v1248, 32
        %v1568 = vpop.permute.xlu0 %1567
        %v1569 = vsel %vm1273, %v1562, 0
        %v1571 = vsel %vm1273, %v1564, 0
        %v1573 = vsel %vm1273, %v1566, 0
        %v1575 = vsel %vm1273, %v1568, 0
        %1577 = vmatpush.xpose.msra.mxu0 0.0
        %1578 = vmatpush.xpose.msra.mxu0 0.0
        %1579 = vmatpush.xpose.msra.mxu0 0.0
        %1580 = vmatpush.xpose.msra.mxu0 0.0
        %1581 = vmatpush.xpose.msra.mxu0 0.0
        %1582 = vmatpush.xpose.msra.mxu0 0.0
        %1583 = vmatpush.xpose.msra.mxu0 0.0
        %1584 = vmatpush.xpose.msra.mxu0 0.0
        %1585 = vmatpush.xpose.msra.mxu0 0.0
        %1586 = vmatpush.xpose.msra.mxu0 0.0
        %1587 = vmatpush.xpose.msra.mxu0 0.0
        %1588 = vmatpush.xpose.msra.mxu0 0.0
        %1589 = vmatpush.xpose.msra.mxu0 0.0
        %1590 = vmatpush.xpose.msra.mxu0 0.0
        %1591 = vmatpush.xpose.msra.mxu0 %v1575
        %1592 = vmatpush.xpose.msra.mxu0 %v1573
        %1593 = vmatmul.f32.gmra.mxu0 %v1569
        %v1594 = vpop.f32.mrf.mxu0
        %v1595 = vadd.f32 0.0, %v1594
        %1596 = vmatmul.f32.gmra.mxu0 %v1571
        %v1597 = vpop.f32.mrf.mxu0
        %v1598 = vadd.f32 0.0, %v1597
        %1599 = vdwg.mxu0
        %v1600 = vmul.f32 %v1595, 0.17677669
        %v1601 = vmul.f32 %v1598, 0.17677669
        %v1602 = vsel %vm1311, %v1600, -inf
        %1603 = vmax.xlane.f32.xlu0 %v1602
        %v1604 = vpop.xlane.xlu0 %1603
        %v1605 = vsel %vm1311, %v1601, -inf
        %1606 = vmax.xlane.f32.xlu0 %v1605
        %v1607 = vpop.xlane.xlu0 %1606
        %v1608 = vsub.f32 %v1600, %v1604
        %v1609 = vsub.f32 %v1601, %v1607
        %v1610 = vmul.f32 %v1608, 1.442695
        %v1611 = vpow.pop %v1610
        %v1612 = vmul.f32 %v1609, 1.442695
        %v1613 = vpow.pop %v1612
        %v1614 = vsel %vm1311, %v1611, 0.0
        %1615 = vadd.xlane.f32.xlu0 %v1614
        %v1616 = vpop.xlane.xlu0 %1615
        %v1617 = vsel %vm1311, %v1613, 0.0
        %1618 = vadd.xlane.f32.xlu0 %v1617
        %v1619 = vpop.xlane.xlu0 %1618
        %v1620 = vrcp.pop %v1616
        %v1621 = vrcp.pop %v1619
        %v1622 = vmul.f32 %v1611, %v1620
        %v1623 = vmul.f32 %v1613, %v1621
        %1624 = vrot.lane.b32.xlu0 %v1268, 32
        %v1625 = vpop.permute.xlu0 %1624
        %1626 = vrot.lane.b32.xlu0 %v1271, 32
        %v1627 = vpop.permute.xlu0 %1626
        %v1631 = vsel %vm1311, %v1622, 0
        %v1634 = vsel %vm1311, %v1623, 0
        %1636 = vmatpush.msra.mxu0 0.0
        %1637 = vmatpush.msra.mxu0 0.0
        %1638 = vmatpush.msra.mxu0 0.0
        %1639 = vmatpush.msra.mxu0 0.0
        %1640 = vmatpush.msra.mxu0 0.0
        %1641 = vmatpush.msra.mxu0 0.0
        %1642 = vmatpush.msra.mxu0 0.0
        %1643 = vmatpush.msra.mxu0 0.0
        %1644 = vmatpush.msra.mxu0 0.0
        %1645 = vmatpush.msra.mxu0 0.0
        %1646 = vmatpush.msra.mxu0 0.0
        %1647 = vmatpush.msra.mxu0 0.0
        %1648 = vmatpush.msra.mxu0 0.0
        %1649 = vmatpush.msra.mxu0 0.0
        %1650 = vmatpush.msra.mxu0 %v1627
        %1651 = vmatpush.msra.mxu0 %v1625
        %1652 = vmatmul.f32.gmra.mxu0 %v1631
        %v1653 = vpop.f32.mrf.mxu0
        %v1654 = vadd.f32 0.0, %v1653
        %1655 = vmatmul.f32.gmra.mxu0 %v1634
        %v1656 = vpop.f32.mrf.mxu0
        %v1657 = vadd.f32 0.0, %v1656
        %1658 = vdwg.mxu0
        %1661 = vrot.lane.b32.xlu0 %v1458, 32
        %v1662 = vpop.permute.xlu0 %1661
        %1663 = vrot.lane.b32.xlu0 %v1461, 32
        %v1664 = vpop.permute.xlu0 %1663
        %1669 = vrot.lane.b32.xlu0 %v1556, 64
        %v1670 = vpop.permute.xlu0 %1669
        %1671 = vrot.lane.b32.xlu0 %v1559, 64
        %v1672 = vpop.permute.xlu0 %1671
        %1677 = vrot.lane.b32.xlu0 %v1654, 96
        %v1678 = vpop.permute.xlu0 %1677
        %1679 = vrot.lane.b32.xlu0 %v1657, 96
        %v1680 = vpop.permute.xlu0 %1679
        %v1683 = vsel %vm1273, %v1358, %v1662
        %v1684 = vsel %vm1273, %v1361, %v1664
        %v1685 = vsel %vm1037, %v1683, %v1670
        %v1686 = vsel %vm1037, %v1684, %v1672
        %vm1687 = vcmask 785408
        %v1688 = vsel %vm1687, %v1685, %v1678
        %v1689 = vsel %vm1687, %v1686, %v1680
        %v1690 = vld [vmem:[%s17] sm:$0xff]
        %v1691 = vld [vmem:[%s17 + $0x8] sm:$0xff]
        %v1692 = vld [vmem:[%s17 + $0x10] sm:$0xff]
        %v1693 = vld [vmem:[%s17 + $0x18] sm:$0xff]
        %v1694 = vld [vmem:[%s17 + $0x20] sm:$0xff]
        %v1695 = vld [vmem:[%s17 + $0x28] sm:$0xff]
        %v1696 = vld [vmem:[%s17 + $0x30] sm:$0xff]
        %v1697 = vld [vmem:[%s17 + $0x38] sm:$0xff]
        %v1698 = vld [vmem:[%s17 + $0x40] sm:$0xff]
        %v1699 = vld [vmem:[%s17 + $0x48] sm:$0xff]
        %v1700 = vld [vmem:[%s17 + $0x50] sm:$0xff]
        %v1701 = vld [vmem:[%s17 + $0x58] sm:$0xff]
        %v1702 = vld [vmem:[%s17 + $0x60] sm:$0xff]
        %v1703 = vld [vmem:[%s17 + $0x68] sm:$0xff]
        %v1704 = vld [vmem:[%s17 + $0x70] sm:$0xff]
        %v1705 = vld [vmem:[%s17 + $0x78] sm:$0xff]
        %1706 = vmatpush.msra.mxu0 %v1705
        %1707 = vmatpush.msra.mxu0 %v1704
        %1708 = vmatpush.msra.mxu0 %v1703
        %1709 = vmatpush.msra.mxu0 %v1702
        %1710 = vmatpush.msra.mxu0 %v1701
        %1711 = vmatpush.msra.mxu0 %v1700
        %1712 = vmatpush.msra.mxu0 %v1699
        %1713 = vmatpush.msra.mxu0 %v1698
        %1714 = vmatpush.msra.mxu0 %v1697
        %1715 = vmatpush.msra.mxu0 %v1696
        %1716 = vmatpush.msra.mxu0 %v1695
        %1717 = vmatpush.msra.mxu0 %v1694
        %1718 = vmatpush.msra.mxu0 %v1693
        %1719 = vmatpush.msra.mxu0 %v1692
        %1720 = vmatpush.msra.mxu0 %v1691
        %1721 = vmatpush.msra.mxu0 %v1690
        %1722 = vmatmul.f32.gmra.mxu0 %v1688
        %v1723 = vpop.f32.mrf.mxu0
        %v1724 = vadd.f32 0.0, %v1723
        %1725 = vmatmul.f32.gmra.mxu0 %v1689
        %v1726 = vpop.f32.mrf.mxu0
        %v1727 = vadd.f32 0.0, %v1726
        %1728 = vdwg.mxu0
        %v1729 = vadd.f32 %v1092, %v1724
        %v1730 = vadd.f32 %v1093, %v1727
        %v1731 = vld [vmem:[%s19] sm:$0x1]
        %v1733 = vperm.slane %v1731, 0
        %v1735 = vadd.f32 %v1729, %v1733
        %v1736 = vadd.f32 %v1730, %v1733
        %v1737 = vld [vmem:[%s21] sm:$0x3]
        %1738 = vadd.xlane.f32.xlu0 %v1735
        %v1739 = vpop.xlane.xlu0 %1738
        %1740 = vadd.xlane.f32.xlu0 %v1736
        %v1741 = vpop.xlane.xlu0 %1740
        %v1742 = vmul.f32 %v1739, %v1105
        %v1743 = vmul.f32 %v1741, %v1105
        %v1744 = vsub.f32 %v1735, %v1742
        %v1745 = vsub.f32 %v1736, %v1743
        %v1746 = vmul.f32 %v1744, %v1744
        %v1747 = vmul.f32 %v1745, %v1745
        %1748 = vadd.xlane.f32.xlu0 %v1746
        %v1749 = vpop.xlane.xlu0 %1748
        %1750 = vadd.xlane.f32.xlu0 %v1747
        %v1751 = vpop.xlane.xlu0 %1750
        %v1752 = vmul.f32 %v1749, %v1105
        %v1753 = vmul.f32 %v1751, %v1105
        %v1754 = vadd.f32 %v1752, 1e-05
        %v1755 = vadd.f32 %v1753, 1e-05
        %v1756 = vrsqrt.pop %v1754
        %v1757 = vmul.f32 %v1756, %v1754
        %v1758 = vmul.f32 %v1757, %v1756
        %v1759 = vmul.f32 0.5, %v1758
        %v1760 = vsub.f32 1.5, %v1759
        %v1761 = vmul.f32 %v1756, %v1760
        %vm1762 = vweird.f32 %v1754
        %vm1763 = vweird.f32 %v1756
        %vm1764 = vmor %vm1762, %vm1763
        %v1765 = vsel %vm1764, %v1756, %v1761
        %v1766 = vrsqrt.pop %v1755
        %v1767 = vmul.f32 %v1766, %v1755
        %v1768 = vmul.f32 %v1767, %v1766
        %v1769 = vmul.f32 0.5, %v1768
        %v1770 = vsub.f32 1.5, %v1769
        %v1771 = vmul.f32 %v1766, %v1770
        %vm1772 = vweird.f32 %v1755
        %vm1773 = vweird.f32 %v1766
        %vm1774 = vmor %vm1772, %vm1773
        %v1775 = vsel %vm1774, %v1766, %v1771
        %v1776 = vmul.f32 %v1744, %v1765
        %v1777 = vmul.f32 %v1745, %v1775
        %v1778 = vperm.slane %v1737, 0
        %v1779 = vmul.f32 %v1776, %v1778
        %v1780 = vmul.f32 %v1777, %v1778
        %v1781 = vperm.slane %v1737, 1
        %v1782 = vadd.f32 %v1779, %v1781
        %v1783 = vadd.f32 %v1780, %v1781
        %v1784 = vld [vmem:[%s23] sm:$0xff]
        %v1785 = vld [vmem:[%s23 + $0x8] sm:$0xff]
        %v1786 = vld [vmem:[%s23 + $0x10] sm:$0xff]
        %v1787 = vld [vmem:[%s23 + $0x18] sm:$0xff]
        %v1788 = vld [vmem:[%s23 + $0x20] sm:$0xff]
        %v1789 = vld [vmem:[%s23 + $0x28] sm:$0xff]
        %v1790 = vld [vmem:[%s23 + $0x30] sm:$0xff]
        %v1791 = vld [vmem:[%s23 + $0x38] sm:$0xff]
        %v1792 = vld [vmem:[%s23 + $0x40] sm:$0xff]
        %v1793 = vld [vmem:[%s23 + $0x48] sm:$0xff]
        %v1794 = vld [vmem:[%s23 + $0x50] sm:$0xff]
        %v1795 = vld [vmem:[%s23 + $0x58] sm:$0xff]
        %v1796 = vld [vmem:[%s23 + $0x60] sm:$0xff]
        %v1797 = vld [vmem:[%s23 + $0x68] sm:$0xff]
        %v1798 = vld [vmem:[%s23 + $0x70] sm:$0xff]
        %v1799 = vld [vmem:[%s23 + $0x78] sm:$0xff]
        %v1800 = vld [vmem:[%s23 + $0x80] sm:$0xff]
        %v1801 = vld [vmem:[%s23 + $0x88] sm:$0xff]
        %v1802 = vld [vmem:[%s23 + $0x90] sm:$0xff]
        %v1803 = vld [vmem:[%s23 + $0x98] sm:$0xff]
        %v1804 = vld [vmem:[%s23 + $0xa0] sm:$0xff]
        %v1805 = vld [vmem:[%s23 + $0xa8] sm:$0xff]
        %v1806 = vld [vmem:[%s23 + $0xb0] sm:$0xff]
        %v1807 = vld [vmem:[%s23 + $0xb8] sm:$0xff]
        %v1808 = vld [vmem:[%s23 + $0xc0] sm:$0xff]
        %v1809 = vld [vmem:[%s23 + $0xc8] sm:$0xff]
        %v1810 = vld [vmem:[%s23 + $0xd0] sm:$0xff]
        %v1811 = vld [vmem:[%s23 + $0xd8] sm:$0xff]
        %v1812 = vld [vmem:[%s23 + $0xe0] sm:$0xff]
        %v1813 = vld [vmem:[%s23 + $0xe8] sm:$0xff]
        %v1814 = vld [vmem:[%s23 + $0xf0] sm:$0xff]
        %v1815 = vld [vmem:[%s23 + $0xf8] sm:$0xff]
        %v1816 = vld [vmem:[%s25] sm:$0x3]
        %v1818 = vperm.slane %v1816, 0
        %v1819 = vperm.slane %v1816, 1
        %1822 = vmatpush.msra.mxu0 %v1814
        %1823 = vmatpush.msra.mxu0 %v1812
        %1824 = vmatpush.msra.mxu0 %v1810
        %1825 = vmatpush.msra.mxu0 %v1808
        %1826 = vmatpush.msra.mxu0 %v1806
        %1827 = vmatpush.msra.mxu0 %v1804
        %1828 = vmatpush.msra.mxu0 %v1802
        %1829 = vmatpush.msra.mxu0 %v1800
        %1830 = vmatpush.msra.mxu0 %v1798
        %1831 = vmatpush.msra.mxu0 %v1796
        %1832 = vmatpush.msra.mxu0 %v1794
        %1833 = vmatpush.msra.mxu0 %v1792
        %1834 = vmatpush.msra.mxu0 %v1790
        %1835 = vmatpush.msra.mxu0 %v1788
        %1836 = vmatpush.msra.mxu0 %v1786
        %1837 = vmatpush.msra.mxu0 %v1784
        %1838 = vmatmul.f32.gmra.mxu0 %v1782
        %v1839 = vpop.f32.mrf.mxu0
        %v1840 = vadd.f32 %v1818, %v1839
        %1841 = vmatmul.f32.gmra.mxu0 %v1783
        %v1842 = vpop.f32.mrf.mxu0
        %v1843 = vadd.f32 %v1818, %v1842
        %1844 = vdwg.mxu0
        %1845 = vmatpush.msra.mxu0 %v1815
        %1846 = vmatpush.msra.mxu0 %v1813
        %1847 = vmatpush.msra.mxu0 %v1811
        %1848 = vmatpush.msra.mxu0 %v1809
        %1849 = vmatpush.msra.mxu0 %v1807
        %1850 = vmatpush.msra.mxu0 %v1805
        %1851 = vmatpush.msra.mxu0 %v1803
        %1852 = vmatpush.msra.mxu0 %v1801
        %1853 = vmatpush.msra.mxu0 %v1799
        %1854 = vmatpush.msra.mxu0 %v1797
        %1855 = vmatpush.msra.mxu0 %v1795
        %1856 = vmatpush.msra.mxu0 %v1793
        %1857 = vmatpush.msra.mxu0 %v1791
        %1858 = vmatpush.msra.mxu0 %v1789
        %1859 = vmatpush.msra.mxu0 %v1787
        %1860 = vmatpush.msra.mxu0 %v1785
        %1861 = vmatmul.f32.gmra.mxu0 %v1782
        %v1862 = vpop.f32.mrf.mxu0
        %v1863 = vadd.f32 %v1819, %v1862
        %1864 = vmatmul.f32.gmra.mxu0 %v1783
        %v1865 = vpop.f32.mrf.mxu0
        %v1866 = vadd.f32 %v1819, %v1865
        %1867 = vdwg.mxu0
        %v1868 = vmul.f32 %v1840, 0.5
        %v1869 = vmul.f32 %v1863, 0.5
        %v1870 = vmul.f32 %v1843, 0.5
        %v1871 = vmul.f32 %v1866, 0.5
        %v1872 = vmul.f32 %v1840, 0.044715
        %v1873 = vmul.f32 %v1863, 0.044715
        %v1874 = vmul.f32 %v1843, 0.044715
        %v1875 = vmul.f32 %v1866, 0.044715
        %v1876 = vmul.f32 %v1872, %v1840
        %v1877 = vmul.f32 %v1873, %v1863
        %v1878 = vmul.f32 %v1874, %v1843
        %v1879 = vmul.f32 %v1875, %v1866
        %v1880 = vmul.f32 %v1876, %v1840
        %v1881 = vmul.f32 %v1877, %v1863
        %v1882 = vmul.f32 %v1878, %v1843
        %v1883 = vmul.f32 %v1879, %v1866
        %v1884 = vadd.f32 %v1840, %v1880
        %v1885 = vadd.f32 %v1863, %v1881
        %v1886 = vadd.f32 %v1843, %v1882
        %v1887 = vadd.f32 %v1866, %v1883
        %v1888 = vmul.f32 %v1884, 0.7978846
        %v1889 = vmul.f32 %v1885, 0.7978846
        %v1890 = vmul.f32 %v1886, 0.7978846
        %v1891 = vmul.f32 %v1887, 0.7978846
        %v1892 = vtanh.pop %v1888
        %v1893 = vtanh.pop %v1889
        %v1894 = vtanh.pop %v1890
        %v1895 = vtanh.pop %v1891
        %v1896 = vadd.f32 %v1892, 1.0
        %v1897 = vadd.f32 %v1893, 1.0
        %v1898 = vadd.f32 %v1894, 1.0
        %v1899 = vadd.f32 %v1895, 1.0
        %v1900 = vmul.f32 %v1868, %v1896
        %v1901 = vmul.f32 %v1869, %v1897
        %v1902 = vmul.f32 %v1870, %v1898
        %v1903 = vmul.f32 %v1871, %v1899
        %v1904 = vld [vmem:[%s27] sm:$0xff]
        %v1905 = vld [vmem:[%s27 + $0x8] sm:$0xff]
        %v1906 = vld [vmem:[%s27 + $0x10] sm:$0xff]
        %v1907 = vld [vmem:[%s27 + $0x18] sm:$0xff]
        %v1908 = vld [vmem:[%s27 + $0x20] sm:$0xff]
        %v1909 = vld [vmem:[%s27 + $0x28] sm:$0xff]
        %v1910 = vld [vmem:[%s27 + $0x30] sm:$0xff]
        %v1911 = vld [vmem:[%s27 + $0x38] sm:$0xff]
        %v1912 = vld [vmem:[%s27 + $0x40] sm:$0xff]
        %v1913 = vld [vmem:[%s27 + $0x48] sm:$0xff]
        %v1914 = vld [vmem:[%s27 + $0x50] sm:$0xff]
        %v1915 = vld [vmem:[%s27 + $0x58] sm:$0xff]
        %v1916 = vld [vmem:[%s27 + $0x60] sm:$0xff]
        %v1917 = vld [vmem:[%s27 + $0x68] sm:$0xff]
        %v1918 = vld [vmem:[%s27 + $0x70] sm:$0xff]
        %v1919 = vld [vmem:[%s27 + $0x78] sm:$0xff]
        %v1920 = vld [vmem:[%s27 + $0x80] sm:$0xff]
        %v1921 = vld [vmem:[%s27 + $0x88] sm:$0xff]
        %v1922 = vld [vmem:[%s27 + $0x90] sm:$0xff]
        %v1923 = vld [vmem:[%s27 + $0x98] sm:$0xff]
        %v1924 = vld [vmem:[%s27 + $0xa0] sm:$0xff]
        %v1925 = vld [vmem:[%s27 + $0xa8] sm:$0xff]
        %v1926 = vld [vmem:[%s27 + $0xb0] sm:$0xff]
        %v1927 = vld [vmem:[%s27 + $0xb8] sm:$0xff]
        %v1928 = vld [vmem:[%s27 + $0xc0] sm:$0xff]
        %v1929 = vld [vmem:[%s27 + $0xc8] sm:$0xff]
        %v1930 = vld [vmem:[%s27 + $0xd0] sm:$0xff]
        %v1931 = vld [vmem:[%s27 + $0xd8] sm:$0xff]
        %v1932 = vld [vmem:[%s27 + $0xe0] sm:$0xff]
        %v1933 = vld [vmem:[%s27 + $0xe8] sm:$0xff]
        %v1934 = vld [vmem:[%s27 + $0xf0] sm:$0xff]
        %v1935 = vld [vmem:[%s27 + $0xf8] sm:$0xff]
        %v1936 = vld [vmem:[%s29] sm:$0x1]
        %v1938 = vperm.slane %v1936, 0
        %1940 = vmatpush.msra.mxu0 %v1919
        %1941 = vmatpush.msra.mxu0 %v1918
        %1942 = vmatpush.msra.mxu0 %v1917
        %1943 = vmatpush.msra.mxu0 %v1916
        %1944 = vmatpush.msra.mxu0 %v1915
        %1945 = vmatpush.msra.mxu0 %v1914
        %1946 = vmatpush.msra.mxu0 %v1913
        %1947 = vmatpush.msra.mxu0 %v1912
        %1948 = vmatpush.msra.mxu0 %v1911
        %1949 = vmatpush.msra.mxu0 %v1910
        %1950 = vmatpush.msra.mxu0 %v1909
        %1951 = vmatpush.msra.mxu0 %v1908
        %1952 = vmatpush.msra.mxu0 %v1907
        %1953 = vmatpush.msra.mxu0 %v1906
        %1954 = vmatpush.msra.mxu0 %v1905
        %1955 = vmatpush.msra.mxu0 %v1904
        %1956 = vmatmul.f32.gmra.mxu0 %v1900
        %v1957 = vpop.f32.mrf.mxu0
        %v1958 = vadd.f32 %v1938, %v1957
        %1959 = vmatmul.f32.gmra.mxu0 %v1902
        %v1960 = vpop.f32.mrf.mxu0
        %v1961 = vadd.f32 %v1938, %v1960
        %1962 = vdwg.mxu0
        %1963 = vmatpush.msra.mxu0 %v1935
        %1964 = vmatpush.msra.mxu0 %v1934
        %1965 = vmatpush.msra.mxu0 %v1933
        %1966 = vmatpush.msra.mxu0 %v1932
        %1967 = vmatpush.msra.mxu0 %v1931
        %1968 = vmatpush.msra.mxu0 %v1930
        %1969 = vmatpush.msra.mxu0 %v1929
        %1970 = vmatpush.msra.mxu0 %v1928
        %1971 = vmatpush.msra.mxu0 %v1927
        %1972 = vmatpush.msra.mxu0 %v1926
        %1973 = vmatpush.msra.mxu0 %v1925
        %1974 = vmatpush.msra.mxu0 %v1924
        %1975 = vmatpush.msra.mxu0 %v1923
        %1976 = vmatpush.msra.mxu0 %v1922
        %1977 = vmatpush.msra.mxu0 %v1921
        %1978 = vmatpush.msra.mxu0 %v1920
        %1979 = vmatmul.f32.gmra.mxu0 %v1901
        %v1980 = vpop.f32.mrf.mxu0
        %v1981 = vadd.f32 %v1958, %v1980
        %1982 = vmatmul.f32.gmra.mxu0 %v1903
        %v1983 = vpop.f32.mrf.mxu0
        %v1984 = vadd.f32 %v1961, %v1983
        %1985 = vdwg.mxu0
        %v1986 = vadd.f32 %v1735, %v1981
        %v1987 = vadd.f32 %v1736, %v1984
        %v1988 = vld [vmem:[%s1004] sm:$0xff]
        %v1989 = vld [vmem:[%s1004 + $0x8] sm:$0xff]
        %v1990 = vld [vmem:[%s31] sm:$0xff]
        %v1991 = vld [vmem:[%s31 + $0x8] sm:$0xff]
        %v1992 = vld [vmem:[%s31 + $0x10] sm:$0xff]
        %v1993 = vld [vmem:[%s31 + $0x18] sm:$0xff]
        %v1994 = vld [vmem:[%s31 + $0x20] sm:$0xff]
        %v1995 = vld [vmem:[%s31 + $0x28] sm:$0xff]
        %v1996 = vld [vmem:[%s31 + $0x30] sm:$0xff]
        %v1997 = vld [vmem:[%s31 + $0x38] sm:$0xff]
        %v1998 = vld [vmem:[%s31 + $0x40] sm:$0xff]
        %v1999 = vld [vmem:[%s31 + $0x48] sm:$0xff]
        %v2000 = vld [vmem:[%s31 + $0x50] sm:$0xff]
        %v2001 = vld [vmem:[%s31 + $0x58] sm:$0xff]
        %v2002 = vld [vmem:[%s31 + $0x60] sm:$0xff]
        %v2003 = vld [vmem:[%s31 + $0x68] sm:$0xff]
        %v2004 = vld [vmem:[%s31 + $0x70] sm:$0xff]
        %v2005 = vld [vmem:[%s31 + $0x78] sm:$0xff]
        %v2006 = vld [vmem:[%s33] sm:$0x1]
        %v2008 = vperm.slane %v2006, 0
        %2010 = vmatpush.msra.mxu0 %v2005
        %2011 = vmatpush.msra.mxu0 %v2004
        %2012 = vmatpush.msra.mxu0 %v2003
        %2013 = vmatpush.msra.mxu0 %v2002
        %2014 = vmatpush.msra.mxu0 %v2001
        %2015 = vmatpush.msra.mxu0 %v2000
        %2016 = vmatpush.msra.mxu0 %v1999
        %2017 = vmatpush.msra.mxu0 %v1998
        %2018 = vmatpush.msra.mxu0 %v1997
        %2019 = vmatpush.msra.mxu0 %v1996
        %2020 = vmatpush.msra.mxu0 %v1995
        %2021 = vmatpush.msra.mxu0 %v1994
        %2022 = vmatpush.msra.mxu0 %v1993
        %2023 = vmatpush.msra.mxu0 %v1992
        %2024 = vmatpush.msra.mxu0 %v1991
        %2025 = vmatpush.msra.mxu0 %v1990
        %2026 = vmatmul.f32.gmra.mxu0 %v1986
        %v2027 = vpop.f32.mrf.mxu0
        %v2028 = vadd.f32 %v2008, %v2027
        %2029 = vmatmul.f32.gmra.mxu0 %v1987
        %v2030 = vpop.f32.mrf.mxu0
        %v2031 = vadd.f32 %v2008, %v2030
        %2032 = vdwg.mxu0
        %v2033 = vld [vmem:[%s35] sm:$0xff]
        %v2034 = vld [vmem:[%s35 + $0x8] sm:$0xff]
        %v2035 = vld [vmem:[%s35 + $0x10] sm:$0xff]
        %v2036 = vld [vmem:[%s35 + $0x18] sm:$0xff]
        %v2037 = vld [vmem:[%s35 + $0x20] sm:$0xff]
        %v2038 = vld [vmem:[%s35 + $0x28] sm:$0xff]
        %v2039 = vld [vmem:[%s35 + $0x30] sm:$0xff]
        %v2040 = vld [vmem:[%s35 + $0x38] sm:$0xff]
        %v2041 = vld [vmem:[%s35 + $0x40] sm:$0xff]
        %v2042 = vld [vmem:[%s35 + $0x48] sm:$0xff]
        %v2043 = vld [vmem:[%s35 + $0x50] sm:$0xff]
        %v2044 = vld [vmem:[%s35 + $0x58] sm:$0xff]
        %v2045 = vld [vmem:[%s35 + $0x60] sm:$0xff]
        %v2046 = vld [vmem:[%s35 + $0x68] sm:$0xff]
        %v2047 = vld [vmem:[%s35 + $0x70] sm:$0xff]
        %v2048 = vld [vmem:[%s35 + $0x78] sm:$0xff]
        %v2049 = vld [vmem:[%s37] sm:$0x1]
        %v2051 = vperm.slane %v2049, 0
        %2053 = vmatpush.msra.mxu0 %v2048
        %2054 = vmatpush.msra.mxu0 %v2047
        %2055 = vmatpush.msra.mxu0 %v2046
        %2056 = vmatpush.msra.mxu0 %v2045
        %2057 = vmatpush.msra.mxu0 %v2044
        %2058 = vmatpush.msra.mxu0 %v2043
        %2059 = vmatpush.msra.mxu0 %v2042
        %2060 = vmatpush.msra.mxu0 %v2041
        %2061 = vmatpush.msra.mxu0 %v2040
        %2062 = vmatpush.msra.mxu0 %v2039
        %2063 = vmatpush.msra.mxu0 %v2038
        %2064 = vmatpush.msra.mxu0 %v2037
        %2065 = vmatpush.msra.mxu0 %v2036
        %2066 = vmatpush.msra.mxu0 %v2035
        %2067 = vmatpush.msra.mxu0 %v2034
        %2068 = vmatpush.msra.mxu0 %v2033
        %2069 = vmatmul.f32.gmra.mxu0 %v1988
        %v2070 = vpop.f32.mrf.mxu0
        %v2071 = vadd.f32 %v2051, %v2070
        %2072 = vmatmul.f32.gmra.mxu0 %v1989
        %v2073 = vpop.f32.mrf.mxu0
        %v2074 = vadd.f32 %v2051, %v2073
        %2075 = vdwg.mxu0
        %v2076 = vld [vmem:[%s39] sm:$0x3]
        %2077 = vadd.xlane.f32.xlu0 %v2028
        %v2078 = vpop.xlane.xlu0 %2077
        %2079 = vadd.xlane.f32.xlu0 %v2031
        %v2080 = vpop.xlane.xlu0 %2079
        %v2081 = vmul.f32 %v2078, %v1105
        %v2082 = vmul.f32 %v2080, %v1105
        %v2083 = vsub.f32 %v2028, %v2081
        %v2084 = vsub.f32 %v2031, %v2082
        %v2085 = vmul.f32 %v2083, %v2083
        %v2086 = vmul.f32 %v2084, %v2084
        %2087 = vadd.xlane.f32.xlu0 %v2085
        %v2088 = vpop.xlane.xlu0 %2087
        %2089 = vadd.xlane.f32.xlu0 %v2086
        %v2090 = vpop.xlane.xlu0 %2089
        %v2091 = vmul.f32 %v2088, %v1105
        %v2092 = vmul.f32 %v2090, %v1105
        %v2093 = vadd.f32 %v2091, 1e-05
        %v2094 = vadd.f32 %v2092, 1e-05
        %v2095 = vrsqrt.pop %v2093
        %v2096 = vmul.f32 %v2095, %v2093
        %v2097 = vmul.f32 %v2096, %v2095
        %v2098 = vmul.f32 0.5, %v2097
        %v2099 = vsub.f32 1.5, %v2098
        %v2100 = vmul.f32 %v2095, %v2099
        %vm2101 = vweird.f32 %v2093
        %vm2102 = vweird.f32 %v2095
        %vm2103 = vmor %vm2101, %vm2102
        %v2104 = vsel %vm2103, %v2095, %v2100
        %v2105 = vrsqrt.pop %v2094
        %v2106 = vmul.f32 %v2105, %v2094
        %v2107 = vmul.f32 %v2106, %v2105
        %v2108 = vmul.f32 0.5, %v2107
        %v2109 = vsub.f32 1.5, %v2108
        %v2110 = vmul.f32 %v2105, %v2109
        %vm2111 = vweird.f32 %v2094
        %vm2112 = vweird.f32 %v2105
        %vm2113 = vmor %vm2111, %vm2112
        %v2114 = vsel %vm2113, %v2105, %v2110
        %v2115 = vmul.f32 %v2083, %v2104
        %v2116 = vmul.f32 %v2084, %v2114
        %v2117 = vperm.slane %v2076, 0
        %v2118 = vmul.f32 %v2115, %v2117
        %v2119 = vmul.f32 %v2116, %v2117
        %v2120 = vperm.slane %v2076, 1
        %v2121 = vadd.f32 %v2118, %v2120
        %v2122 = vadd.f32 %v2119, %v2120
        %v2123 = vld [vmem:[%s41] sm:$0x3]
        %2124 = vadd.xlane.f32.xlu0 %v2071
        %v2125 = vpop.xlane.xlu0 %2124
        %2126 = vadd.xlane.f32.xlu0 %v2074
        %v2127 = vpop.xlane.xlu0 %2126
        %v2128 = vmul.f32 %v2125, %v1105
        %v2129 = vmul.f32 %v2127, %v1105
        %v2130 = vsub.f32 %v2071, %v2128
        %v2131 = vsub.f32 %v2074, %v2129
        %v2132 = vmul.f32 %v2130, %v2130
        %v2133 = vmul.f32 %v2131, %v2131
        %2134 = vadd.xlane.f32.xlu0 %v2132
        %v2135 = vpop.xlane.xlu0 %2134
        %2136 = vadd.xlane.f32.xlu0 %v2133
        %v2137 = vpop.xlane.xlu0 %2136
        %v2138 = vmul.f32 %v2135, %v1105
        %v2139 = vmul.f32 %v2137, %v1105
        %v2140 = vadd.f32 %v2138, 1e-05
        %v2141 = vadd.f32 %v2139, 1e-05
        %v2142 = vrsqrt.pop %v2140
        %v2143 = vmul.f32 %v2142, %v2140
        %v2144 = vmul.f32 %v2143, %v2142
        %v2145 = vmul.f32 0.5, %v2144
        %v2146 = vsub.f32 1.5, %v2145
        %v2147 = vmul.f32 %v2142, %v2146
        %vm2148 = vweird.f32 %v2140
        %vm2149 = vweird.f32 %v2142
        %vm2150 = vmor %vm2148, %vm2149
        %v2151 = vsel %vm2150, %v2142, %v2147
        %v2152 = vrsqrt.pop %v2141
        %v2153 = vmul.f32 %v2152, %v2141
        %v2154 = vmul.f32 %v2153, %v2152
        %v2155 = vmul.f32 0.5, %v2154
        %v2156 = vsub.f32 1.5, %v2155
        %v2157 = vmul.f32 %v2152, %v2156
        %vm2158 = vweird.f32 %v2141
        %vm2159 = vweird.f32 %v2152
        %vm2160 = vmor %vm2158, %vm2159
        %v2161 = vsel %vm2160, %v2152, %v2157
        %v2162 = vmul.f32 %v2130, %v2151
        %v2163 = vmul.f32 %v2131, %v2161
        %v2164 = vperm.slane %v2123, 0
        %v2165 = vmul.f32 %v2162, %v2164
        %v2166 = vmul.f32 %v2163, %v2164
        %v2167 = vperm.slane %v2123, 1
        %v2168 = vadd.f32 %v2165, %v2167
        %v2169 = vadd.f32 %v2166, %v2167
        %v2170 = vld [vmem:[%s43] sm:$0xff]
        %v2171 = vld [vmem:[%s43 + $0x8] sm:$0xff]
        %v2172 = vld [vmem:[%s43 + $0x10] sm:$0xff]
        %v2173 = vld [vmem:[%s43 + $0x18] sm:$0xff]
        %v2174 = vld [vmem:[%s43 + $0x20] sm:$0xff]
        %v2175 = vld [vmem:[%s43 + $0x28] sm:$0xff]
        %v2176 = vld [vmem:[%s43 + $0x30] sm:$0xff]
        %v2177 = vld [vmem:[%s43 + $0x38] sm:$0xff]
        %v2178 = vld [vmem:[%s43 + $0x40] sm:$0xff]
        %v2179 = vld [vmem:[%s43 + $0x48] sm:$0xff]
        %v2180 = vld [vmem:[%s43 + $0x50] sm:$0xff]
        %v2181 = vld [vmem:[%s43 + $0x58] sm:$0xff]
        %v2182 = vld [vmem:[%s43 + $0x60] sm:$0xff]
        %v2183 = vld [vmem:[%s43 + $0x68] sm:$0xff]
        %v2184 = vld [vmem:[%s43 + $0x70] sm:$0xff]
        %v2185 = vld [vmem:[%s43 + $0x78] sm:$0xff]
        %v2186 = vld [vmem:[%s45] sm:$0x1]
        %v2188 = vperm.slane %v2186, 0
        %2190 = vmatpush.msra.mxu0 %v2185
        %2191 = vmatpush.msra.mxu0 %v2184
        %2192 = vmatpush.msra.mxu0 %v2183
        %2193 = vmatpush.msra.mxu0 %v2182
        %2194 = vmatpush.msra.mxu0 %v2181
        %2195 = vmatpush.msra.mxu0 %v2180
        %2196 = vmatpush.msra.mxu0 %v2179
        %2197 = vmatpush.msra.mxu0 %v2178
        %2198 = vmatpush.msra.mxu0 %v2177
        %2199 = vmatpush.msra.mxu0 %v2176
        %2200 = vmatpush.msra.mxu0 %v2175
        %2201 = vmatpush.msra.mxu0 %v2174
        %2202 = vmatpush.msra.mxu0 %v2173
        %2203 = vmatpush.msra.mxu0 %v2172
        %2204 = vmatpush.msra.mxu0 %v2171
        %2205 = vmatpush.msra.mxu0 %v2170
        %2206 = vmatmul.f32.gmra.mxu0 %v2121
        %v2207 = vpop.f32.mrf.mxu0
        %v2208 = vadd.f32 %v2188, %v2207
        %2209 = vmatmul.f32.gmra.mxu0 %v2122
        %v2210 = vpop.f32.mrf.mxu0
        %v2211 = vadd.f32 %v2188, %v2210
        %2212 = vdwg.mxu0
        %v2213 = vld [vmem:[%s47] sm:$0xff]
        %v2214 = vld [vmem:[%s47 + $0x8] sm:$0xff]
        %v2215 = vld [vmem:[%s47 + $0x10] sm:$0xff]
        %v2216 = vld [vmem:[%s47 + $0x18] sm:$0xff]
        %v2217 = vld [vmem:[%s47 + $0x20] sm:$0xff]
        %v2218 = vld [vmem:[%s47 + $0x28] sm:$0xff]
        %v2219 = vld [vmem:[%s47 + $0x30] sm:$0xff]
        %v2220 = vld [vmem:[%s47 + $0x38] sm:$0xff]
        %v2221 = vld [vmem:[%s47 + $0x40] sm:$0xff]
        %v2222 = vld [vmem:[%s47 + $0x48] sm:$0xff]
        %v2223 = vld [vmem:[%s47 + $0x50] sm:$0xff]
        %v2224 = vld [vmem:[%s47 + $0x58] sm:$0xff]
        %v2225 = vld [vmem:[%s47 + $0x60] sm:$0xff]
        %v2226 = vld [vmem:[%s47 + $0x68] sm:$0xff]
        %v2227 = vld [vmem:[%s47 + $0x70] sm:$0xff]
        %v2228 = vld [vmem:[%s47 + $0x78] sm:$0xff]
        %v2229 = vld [vmem:[%s47 + $0x80] sm:$0xff]
        %v2230 = vld [vmem:[%s47 + $0x88] sm:$0xff]
        %v2231 = vld [vmem:[%s47 + $0x90] sm:$0xff]
        %v2232 = vld [vmem:[%s47 + $0x98] sm:$0xff]
        %v2233 = vld [vmem:[%s47 + $0xa0] sm:$0xff]
        %v2234 = vld [vmem:[%s47 + $0xa8] sm:$0xff]
        %v2235 = vld [vmem:[%s47 + $0xb0] sm:$0xff]
        %v2236 = vld [vmem:[%s47 + $0xb8] sm:$0xff]
        %v2237 = vld [vmem:[%s47 + $0xc0] sm:$0xff]
        %v2238 = vld [vmem:[%s47 + $0xc8] sm:$0xff]
        %v2239 = vld [vmem:[%s47 + $0xd0] sm:$0xff]
        %v2240 = vld [vmem:[%s47 + $0xd8] sm:$0xff]
        %v2241 = vld [vmem:[%s47 + $0xe0] sm:$0xff]
        %v2242 = vld [vmem:[%s47 + $0xe8] sm:$0xff]
        %v2243 = vld [vmem:[%s47 + $0xf0] sm:$0xff]
        %v2244 = vld [vmem:[%s47 + $0xf8] sm:$0xff]
        %v2245 = vld [vmem:[%s49] sm:$0x3]
        %v2247 = vperm.slane %v2245, 0
        %v2248 = vperm.slane %v2245, 1
        %2251 = vmatpush.msra.mxu0 %v2243
        %2252 = vmatpush.msra.mxu0 %v2241
        %2253 = vmatpush.msra.mxu0 %v2239
        %2254 = vmatpush.msra.mxu0 %v2237
        %2255 = vmatpush.msra.mxu0 %v2235
        %2256 = vmatpush.msra.mxu0 %v2233
        %2257 = vmatpush.msra.mxu0 %v2231
        %2258 = vmatpush.msra.mxu0 %v2229
        %2259 = vmatpush.msra.mxu0 %v2227
        %2260 = vmatpush.msra.mxu0 %v2225
        %2261 = vmatpush.msra.mxu0 %v2223
        %2262 = vmatpush.msra.mxu0 %v2221
        %2263 = vmatpush.msra.mxu0 %v2219
        %2264 = vmatpush.msra.mxu0 %v2217
        %2265 = vmatpush.msra.mxu0 %v2215
        %2266 = vmatpush.msra.mxu0 %v2213
        %2267 = vmatmul.f32.gmra.mxu0 %v2168
        %v2268 = vpop.f32.mrf.mxu0
        %v2269 = vadd.f32 %v2247, %v2268
        %2270 = vmatmul.f32.gmra.mxu0 %v2169
        %v2271 = vpop.f32.mrf.mxu0
        %v2272 = vadd.f32 %v2247, %v2271
        %2273 = vdwg.mxu0
        %2274 = vmatpush.msra.mxu0 %v2244
        %2275 = vmatpush.msra.mxu0 %v2242
        %2276 = vmatpush.msra.mxu0 %v2240
        %2277 = vmatpush.msra.mxu0 %v2238
        %2278 = vmatpush.msra.mxu0 %v2236
        %2279 = vmatpush.msra.mxu0 %v2234
        %2280 = vmatpush.msra.mxu0 %v2232
        %2281 = vmatpush.msra.mxu0 %v2230
        %2282 = vmatpush.msra.mxu0 %v2228
        %2283 = vmatpush.msra.mxu0 %v2226
        %2284 = vmatpush.msra.mxu0 %v2224
        %2285 = vmatpush.msra.mxu0 %v2222
        %2286 = vmatpush.msra.mxu0 %v2220
        %2287 = vmatpush.msra.mxu0 %v2218
        %2288 = vmatpush.msra.mxu0 %v2216
        %2289 = vmatpush.msra.mxu0 %v2214
        %2290 = vmatmul.f32.gmra.mxu0 %v2168
        %v2291 = vpop.f32.mrf.mxu0
        %v2292 = vadd.f32 %v2248, %v2291
        %2293 = vmatmul.f32.gmra.mxu0 %v2169
        %v2294 = vpop.f32.mrf.mxu0
        %v2295 = vadd.f32 %v2248, %v2294
        %2296 = vdwg.mxu0
        %v2298 = vsel %vm1273, %v2208, 0
        %v2301 = vsel %vm1273, %v2211, 0
        %v2304 = vsel %vm1273, %v2269, 0
        %v2307 = vsel %vm1273, %v2272, 0
        %2309 = vmatpush.xpose.msra.mxu0 0.0
        %2310 = vmatpush.xpose.msra.mxu0 0.0
        %2311 = vmatpush.xpose.msra.mxu0 0.0
        %2312 = vmatpush.xpose.msra.mxu0 0.0
        %2313 = vmatpush.xpose.msra.mxu0 0.0
        %2314 = vmatpush.xpose.msra.mxu0 0.0
        %2315 = vmatpush.xpose.msra.mxu0 0.0
        %2316 = vmatpush.xpose.msra.mxu0 0.0
        %2317 = vmatpush.xpose.msra.mxu0 0.0
        %2318 = vmatpush.xpose.msra.mxu0 0.0
        %2319 = vmatpush.xpose.msra.mxu0 0.0
        %2320 = vmatpush.xpose.msra.mxu0 0.0
        %2321 = vmatpush.xpose.msra.mxu0 0.0
        %2322 = vmatpush.xpose.msra.mxu0 0.0
        %2323 = vmatpush.xpose.msra.mxu0 %v2307
        %2324 = vmatpush.xpose.msra.mxu0 %v2304
        %2325 = vmatmul.f32.gmra.mxu0 %v2298
        %v2326 = vpop.f32.mrf.mxu0
        %v2327 = vadd.f32 0.0, %v2326
        %2328 = vmatmul.f32.gmra.mxu0 %v2301
        %v2329 = vpop.f32.mrf.mxu0
        %v2330 = vadd.f32 0.0, %v2329
        %2331 = vdwg.mxu0
        %v2332 = vmul.f32 %v2327, 0.17677669
        %v2333 = vmul.f32 %v2330, 0.17677669
        %v2334 = vsel %vm1311, %v2332, -inf
        %2335 = vmax.xlane.f32.xlu0 %v2334
        %v2336 = vpop.xlane.xlu0 %2335
        %v2337 = vsel %vm1311, %v2333, -inf
        %2338 = vmax.xlane.f32.xlu0 %v2337
        %v2339 = vpop.xlane.xlu0 %2338
        %v2340 = vsub.f32 %v2332, %v2336
        %v2341 = vsub.f32 %v2333, %v2339
        %v2342 = vmul.f32 %v2340, 1.442695
        %v2343 = vpow.pop %v2342
        %v2344 = vmul.f32 %v2341, 1.442695
        %v2345 = vpow.pop %v2344
        %v2346 = vsel %vm1311, %v2343, 0.0
        %2347 = vadd.xlane.f32.xlu0 %v2346
        %v2348 = vpop.xlane.xlu0 %2347
        %v2349 = vsel %vm1311, %v2345, 0.0
        %2350 = vadd.xlane.f32.xlu0 %v2349
        %v2351 = vpop.xlane.xlu0 %2350
        %v2352 = vrcp.pop %v2348
        %v2353 = vrcp.pop %v2351
        %v2354 = vmul.f32 %v2343, %v2352
        %v2355 = vmul.f32 %v2345, %v2353
        %v2357 = vsel %vm1311, %v2354, 0
        %v2360 = vsel %vm1311, %v2355, 0
        %2362 = vmatpush.msra.mxu0 0.0
        %2363 = vmatpush.msra.mxu0 0.0
        %2364 = vmatpush.msra.mxu0 0.0
        %2365 = vmatpush.msra.mxu0 0.0
        %2366 = vmatpush.msra.mxu0 0.0
        %2367 = vmatpush.msra.mxu0 0.0
        %2368 = vmatpush.msra.mxu0 0.0
        %2369 = vmatpush.msra.mxu0 0.0
        %2370 = vmatpush.msra.mxu0 0.0
        %2371 = vmatpush.msra.mxu0 0.0
        %2372 = vmatpush.msra.mxu0 0.0
        %2373 = vmatpush.msra.mxu0 0.0
        %2374 = vmatpush.msra.mxu0 0.0
        %2375 = vmatpush.msra.mxu0 0.0
        %2376 = vmatpush.msra.mxu0 %v2295
        %2377 = vmatpush.msra.mxu0 %v2292
        %2378 = vmatmul.f32.gmra.mxu0 %v2357
        %v2379 = vpop.f32.mrf.mxu0
        %v2380 = vadd.f32 0.0, %v2379
        %2381 = vmatmul.f32.gmra.mxu0 %v2360
        %v2382 = vpop.f32.mrf.mxu0
        %v2383 = vadd.f32 0.0, %v2382
        %2384 = vdwg.mxu0
        %2385 = vrot.lane.b32.xlu0 %v2208, 96
        %v2386 = vpop.permute.xlu0 %2385
        %2387 = vrot.lane.b32.xlu0 %v2211, 96
        %v2388 = vpop.permute.xlu0 %2387
        %2389 = vrot.lane.b32.xlu0 %v2269, 96
        %v2390 = vpop.permute.xlu0 %2389
        %2391 = vrot.lane.b32.xlu0 %v2272, 96
        %v2392 = vpop.permute.xlu0 %2391
        %v2393 = vsel %vm1273, %v2386, 0
        %v2395 = vsel %vm1273, %v2388, 0
        %v2397 = vsel %vm1273, %v2390, 0
        %v2399 = vsel %vm1273, %v2392, 0
        %2401 = vmatpush.xpose.msra.mxu0 0.0
        %2402 = vmatpush.xpose.msra.mxu0 0.0
        %2403 = vmatpush.xpose.msra.mxu0 0.0
        %2404 = vmatpush.xpose.msra.mxu0 0.0
        %2405 = vmatpush.xpose.msra.mxu0 0.0
        %2406 = vmatpush.xpose.msra.mxu0 0.0
        %2407 = vmatpush.xpose.msra.mxu0 0.0
        %2408 = vmatpush.xpose.msra.mxu0 0.0
        %2409 = vmatpush.xpose.msra.mxu0 0.0
        %2410 = vmatpush.xpose.msra.mxu0 0.0
        %2411 = vmatpush.xpose.msra.mxu0 0.0
        %2412 = vmatpush.xpose.msra.mxu0 0.0
        %2413 = vmatpush.xpose.msra.mxu0 0.0
        %2414 = vmatpush.xpose.msra.mxu0 0.0
        %2415 = vmatpush.xpose.msra.mxu0 %v2399
        %2416 = vmatpush.xpose.msra.mxu0 %v2397
        %2417 = vmatmul.f32.gmra.mxu0 %v2393
        %v2418 = vpop.f32.mrf.mxu0
        %v2419 = vadd.f32 0.0, %v2418
        %2420 = vmatmul.f32.gmra.mxu0 %v2395
        %v2421 = vpop.f32.mrf.mxu0
        %v2422 = vadd.f32 0.0, %v2421
        %2423 = vdwg.mxu0
        %v2424 = vmul.f32 %v2419, 0.17677669
        %v2425 = vmul.f32 %v2422, 0.17677669
        %v2426 = vsel %vm1311, %v2424, -inf
        %2427 = vmax.xlane.f32.xlu0 %v2426
        %v2428 = vpop.xlane.xlu0 %2427
        %v2429 = vsel %vm1311, %v2425, -inf
        %2430 = vmax.xlane.f32.xlu0 %v2429
        %v2431 = vpop.xlane.xlu0 %2430
        %v2432 = vsub.f32 %v2424, %v2428
        %v2433 = vsub.f32 %v2425, %v2431
        %v2434 = vmul.f32 %v2432, 1.442695
        %v2435 = vpow.pop %v2434
        %v2436 = vmul.f32 %v2433, 1.442695
        %v2437 = vpow.pop %v2436
        %v2438 = vsel %vm1311, %v2435, 0.0
        %2439 = vadd.xlane.f32.xlu0 %v2438
        %v2440 = vpop.xlane.xlu0 %2439
        %v2441 = vsel %vm1311, %v2437, 0.0
        %2442 = vadd.xlane.f32.xlu0 %v2441
        %v2443 = vpop.xlane.xlu0 %2442
        %v2444 = vrcp.pop %v2440
        %v2445 = vrcp.pop %v2443
        %v2446 = vmul.f32 %v2435, %v2444
        %v2447 = vmul.f32 %v2437, %v2445
        %2450 = vrot.lane.b32.xlu0 %v2292, 96
        %v2451 = vpop.permute.xlu0 %2450
        %2452 = vrot.lane.b32.xlu0 %v2295, 96
        %v2453 = vpop.permute.xlu0 %2452
        %v2457 = vsel %vm1311, %v2446, 0
        %v2460 = vsel %vm1311, %v2447, 0
        %2462 = vmatpush.msra.mxu0 0.0
        %2463 = vmatpush.msra.mxu0 0.0
        %2464 = vmatpush.msra.mxu0 0.0
        %2465 = vmatpush.msra.mxu0 0.0
        %2466 = vmatpush.msra.mxu0 0.0
        %2467 = vmatpush.msra.mxu0 0.0
        %2468 = vmatpush.msra.mxu0 0.0
        %2469 = vmatpush.msra.mxu0 0.0
        %2470 = vmatpush.msra.mxu0 0.0
        %2471 = vmatpush.msra.mxu0 0.0
        %2472 = vmatpush.msra.mxu0 0.0
        %2473 = vmatpush.msra.mxu0 0.0
        %2474 = vmatpush.msra.mxu0 0.0
        %2475 = vmatpush.msra.mxu0 0.0
        %2476 = vmatpush.msra.mxu0 %v2453
        %2477 = vmatpush.msra.mxu0 %v2451
        %2478 = vmatmul.f32.gmra.mxu0 %v2457
        %v2479 = vpop.f32.mrf.mxu0
        %v2480 = vadd.f32 0.0, %v2479
        %2481 = vmatmul.f32.gmra.mxu0 %v2460
        %v2482 = vpop.f32.mrf.mxu0
        %v2483 = vadd.f32 0.0, %v2482
        %2484 = vdwg.mxu0
        %2485 = vrot.lane.b32.xlu0 %v2208, 64
        %v2486 = vpop.permute.xlu0 %2485
        %2487 = vrot.lane.b32.xlu0 %v2211, 64
        %v2488 = vpop.permute.xlu0 %2487
        %2489 = vrot.lane.b32.xlu0 %v2269, 64
        %v2490 = vpop.permute.xlu0 %2489
        %2491 = vrot.lane.b32.xlu0 %v2272, 64
        %v2492 = vpop.permute.xlu0 %2491
        %v2493 = vsel %vm1273, %v2486, 0
        %v2495 = vsel %vm1273, %v2488, 0
        %v2497 = vsel %vm1273, %v2490, 0
        %v2499 = vsel %vm1273, %v2492, 0
        %2501 = vmatpush.xpose.msra.mxu0 0.0
        %2502 = vmatpush.xpose.msra.mxu0 0.0
        %2503 = vmatpush.xpose.msra.mxu0 0.0
        %2504 = vmatpush.xpose.msra.mxu0 0.0
        %2505 = vmatpush.xpose.msra.mxu0 0.0
        %2506 = vmatpush.xpose.msra.mxu0 0.0
        %2507 = vmatpush.xpose.msra.mxu0 0.0
        %2508 = vmatpush.xpose.msra.mxu0 0.0
        %2509 = vmatpush.xpose.msra.mxu0 0.0
        %2510 = vmatpush.xpose.msra.mxu0 0.0
        %2511 = vmatpush.xpose.msra.mxu0 0.0
        %2512 = vmatpush.xpose.msra.mxu0 0.0
        %2513 = vmatpush.xpose.msra.mxu0 0.0
        %2514 = vmatpush.xpose.msra.mxu0 0.0
        %2515 = vmatpush.xpose.msra.mxu0 %v2499
        %2516 = vmatpush.xpose.msra.mxu0 %v2497
        %2517 = vmatmul.f32.gmra.mxu0 %v2493
        %v2518 = vpop.f32.mrf.mxu0
        %v2519 = vadd.f32 0.0, %v2518
        %2520 = vmatmul.f32.gmra.mxu0 %v2495
        %v2521 = vpop.f32.mrf.mxu0
        %v2522 = vadd.f32 0.0, %v2521
        %2523 = vdwg.mxu0
        %v2524 = vmul.f32 %v2519, 0.17677669
        %v2525 = vmul.f32 %v2522, 0.17677669
        %v2526 = vsel %vm1311, %v2524, -inf
        %2527 = vmax.xlane.f32.xlu0 %v2526
        %v2528 = vpop.xlane.xlu0 %2527
        %v2529 = vsel %vm1311, %v2525, -inf
        %2530 = vmax.xlane.f32.xlu0 %v2529
        %v2531 = vpop.xlane.xlu0 %2530
        %v2532 = vsub.f32 %v2524, %v2528
        %v2533 = vsub.f32 %v2525, %v2531
        %v2534 = vmul.f32 %v2532, 1.442695
        %v2535 = vpow.pop %v2534
        %v2536 = vmul.f32 %v2533, 1.442695
        %v2537 = vpow.pop %v2536
        %v2538 = vsel %vm1311, %v2535, 0.0
        %2539 = vadd.xlane.f32.xlu0 %v2538
        %v2540 = vpop.xlane.xlu0 %2539
        %v2541 = vsel %vm1311, %v2537, 0.0
        %2542 = vadd.xlane.f32.xlu0 %v2541
        %v2543 = vpop.xlane.xlu0 %2542
        %v2544 = vrcp.pop %v2540
        %v2545 = vrcp.pop %v2543
        %v2546 = vmul.f32 %v2535, %v2544
        %v2547 = vmul.f32 %v2537, %v2545
        %2548 = vrot.lane.b32.xlu0 %v2292, 64
        %v2549 = vpop.permute.xlu0 %2548
        %2550 = vrot.lane.b32.xlu0 %v2295, 64
        %v2551 = vpop.permute.xlu0 %2550
        %v2555 = vsel %vm1311, %v2546, 0
        %v2558 = vsel %vm1311, %v2547, 0
        %2560 = vmatpush.msra.mxu0 0.0
        %2561 = vmatpush.msra.mxu0 0.0
        %2562 = vmatpush.msra.mxu0 0.0
        %2563 = vmatpush.msra.mxu0 0.0
        %2564 = vmatpush.msra.mxu0 0.0
        %2565 = vmatpush.msra.mxu0 0.0
        %2566 = vmatpush.msra.mxu0 0.0
        %2567 = vmatpush.msra.mxu0 0.0
        %2568 = vmatpush.msra.mxu0 0.0
        %2569 = vmatpush.msra.mxu0 0.0
        %2570 = vmatpush.msra.mxu0 0.0
        %2571 = vmatpush.msra.mxu0 0.0
        %2572 = vmatpush.msra.mxu0 0.0
        %2573 = vmatpush.msra.mxu0 0.0
        %2574 = vmatpush.msra.mxu0 %v2551
        %2575 = vmatpush.msra.mxu0 %v2549
        %2576 = vmatmul.f32.gmra.mxu0 %v2555
        %v2577 = vpop.f32.mrf.mxu0
        %v2578 = vadd.f32 0.0, %v2577
        %2579 = vmatmul.f32.gmra.mxu0 %v2558
        %v2580 = vpop.f32.mrf.mxu0
        %v2581 = vadd.f32 0.0, %v2580
        %2582 = vdwg.mxu0
        %2583 = vrot.lane.b32.xlu0 %v2208, 32
        %v2584 = vpop.permute.xlu0 %2583
        %2585 = vrot.lane.b32.xlu0 %v2211, 32
        %v2586 = vpop.permute.xlu0 %2585
        %2587 = vrot.lane.b32.xlu0 %v2269, 32
        %v2588 = vpop.permute.xlu0 %2587
        %2589 = vrot.lane.b32.xlu0 %v2272, 32
        %v2590 = vpop.permute.xlu0 %2589
        %v2591 = vsel %vm1273, %v2584, 0
        %v2593 = vsel %vm1273, %v2586, 0
        %v2595 = vsel %vm1273, %v2588, 0
        %v2597 = vsel %vm1273, %v2590, 0
        %2599 = vmatpush.xpose.msra.mxu0 0.0
        %2600 = vmatpush.xpose.msra.mxu0 0.0
        %2601 = vmatpush.xpose.msra.mxu0 0.0
        %2602 = vmatpush.xpose.msra.mxu0 0.0
        %2603 = vmatpush.xpose.msra.mxu0 0.0
        %2604 = vmatpush.xpose.msra.mxu0 0.0
        %2605 = vmatpush.xpose.msra.mxu0 0.0
        %2606 = vmatpush.xpose.msra.mxu0 0.0
        %2607 = vmatpush.xpose.msra.mxu0 0.0
        %2608 = vmatpush.xpose.msra.mxu0 0.0
        %2609 = vmatpush.xpose.msra.mxu0 0.0
        %2610 = vmatpush.xpose.msra.mxu0 0.0
        %2611 = vmatpush.xpose.msra.mxu0 0.0
        %2612 = vmatpush.xpose.msra.mxu0 0.0
        %2613 = vmatpush.xpose.msra.mxu0 %v2597
        %2614 = vmatpush.xpose.msra.mxu0 %v2595
        %2615 = vmatmul.f32.gmra.mxu0 %v2591
        %v2616 = vpop.f32.mrf.mxu0
        %v2617 = vadd.f32 0.0, %v2616
        %2618 = vmatmul.f32.gmra.mxu0 %v2593
        %v2619 = vpop.f32.mrf.mxu0
        %v2620 = vadd.f32 0.0, %v2619
        %2621 = vdwg.mxu0
        %v2622 = vmul.f32 %v2617, 0.17677669
        %v2623 = vmul.f32 %v2620, 0.17677669
        %v2624 = vsel %vm1311, %v2622, -inf
        %2625 = vmax.xlane.f32.xlu0 %v2624
        %v2626 = vpop.xlane.xlu0 %2625
        %v2627 = vsel %vm1311, %v2623, -inf
        %2628 = vmax.xlane.f32.xlu0 %v2627
        %v2629 = vpop.xlane.xlu0 %2628
        %v2630 = vsub.f32 %v2622, %v2626
        %v2631 = vsub.f32 %v2623, %v2629
        %v2632 = vmul.f32 %v2630, 1.442695
        %v2633 = vpow.pop %v2632
        %v2634 = vmul.f32 %v2631, 1.442695
        %v2635 = vpow.pop %v2634
        %v2636 = vsel %vm1311, %v2633, 0.0
        %2637 = vadd.xlane.f32.xlu0 %v2636
        %v2638 = vpop.xlane.xlu0 %2637
        %v2639 = vsel %vm1311, %v2635, 0.0
        %2640 = vadd.xlane.f32.xlu0 %v2639
        %v2641 = vpop.xlane.xlu0 %2640
        %v2642 = vrcp.pop %v2638
        %v2643 = vrcp.pop %v2641
        %v2644 = vmul.f32 %v2633, %v2642
        %v2645 = vmul.f32 %v2635, %v2643
        %2646 = vrot.lane.b32.xlu0 %v2292, 32
        %v2647 = vpop.permute.xlu0 %2646
        %2648 = vrot.lane.b32.xlu0 %v2295, 32
        %v2649 = vpop.permute.xlu0 %2648
        %v2653 = vsel %vm1311, %v2644, 0
        %v2656 = vsel %vm1311, %v2645, 0
        %2658 = vmatpush.msra.mxu0 0.0
        %2659 = vmatpush.msra.mxu0 0.0
        %2660 = vmatpush.msra.mxu0 0.0
        %2661 = vmatpush.msra.mxu0 0.0
        %2662 = vmatpush.msra.mxu0 0.0
        %2663 = vmatpush.msra.mxu0 0.0
        %2664 = vmatpush.msra.mxu0 0.0
        %2665 = vmatpush.msra.mxu0 0.0
        %2666 = vmatpush.msra.mxu0 0.0
        %2667 = vmatpush.msra.mxu0 0.0
        %2668 = vmatpush.msra.mxu0 0.0
        %2669 = vmatpush.msra.mxu0 0.0
        %2670 = vmatpush.msra.mxu0 0.0
        %2671 = vmatpush.msra.mxu0 0.0
        %2672 = vmatpush.msra.mxu0 %v2649
        %2673 = vmatpush.msra.mxu0 %v2647
        %2674 = vmatmul.f32.gmra.mxu0 %v2653
        %v2675 = vpop.f32.mrf.mxu0
        %v2676 = vadd.f32 0.0, %v2675
        %2677 = vmatmul.f32.gmra.mxu0 %v2656
        %v2678 = vpop.f32.mrf.mxu0
        %v2679 = vadd.f32 0.0, %v2678
        %2680 = vdwg.mxu0
        %2683 = vrot.lane.b32.xlu0 %v2480, 32
        %v2684 = vpop.permute.xlu0 %2683
        %2685 = vrot.lane.b32.xlu0 %v2483, 32
        %v2686 = vpop.permute.xlu0 %2685
        %2691 = vrot.lane.b32.xlu0 %v2578, 64
        %v2692 = vpop.permute.xlu0 %2691
        %2693 = vrot.lane.b32.xlu0 %v2581, 64
        %v2694 = vpop.permute.xlu0 %2693
        %2699 = vrot.lane.b32.xlu0 %v2676, 96
        %v2700 = vpop.permute.xlu0 %2699
        %2701 = vrot.lane.b32.xlu0 %v2679, 96
        %v2702 = vpop.permute.xlu0 %2701
        %v2705 = vsel %vm1273, %v2380, %v2684
        %v2706 = vsel %vm1273, %v2383, %v2686
        %v2707 = vsel %vm1037, %v2705, %v2692
        %v2708 = vsel %vm1037, %v2706, %v2694
        %v2709 = vsel %vm1687, %v2707, %v2700
        %v2710 = vsel %vm1687, %v2708, %v2702
        %v2711 = vld [vmem:[%s51] sm:$0xff]
        %v2712 = vld [vmem:[%s51 + $0x8] sm:$0xff]
        %v2713 = vld [vmem:[%s51 + $0x10] sm:$0xff]
        %v2714 = vld [vmem:[%s51 + $0x18] sm:$0xff]
        %v2715 = vld [vmem:[%s51 + $0x20] sm:$0xff]
        %v2716 = vld [vmem:[%s51 + $0x28] sm:$0xff]
        %v2717 = vld [vmem:[%s51 + $0x30] sm:$0xff]
        %v2718 = vld [vmem:[%s51 + $0x38] sm:$0xff]
        %v2719 = vld [vmem:[%s51 + $0x40] sm:$0xff]
        %v2720 = vld [vmem:[%s51 + $0x48] sm:$0xff]
        %v2721 = vld [vmem:[%s51 + $0x50] sm:$0xff]
        %v2722 = vld [vmem:[%s51 + $0x58] sm:$0xff]
        %v2723 = vld [vmem:[%s51 + $0x60] sm:$0xff]
        %v2724 = vld [vmem:[%s51 + $0x68] sm:$0xff]
        %v2725 = vld [vmem:[%s51 + $0x70] sm:$0xff]
        %v2726 = vld [vmem:[%s51 + $0x78] sm:$0xff]
        %2727 = vmatpush.msra.mxu0 %v2726
        %2728 = vmatpush.msra.mxu0 %v2725
        %2729 = vmatpush.msra.mxu0 %v2724
        %2730 = vmatpush.msra.mxu0 %v2723
        %2731 = vmatpush.msra.mxu0 %v2722
        %2732 = vmatpush.msra.mxu0 %v2721
        %2733 = vmatpush.msra.mxu0 %v2720
        %2734 = vmatpush.msra.mxu0 %v2719
        %2735 = vmatpush.msra.mxu0 %v2718
        %2736 = vmatpush.msra.mxu0 %v2717
        %2737 = vmatpush.msra.mxu0 %v2716
        %2738 = vmatpush.msra.mxu0 %v2715
        %2739 = vmatpush.msra.mxu0 %v2714
        %2740 = vmatpush.msra.mxu0 %v2713
        %2741 = vmatpush.msra.mxu0 %v2712
        %2742 = vmatpush.msra.mxu0 %v2711
        %2743 = vmatmul.f32.gmra.mxu0 %v2709
        %v2744 = vpop.f32.mrf.mxu0
        %v2745 = vadd.f32 0.0, %v2744
        %2746 = vmatmul.f32.gmra.mxu0 %v2710
        %v2747 = vpop.f32.mrf.mxu0
        %v2748 = vadd.f32 0.0, %v2747
        %2749 = vdwg.mxu0
        %v2750 = vadd.f32 %v2028, %v2745
        %v2751 = vadd.f32 %v2031, %v2748
        %v2752 = vld [vmem:[%s53] sm:$0x1]
        %v2754 = vperm.slane %v2752, 0
        %v2756 = vadd.f32 %v2750, %v2754
        %v2757 = vadd.f32 %v2751, %v2754
        %v2758 = vld [vmem:[%s55] sm:$0x3]
        %2759 = vadd.xlane.f32.xlu0 %v2756
        %v2760 = vpop.xlane.xlu0 %2759
        %2761 = vadd.xlane.f32.xlu0 %v2757
        %v2762 = vpop.xlane.xlu0 %2761
        %v2763 = vmul.f32 %v2760, %v1105
        %v2764 = vmul.f32 %v2762, %v1105
        %v2765 = vsub.f32 %v2756, %v2763
        %v2766 = vsub.f32 %v2757, %v2764
        %v2767 = vmul.f32 %v2765, %v2765
        %v2768 = vmul.f32 %v2766, %v2766
        %2769 = vadd.xlane.f32.xlu0 %v2767
        %v2770 = vpop.xlane.xlu0 %2769
        %2771 = vadd.xlane.f32.xlu0 %v2768
        %v2772 = vpop.xlane.xlu0 %2771
        %v2773 = vmul.f32 %v2770, %v1105
        %v2774 = vmul.f32 %v2772, %v1105
        %v2775 = vadd.f32 %v2773, 1e-05
        %v2776 = vadd.f32 %v2774, 1e-05
        %v2777 = vrsqrt.pop %v2775
        %v2778 = vmul.f32 %v2777, %v2775
        %v2779 = vmul.f32 %v2778, %v2777
        %v2780 = vmul.f32 0.5, %v2779
        %v2781 = vsub.f32 1.5, %v2780
        %v2782 = vmul.f32 %v2777, %v2781
        %vm2783 = vweird.f32 %v2775
        %vm2784 = vweird.f32 %v2777
        %vm2785 = vmor %vm2783, %vm2784
        %v2786 = vsel %vm2785, %v2777, %v2782
        %v2787 = vrsqrt.pop %v2776
        %v2788 = vmul.f32 %v2787, %v2776
        %v2789 = vmul.f32 %v2788, %v2787
        %v2790 = vmul.f32 0.5, %v2789
        %v2791 = vsub.f32 1.5, %v2790
        %v2792 = vmul.f32 %v2787, %v2791
        %vm2793 = vweird.f32 %v2776
        %vm2794 = vweird.f32 %v2787
        %vm2795 = vmor %vm2793, %vm2794
        %v2796 = vsel %vm2795, %v2787, %v2792
        %v2797 = vmul.f32 %v2765, %v2786
        %v2798 = vmul.f32 %v2766, %v2796
        %v2799 = vperm.slane %v2758, 0
        %v2800 = vmul.f32 %v2797, %v2799
        %v2801 = vmul.f32 %v2798, %v2799
        %v2802 = vperm.slane %v2758, 1
        %v2803 = vadd.f32 %v2800, %v2802
        %v2804 = vadd.f32 %v2801, %v2802
        %v2805 = vld [vmem:[%s57] sm:$0xff]
        %v2806 = vld [vmem:[%s57 + $0x8] sm:$0xff]
        %v2807 = vld [vmem:[%s57 + $0x10] sm:$0xff]
        %v2808 = vld [vmem:[%s57 + $0x18] sm:$0xff]
        %v2809 = vld [vmem:[%s57 + $0x20] sm:$0xff]
        %v2810 = vld [vmem:[%s57 + $0x28] sm:$0xff]
        %v2811 = vld [vmem:[%s57 + $0x30] sm:$0xff]
        %v2812 = vld [vmem:[%s57 + $0x38] sm:$0xff]
        %v2813 = vld [vmem:[%s57 + $0x40] sm:$0xff]
        %v2814 = vld [vmem:[%s57 + $0x48] sm:$0xff]
        %v2815 = vld [vmem:[%s57 + $0x50] sm:$0xff]
        %v2816 = vld [vmem:[%s57 + $0x58] sm:$0xff]
        %v2817 = vld [vmem:[%s57 + $0x60] sm:$0xff]
        %v2818 = vld [vmem:[%s57 + $0x68] sm:$0xff]
        %v2819 = vld [vmem:[%s57 + $0x70] sm:$0xff]
        %v2820 = vld [vmem:[%s57 + $0x78] sm:$0xff]
        %v2821 = vld [vmem:[%s57 + $0x80] sm:$0xff]
        %v2822 = vld [vmem:[%s57 + $0x88] sm:$0xff]
        %v2823 = vld [vmem:[%s57 + $0x90] sm:$0xff]
        %v2824 = vld [vmem:[%s57 + $0x98] sm:$0xff]
        %v2825 = vld [vmem:[%s57 + $0xa0] sm:$0xff]
        %v2826 = vld [vmem:[%s57 + $0xa8] sm:$0xff]
        %v2827 = vld [vmem:[%s57 + $0xb0] sm:$0xff]
        %v2828 = vld [vmem:[%s57 + $0xb8] sm:$0xff]
        %v2829 = vld [vmem:[%s57 + $0xc0] sm:$0xff]
        %v2830 = vld [vmem:[%s57 + $0xc8] sm:$0xff]
        %v2831 = vld [vmem:[%s57 + $0xd0] sm:$0xff]
        %v2832 = vld [vmem:[%s57 + $0xd8] sm:$0xff]
        %v2833 = vld [vmem:[%s57 + $0xe0] sm:$0xff]
        %v2834 = vld [vmem:[%s57 + $0xe8] sm:$0xff]
        %v2835 = vld [vmem:[%s57 + $0xf0] sm:$0xff]
        %v2836 = vld [vmem:[%s57 + $0xf8] sm:$0xff]
        %v2837 = vld [vmem:[%s59] sm:$0x3]
        %v2839 = vperm.slane %v2837, 0
        %v2840 = vperm.slane %v2837, 1
        %2843 = vmatpush.msra.mxu0 %v2835
        %2844 = vmatpush.msra.mxu0 %v2833
        %2845 = vmatpush.msra.mxu0 %v2831
        %2846 = vmatpush.msra.mxu0 %v2829
        %2847 = vmatpush.msra.mxu0 %v2827
        %2848 = vmatpush.msra.mxu0 %v2825
        %2849 = vmatpush.msra.mxu0 %v2823
        %2850 = vmatpush.msra.mxu0 %v2821
        %2851 = vmatpush.msra.mxu0 %v2819
        %2852 = vmatpush.msra.mxu0 %v2817
        %2853 = vmatpush.msra.mxu0 %v2815
        %2854 = vmatpush.msra.mxu0 %v2813
        %2855 = vmatpush.msra.mxu0 %v2811
        %2856 = vmatpush.msra.mxu0 %v2809
        %2857 = vmatpush.msra.mxu0 %v2807
        %2858 = vmatpush.msra.mxu0 %v2805
        %2859 = vmatmul.f32.gmra.mxu0 %v2803
        %v2860 = vpop.f32.mrf.mxu0
        %v2861 = vadd.f32 %v2839, %v2860
        %2862 = vmatmul.f32.gmra.mxu0 %v2804
        %v2863 = vpop.f32.mrf.mxu0
        %v2864 = vadd.f32 %v2839, %v2863
        %2865 = vdwg.mxu0
        %2866 = vmatpush.msra.mxu0 %v2836
        %2867 = vmatpush.msra.mxu0 %v2834
        %2868 = vmatpush.msra.mxu0 %v2832
        %2869 = vmatpush.msra.mxu0 %v2830
        %2870 = vmatpush.msra.mxu0 %v2828
        %2871 = vmatpush.msra.mxu0 %v2826
        %2872 = vmatpush.msra.mxu0 %v2824
        %2873 = vmatpush.msra.mxu0 %v2822
        %2874 = vmatpush.msra.mxu0 %v2820
        %2875 = vmatpush.msra.mxu0 %v2818
        %2876 = vmatpush.msra.mxu0 %v2816
        %2877 = vmatpush.msra.mxu0 %v2814
        %2878 = vmatpush.msra.mxu0 %v2812
        %2879 = vmatpush.msra.mxu0 %v2810
        %2880 = vmatpush.msra.mxu0 %v2808
        %2881 = vmatpush.msra.mxu0 %v2806
        %2882 = vmatmul.f32.gmra.mxu0 %v2803
        %v2883 = vpop.f32.mrf.mxu0
        %v2884 = vadd.f32 %v2840, %v2883
        %2885 = vmatmul.f32.gmra.mxu0 %v2804
        %v2886 = vpop.f32.mrf.mxu0
        %v2887 = vadd.f32 %v2840, %v2886
        %2888 = vdwg.mxu0
        %v2889 = vmul.f32 %v2861, 0.5
        %v2890 = vmul.f32 %v2884, 0.5
        %v2891 = vmul.f32 %v2864, 0.5
        %v2892 = vmul.f32 %v2887, 0.5
        %v2893 = vmul.f32 %v2861, 0.044715
        %v2894 = vmul.f32 %v2884, 0.044715
        %v2895 = vmul.f32 %v2864, 0.044715
        %v2896 = vmul.f32 %v2887, 0.044715
        %v2897 = vmul.f32 %v2893, %v2861
        %v2898 = vmul.f32 %v2894, %v2884
        %v2899 = vmul.f32 %v2895, %v2864
        %v2900 = vmul.f32 %v2896, %v2887
        %v2901 = vmul.f32 %v2897, %v2861
        %v2902 = vmul.f32 %v2898, %v2884
        %v2903 = vmul.f32 %v2899, %v2864
        %v2904 = vmul.f32 %v2900, %v2887
        %v2905 = vadd.f32 %v2861, %v2901
        %v2906 = vadd.f32 %v2884, %v2902
        %v2907 = vadd.f32 %v2864, %v2903
        %v2908 = vadd.f32 %v2887, %v2904
        %v2909 = vmul.f32 %v2905, 0.7978846
        %v2910 = vmul.f32 %v2906, 0.7978846
        %v2911 = vmul.f32 %v2907, 0.7978846
        %v2912 = vmul.f32 %v2908, 0.7978846
        %v2913 = vtanh.pop %v2909
        %v2914 = vtanh.pop %v2910
        %v2915 = vtanh.pop %v2911
        %v2916 = vtanh.pop %v2912
        %v2917 = vadd.f32 %v2913, 1.0
        %v2918 = vadd.f32 %v2914, 1.0
        %v2919 = vadd.f32 %v2915, 1.0
        %v2920 = vadd.f32 %v2916, 1.0
        %v2921 = vmul.f32 %v2889, %v2917
        %v2922 = vmul.f32 %v2890, %v2918
        %v2923 = vmul.f32 %v2891, %v2919
        %v2924 = vmul.f32 %v2892, %v2920
        %v2925 = vld [vmem:[%s61] sm:$0xff]
        %v2926 = vld [vmem:[%s61 + $0x8] sm:$0xff]
        %v2927 = vld [vmem:[%s61 + $0x10] sm:$0xff]
        %v2928 = vld [vmem:[%s61 + $0x18] sm:$0xff]
        %v2929 = vld [vmem:[%s61 + $0x20] sm:$0xff]
        %v2930 = vld [vmem:[%s61 + $0x28] sm:$0xff]
        %v2931 = vld [vmem:[%s61 + $0x30] sm:$0xff]
        %v2932 = vld [vmem:[%s61 + $0x38] sm:$0xff]
        %v2933 = vld [vmem:[%s61 + $0x40] sm:$0xff]
        %v2934 = vld [vmem:[%s61 + $0x48] sm:$0xff]
        %v2935 = vld [vmem:[%s61 + $0x50] sm:$0xff]
        %v2936 = vld [vmem:[%s61 + $0x58] sm:$0xff]
        %v2937 = vld [vmem:[%s61 + $0x60] sm:$0xff]
        %v2938 = vld [vmem:[%s61 + $0x68] sm:$0xff]
        %v2939 = vld [vmem:[%s61 + $0x70] sm:$0xff]
        %v2940 = vld [vmem:[%s61 + $0x78] sm:$0xff]
        %v2941 = vld [vmem:[%s61 + $0x80] sm:$0xff]
        %v2942 = vld [vmem:[%s61 + $0x88] sm:$0xff]
        %v2943 = vld [vmem:[%s61 + $0x90] sm:$0xff]
        %v2944 = vld [vmem:[%s61 + $0x98] sm:$0xff]
        %v2945 = vld [vmem:[%s61 + $0xa0] sm:$0xff]
        %v2946 = vld [vmem:[%s61 + $0xa8] sm:$0xff]
        %v2947 = vld [vmem:[%s61 + $0xb0] sm:$0xff]
        %v2948 = vld [vmem:[%s61 + $0xb8] sm:$0xff]
        %v2949 = vld [vmem:[%s61 + $0xc0] sm:$0xff]
        %v2950 = vld [vmem:[%s61 + $0xc8] sm:$0xff]
        %v2951 = vld [vmem:[%s61 + $0xd0] sm:$0xff]
        %v2952 = vld [vmem:[%s61 + $0xd8] sm:$0xff]
        %v2953 = vld [vmem:[%s61 + $0xe0] sm:$0xff]
        %v2954 = vld [vmem:[%s61 + $0xe8] sm:$0xff]
        %v2955 = vld [vmem:[%s61 + $0xf0] sm:$0xff]
        %v2956 = vld [vmem:[%s61 + $0xf8] sm:$0xff]
        %v2957 = vld [vmem:[%s63] sm:$0x1]
        %v2959 = vperm.slane %v2957, 0
        %2961 = vmatpush.msra.mxu0 %v2940
        %2962 = vmatpush.msra.mxu0 %v2939
        %2963 = vmatpush.msra.mxu0 %v2938
        %2964 = vmatpush.msra.mxu0 %v2937
        %2965 = vmatpush.msra.mxu0 %v2936
        %2966 = vmatpush.msra.mxu0 %v2935
        %2967 = vmatpush.msra.mxu0 %v2934
        %2968 = vmatpush.msra.mxu0 %v2933
        %2969 = vmatpush.msra.mxu0 %v2932
        %2970 = vmatpush.msra.mxu0 %v2931
        %2971 = vmatpush.msra.mxu0 %v2930
        %2972 = vmatpush.msra.mxu0 %v2929
        %2973 = vmatpush.msra.mxu0 %v2928
        %2974 = vmatpush.msra.mxu0 %v2927
        %2975 = vmatpush.msra.mxu0 %v2926
        %2976 = vmatpush.msra.mxu0 %v2925
        %2977 = vmatmul.f32.gmra.mxu0 %v2921
        %v2978 = vpop.f32.mrf.mxu0
        %v2979 = vadd.f32 %v2959, %v2978
        %2980 = vmatmul.f32.gmra.mxu0 %v2923
        %v2981 = vpop.f32.mrf.mxu0
        %v2982 = vadd.f32 %v2959, %v2981
        %2983 = vdwg.mxu0
        %2984 = vmatpush.msra.mxu0 %v2956
        %2985 = vmatpush.msra.mxu0 %v2955
        %2986 = vmatpush.msra.mxu0 %v2954
        %2987 = vmatpush.msra.mxu0 %v2953
        %2988 = vmatpush.msra.mxu0 %v2952
        %2989 = vmatpush.msra.mxu0 %v2951
        %2990 = vmatpush.msra.mxu0 %v2950
        %2991 = vmatpush.msra.mxu0 %v2949
        %2992 = vmatpush.msra.mxu0 %v2948
        %2993 = vmatpush.msra.mxu0 %v2947
        %2994 = vmatpush.msra.mxu0 %v2946
        %2995 = vmatpush.msra.mxu0 %v2945
        %2996 = vmatpush.msra.mxu0 %v2944
        %2997 = vmatpush.msra.mxu0 %v2943
        %2998 = vmatpush.msra.mxu0 %v2942
        %2999 = vmatpush.msra.mxu0 %v2941
        %3000 = vmatmul.f32.gmra.mxu0 %v2922
        %v3001 = vpop.f32.mrf.mxu0
        %v3002 = vadd.f32 %v2979, %v3001
        %3003 = vmatmul.f32.gmra.mxu0 %v2924
        %v3004 = vpop.f32.mrf.mxu0
        %v3005 = vadd.f32 %v2982, %v3004
        %3006 = vdwg.mxu0
        %v3007 = vadd.f32 %v2756, %v3002
        %v3008 = vadd.f32 %v2757, %v3005
        %3009 = vst [vmem:[%s994] sm:$0xff] %v3007
        %3010 = vst [vmem:[%s994 + $0x8] sm:$0xff] %v3008
        %s3011 = sand.u32 %s769, 1
        %s3012 = scalar_lea.sflag [#allocation3], %s3011
        %s3013 = sand.u32 %s769, 1
        %s3014 = smul.addr %s3013, 16
        %s3015 = scalar_lea.vmem [#allocation2], %s3014
        // Predicated region
        $region149: #{model_v1_forward.1} parent=147 // pred_check
          %p3016 = pneg %p779
        $region150: #{model_v1_forward.1} parent=147 // pred_check_branch
          %3018 = sbr.rel (%p3016) target = $region152
        $region151: #{model_v1_forward.1} parent=147 // pred_region
          %3020 = vsyncadd %s3012, 0
          %s3021 = smul.addr %s79, 2
          %s3022 = smul.addr %s3021, 8
          %s3023 = scalar_lea.hbm %s65, %s3022
          %s3024 = sshll.u32 %s3015, 4
          %s3025 = int_to_ptr.vmem [resolvable:$true] %s3024
          %s3026 = sshll.u32 %s3023, 4
          %s3027 = int_to_ptr.hbm [resolvable:$true] %s3026
          %3032 = dma.vmem_to_hbm [thread:$0]  %s3025, 256, %s3027, %s3012, 128, 128, 8
        $region152: #{model_v1_forward.1} parent=147 // pred_fallthru
          _
      $region148: #{model_v1_forward.1} parent=5 // pred_fallthru
        _
      %p3033 = scmp.le.s32.totalorder 2, %s74
      // Predicated region
      $region153: #{model_v1_forward.1} parent=5 // pred_check
        %p3034 = pneg %p3033
      $region154: #{model_v1_forward.1} parent=5 // pred_check_branch
        %3036 = sbr.rel (%p3034) target = $region156
      $region155: #{model_v1_forward.1} parent=5 // pred_region
        %s3037 = ssub.s32 %s74, 2
        // Predicated region
        $region157: #{model_v1_forward.1} parent=155 // pred_check
          %p3038 = pneg %p785
        $region158: #{model_v1_forward.1} parent=155 // pred_check_branch
          %3040 = sbr.rel (%p3038) target = $region160
        $region159: #{model_v1_forward.1} parent=155 // pred_region
          %s3041 = sand.u32 %s770, 1
          %s3042 = scalar_lea.sflag [#allocation3], %s3041
          %s3043 = sand.u32 %s770, 1
          %s3044 = smul.addr %s3043, 16
          %s3045 = scalar_lea.vmem [#allocation2], %s3044
          %3047 = dma.done %s3042, 256
        $region160: #{model_v1_forward.1} parent=155 // pred_fallthru
          _
      $region156: #{model_v1_forward.1} parent=5 // pred_fallthru
        _
    $region6: #{model_v1_forward.1} parent=1 // loop_footer
      %s78 = sadd.s32 1, %s74
    $region7: #{model_v1_forward.1} parent=1 // loop_footer_branch
      %73 = sbr.rel target = $region3
    $region8: #{model_v1_forward.1} parent=1 // loop_exit
      _
    %3048 = vsyncpa [#allocation3], 1
    %s3049 = scalar_lea.sflag [#allocation3], 1
    %3050 = vsyncpa %s3049, 1

</llo_original>
